<compile_context>
chip_gen: v6e
topology: v6e:2x2x1
jax: 0.10.0
libtpu: 0.0.40
codegen_flags: <defaults>
</compile_context>

<pallas_src>
import math

import jax
import jax.numpy as jnp
from jax.experimental import pallas as pl
from jax.experimental.pallas import tpu as pltpu

LANES = 128
LINEAR_TK = 1408        # K-tile for the final Linear: 8 steps over Kp = 11264
LINEAR_CORE_SPLIT = 2   # leading 'parallel' axis: both v7x TCs stream half the weight


def _round_up(x, m):
    return ((x + m - 1) // m) * m


# ----------------------------- Pallas kernels -------------------------------

def _conv_mm_gelu_kernel(x_ref, w_ref, b_ref, o_ref):
    # x_ref: (tm, K)  w_ref: (K, Cout)  b_ref: (1, Cout)  o_ref: (tm, Cout)
    acc = jnp.dot(x_ref[...], w_ref[...], preferred_element_type=jnp.float32)
    acc = acc + b_ref[...]
    # exact GELU (erf), matching torch.nn.GELU(approximate='none')
    acc = 0.5 * acc * (1.0 + jax.lax.erf(acc * 0.7071067811865476))
    o_ref[...] = acc.astype(o_ref.dtype)


def conv_matmul_gelu(x_col, w_mat, b_row, *, m_splits=4):
    """GELU(x_col @ w_mat + b) at the conv's REAL output width.

    m_splits grid steps along M, marked "parallel": pipelined x_col DMA on all
    generations, and both TensorCores get >=2 steps each on v7x.
    """
    M, K = x_col.shape
    Kw, N = w_mat.shape
    assert K == Kw
    Mp = _round_up(M, 8 * m_splits)
    if Mp != M:
        x_col = jnp.pad(x_col, ((0, Mp - M), (0, 0)))
    tm = Mp // m_splits
    out = pl.pallas_call(
        _conv_mm_gelu_kernel,
        out_shape=jax.ShapeDtypeStruct((Mp, N), jnp.float32),
        grid=(m_splits,),
        in_specs=[
            pl.BlockSpec((tm, K), lambda i: (i, 0)),   # M-slice of X_col
            pl.BlockSpec((K, N), lambda i: (0, 0)),    # full weight, resident
            pl.BlockSpec((1, N), lambda i: (0, 0)),    # bias row
        ],
        out_specs=pl.BlockSpec((tm, N), lambda i: (i, 0)),
        compiler_params=pltpu.CompilerParams(
            dimension_semantics=("parallel",)),
    )(x_col, w_mat, b_row)
    return out[:M]


def _linear_kernel(x_ref, w_ref, o_ref, acc_ref):
    k = pl.program_id(1)

    @pl.when(k == 0)
    def _():
        acc_ref[...] = jnp.zeros_like(acc_ref)

    acc_ref[...] += jnp.dot(x_ref[...], w_ref[...],
                            preferred_element_type=jnp.float32)

    @pl.when(k == pl.num_programs(1) - 1)
    def _():
        o_ref[...] = acc_ref[...].astype(o_ref.dtype)


def linear_matmul(x, w, b_row, *, tk=LINEAR_TK, core_split=LINEAR_CORE_SPLIT):
    """x @ w + b.  K is streamed in tk-sized slices ("arbitrary" axis) and split
    across a leading "parallel" axis of `core_split` so both v7x TensorCores
    stream half the weight; per-core f32 partials are summed outside (tiny)."""
    M, K = x.shape
    Kw, N = w.shape
    assert K == Kw and K % (tk * core_split) == 0 and N % LANES == 0
    Mp = _round_up(M, 8)
    if Mp != M:
        x = jnp.pad(x, ((0, Mp - M), (0, 0)))
    k_steps = K // (tk * core_split)
    partials = pl.pallas_call(
        _linear_kernel,
        out_shape=jax.ShapeDtypeStruct((core_split * Mp, N), jnp.float32),
        grid=(core_split, k_steps),
        in_specs=[
            pl.BlockSpec((Mp, tk), lambda c, k: (0, c * k_steps + k)),
            pl.BlockSpec((tk, N), lambda c, k: (c * k_steps + k, 0)),
        ],
        out_specs=pl.BlockSpec((Mp, N), lambda c, k: (c, 0)),
        scratch_shapes=[pltpu.VMEM((Mp, N), jnp.float32)],
        compiler_params=pltpu.CompilerParams(
            dimension_semantics=("parallel", "arbitrary")),
    )(x, w)
    partials = partials.reshape(core_split, Mp, N)
    return (jnp.sum(partials, axis=0) + b_row)[:M]


# ------------------------------- conv glue ----------------------------------

def _im2col_3x3(x_nhwc, stride):
    """im2col glue: (B,H,W,C), pad=1, 3x3 window -> (B*OH*OW, 9*C)."""
    x_pad = jnp.pad(x_nhwc, ((0, 0), (1, 1), (1, 1), (0, 0)))
    B, Hp, Wp, C = x_pad.shape
    OH = (Hp - 3) // stride + 1
    OW = (Wp - 3) // stride + 1
    cols = []
    for kh in range(3):
        for kw in range(3):
            cols.append(
                x_pad[:, kh:kh + stride * (OH - 1) + 1:stride,
                         kw:kw + stride * (OW - 1) + 1:stride, :])
    patches = jnp.stack(cols, axis=3)            # (B, OH, OW, 9, C)
    return patches.reshape(B * OH * OW, 9 * C), (B, OH, OW)


# ------------------------------ model setup ---------------------------------

def init_params(key, out_dim=128):
    """PyTorch-layout parameters (same init ranges as nn.Conv2d / nn.Linear)."""
    ks = jax.random.split(key, 8)

    def conv_p(kw, kb, cout, cin):
        fan_in = cin * 9
        bound = 1.0 / math.sqrt(fan_in)
        w = jax.random.uniform(kw, (cout, cin, 3, 3), jnp.float32, -bound, bound)
        b = jax.random.uniform(kb, (cout,), jnp.float32, -bound, bound)
        return w, b

    w1, b1 = conv_p(ks[0], ks[1], 32, 2)
    w2, b2 = conv_p(ks[2], ks[3], 64, 32)
    w3, b3 = conv_p(ks[4], ks[5], 64, 64)
    fan_in = 64 * 13 * 13
    bound = 1.0 / math.sqrt(fan_in)
    wl = jax.random.uniform(ks[6], (out_dim, fan_in), jnp.float32, -bound, bound)
    bl = jax.random.uniform(ks[7], (out_dim,), jnp.float32, -bound, bound)
    return dict(w1=w1, b1=b1, w2=w2, b2=b2, w3=w3, b3=b3, wl=wl, bl=bl)


def prepare_params(p):
    """One-time conversion to matmul-ready weights at real channel widths."""

    def conv_w_to_mat(w_oihw):
        cout, cin, _, _ = w_oihw.shape
        w = jnp.transpose(w_oihw, (2, 3, 1, 0)).astype(jnp.float32)  # (3,3,cin,cout)
        return w.reshape(9 * cin, cout)      # row order (kh, kw, cin) = im2col order

    def bias_row(b):
        return b.reshape(1, -1).astype(jnp.float32)

    out_dim = p["wl"].shape[0]
    K = 64 * 13 * 13
    Kp = _round_up(K, LINEAR_TK * LINEAR_CORE_SPLIT)   # 10816 -> 11264
    Np = _round_up(out_dim, LANES)

    # Fold nn.Flatten's NCHW (c,h,w) order and the transpose into the stored
    # Linear weight so the forward does no transposes:  rows in (h, w, c) order.
    wl = p["wl"].reshape(out_dim, 64, 13, 13)              # (o, c, h, w)
    wl = jnp.transpose(wl, (2, 3, 1, 0)).reshape(K, out_dim)
    wlm = jnp.zeros((Kp, Np), jnp.float32).at[:K, :out_dim].set(wl)
    blm = jnp.zeros((1, Np), jnp.float32).at[0, :out_dim].set(p["bl"])

    return dict(
        w1m=conv_w_to_mat(p["w1"]), b1m=bias_row(p["b1"]),   # (18, 32)
        w2m=conv_w_to_mat(p["w2"]), b2m=bias_row(p["b2"]),   # (288, 64)
        w3m=conv_w_to_mat(p["w3"]), b3m=bias_row(p["b3"]),   # (576, 64)
        wlm=wlm, blm=blm)


def cnn_block_encoder(prep, x_nchw, out_dim=128):
    # x: (B, 2, 50, 50) NCHW like PyTorch -> NHWC for the kernels.
    x = jnp.transpose(x_nchw, (0, 2, 3, 1)).astype(jnp.float32)
    B = x.shape[0]

    c1 = prep["w1m"].shape[1]
    xc, (_, oh, ow) = _im2col_3x3(x, stride=1)                    # K = 18
    y = conv_matmul_gelu(xc, prep["w1m"], prep["b1m"], m_splits=4)
    y = y.reshape(B, oh, ow, c1)

    c2 = prep["w2m"].shape[1]
    xc, (_, oh, ow) = _im2col_3x3(y, stride=2)                    # K = 288
    y = conv_matmul_gelu(xc, prep["w2m"], prep["b2m"], m_splits=4)
    y = y.reshape(B, oh, ow, c2)

    c3 = prep["w3m"].shape[1]
    xc, (_, oh, ow) = _im2col_3x3(y, stride=2)                    # K = 576
    y = conv_matmul_gelu(xc, prep["w3m"], prep["b3m"], m_splits=2)
    y = y.reshape(B, oh, ow, c3)

    # NHWC flatten matches the pre-permuted Linear weight; no channel slicing
    # needed since conv3 emits exactly 64 real channels.
    feat = y.reshape(B, oh * ow * c3)
    kp = prep["wlm"].shape[0]
    feat = jnp.pad(feat, ((0, 0), (0, kp - feat.shape[1])))
    out = linear_matmul(feat, prep["wlm"], prep["blm"])
    return out[:, :out_dim]


if __name__ == "__main__":
    key = jax.random.PRNGKey(0)
    pkey, xkey = jax.random.split(key)
    params = init_params(pkey, out_dim=128)
    prep = prepare_params(params)
    # Linear(64*13*13, 128) pins spatial size: 50 -> 50 -> 25 -> 13.
    x = jax.random.normal(xkey, (2, 2, 50, 50), dtype=jnp.float32)
    fwd = jax.jit(cnn_block_encoder)
    out = jax.block_until_ready(fwd(prep, x))
    assert out.shape == (2, 128), out.shape
    assert bool(jnp.all(jnp.isfinite(out)))
    print("KERNEL_OK")
</pallas_src>

<mosaic_0001>
module attributes {stable_mosaic.version = 11 : i64} {
  func.func @_conv_mm_gelu_kernel(%arg0: i32, %arg1: memref<1256x18xf32, #tpu.memory_space<vmem>>, %arg2: memref<18x32xf32, #tpu.memory_space<vmem>>, %arg3: memref<1x32xf32, #tpu.memory_space<vmem>>, %arg4: memref<1256x32xf32, #tpu.memory_space<vmem>>) attributes {dimension_semantics = [#tpu.dimension_semantics<parallel>], iteration_bounds = array<i64: 4>, scalar_prefetch = 0 : i64, scratch_operands = 0 : i64, tpu.core_type = #tpu.core_type<tc>, window_params = [{transform_indices = @transform_0, window_bounds = array<i64: 1256, 18>}, {pipeline_mode = #tpu.pipeline_mode<synchronous>, transform_indices = @transform_1, window_bounds = array<i64: 18, 32>}, {pipeline_mode = #tpu.pipeline_mode<synchronous>, transform_indices = @transform_2, window_bounds = array<i64: 1, 32>}, {transform_indices = @transform_3, window_bounds = array<i64: 1256, 32>}]} {
    %c0 = arith.constant 0 : index
    %c0_0 = arith.constant 0 : index
    %0 = vector.load %arg1[%c0, %c0_0] : memref<1256x18xf32, #tpu.memory_space<vmem>>, vector<1256x18xf32>
    %c0_1 = arith.constant 0 : index
    %c0_2 = arith.constant 0 : index
    %1 = vector.load %arg2[%c0_1, %c0_2] : memref<18x32xf32, #tpu.memory_space<vmem>>, vector<18x32xf32>
    %cst = arith.constant dense<0.000000e+00> : vector<1256x32xf32>
    %2 = tpu.matmul %0, %1, %cst {dimension_numbers = #tpu.dot_dimension_numbers<[1], [0], [0], [1], [0, 0, 1, 1], [], []>} : vector<1256x18xf32>, vector<18x32xf32>, vector<1256x32xf32> -> vector<1256x32xf32>
    %c0_3 = arith.constant 0 : index
    %c0_4 = arith.constant 0 : index
    %3 = vector.load %arg3[%c0_3, %c0_4] : memref<1x32xf32, #tpu.memory_space<vmem>>, vector<1x32xf32>
    %4 = vector.broadcast %3 : vector<1x32xf32> to vector<1256x32xf32>
    %5 = arith.addf %2, %4 : vector<1256x32xf32>
    %cst_5 = arith.constant 5.000000e-01 : f32
    %6 = vector.broadcast %cst_5 : f32 to vector<1256x32xf32>
    %7 = arith.mulf %6, %5 : vector<1256x32xf32>
    %cst_6 = arith.constant 0.707106769 : f32
    %8 = vector.broadcast %cst_6 : f32 to vector<1256x32xf32>
    %9 = arith.mulf %5, %8 : vector<1256x32xf32>
    %10 = math.erf %9 : vector<1256x32xf32>
    %cst_7 = arith.constant 1.000000e+00 : f32
    %11 = vector.broadcast %cst_7 : f32 to vector<1256x32xf32>
    %12 = arith.addf %11, %10 : vector<1256x32xf32>
    %13 = arith.mulf %7, %12 : vector<1256x32xf32>
    %c0_8 = arith.constant 0 : index
    %c0_9 = arith.constant 0 : index
    %14 = vector.load %arg4[%c0_8, %c0_9] : memref<1256x32xf32, #tpu.memory_space<vmem>>, vector<1256x32xf32>
    tpu.vector_store %arg4[%c0_8, %c0_9], %13 {strides = array<i32>} : memref<1256x32xf32, #tpu.memory_space<vmem>>, vector<1256x32xf32>,
    return
  }
  func.func @transform_0(%arg0: i32) -> (i32, i32) {
    %c0_i32 = arith.constant 0 : i32
    %c0_i32_0 = arith.constant 0 : i32
    return %arg0, %c0_i32 : i32, i32
  }
  func.func @transform_1(%arg0: i32) -> (i32, i32) {
    %c0_i32 = arith.constant 0 : i32
    %c0_i32_0 = arith.constant 0 : i32
    %c0_i32_1 = arith.constant 0 : i32
    return %c0_i32, %c0_i32_0 : i32, i32
  }
  func.func @transform_2(%arg0: i32) -> (i32, i32) {
    %c0_i32 = arith.constant 0 : i32
    %c0_i32_0 = arith.constant 0 : i32
    %c0_i32_1 = arith.constant 0 : i32
    return %c0_i32, %c0_i32_0 : i32, i32
  }
  func.func @transform_3(%arg0: i32) -> (i32, i32) {
    %c0_i32 = arith.constant 0 : i32
    %c0_i32_0 = arith.constant 0 : i32
    return %arg0, %c0_i32 : i32, i32
  }
}

module attributes {stable_mosaic.version = 11 : i64} {
  func.func @_conv_mm_gelu_kernel(%arg0: i32, %arg1: memref<320x288xf32, #tpu.memory_space<vmem>>, %arg2: memref<288x64xf32, #tpu.memory_space<vmem>>, %arg3: memref<1x64xf32, #tpu.memory_space<vmem>>, %arg4: memref<320x64xf32, #tpu.memory_space<vmem>>) attributes {dimension_semantics = [#tpu.dimension_semantics<parallel>], iteration_bounds = array<i64: 4>, scalar_prefetch = 0 : i64, scratch_operands = 0 : i64, tpu.core_type = #tpu.core_type<tc>, window_params = [{transform_indices = @transform_0, window_bounds = array<i64: 320, 288>}, {pipeline_mode = #tpu.pipeline_mode<synchronous>, transform_indices = @transform_1, window_bounds = array<i64: 288, 64>}, {pipeline_mode = #tpu.pipeline_mode<synchronous>, transform_indices = @transform_2, window_bounds = array<i64: 1, 64>}, {transform_indices = @transform_3, window_bounds = array<i64: 320, 64>}]} {
    %c0 = arith.constant 0 : index
    %c0_0 = arith.constant 0 : index
    %0 = vector.load %arg1[%c0, %c0_0] : memref<320x288xf32, #tpu.memory_space<vmem>>, vector<320x288xf32>
    %c0_1 = arith.constant 0 : index
    %c0_2 = arith.constant 0 : index
    %1 = vector.load %arg2[%c0_1, %c0_2] : memref<288x64xf32, #tpu.memory_space<vmem>>, vector<288x64xf32>
    %cst = arith.constant dense<0.000000e+00> : vector<320x64xf32>
    %2 = tpu.matmul %0, %1, %cst {dimension_numbers = #tpu.dot_dimension_numbers<[1], [0], [0], [1], [0, 0, 1, 1], [], []>} : vector<320x288xf32>, vector<288x64xf32>, vector<320x64xf32> -> vector<320x64xf32>
    %c0_3 = arith.constant 0 : index
    %c0_4 = arith.constant 0 : index
    %3 = vector.load %arg3[%c0_3, %c0_4] : memref<1x64xf32, #tpu.memory_space<vmem>>, vector<1x64xf32>
    %4 = vector.broadcast %3 : vector<1x64xf32> to vector<320x64xf32>
    %5 = arith.addf %2, %4 : vector<320x64xf32>
    %cst_5 = arith.constant 5.000000e-01 : f32
    %6 = vector.broadcast %cst_5 : f32 to vector<320x64xf32>
    %7 = arith.mulf %6, %5 : vector<320x64xf32>
    %cst_6 = arith.constant 0.707106769 : f32
    %8 = vector.broadcast %cst_6 : f32 to vector<320x64xf32>
    %9 = arith.mulf %5, %8 : vector<320x64xf32>
    %10 = math.erf %9 : vector<320x64xf32>
    %cst_7 = arith.constant 1.000000e+00 : f32
    %11 = vector.broadcast %cst_7 : f32 to vector<320x64xf32>
    %12 = arith.addf %11, %10 : vector<320x64xf32>
    %13 = arith.mulf %7, %12 : vector<320x64xf32>
    %c0_8 = arith.constant 0 : index
    %c0_9 = arith.constant 0 : index
    %14 = vector.load %arg4[%c0_8, %c0_9] : memref<320x64xf32, #tpu.memory_space<vmem>>, vector<320x64xf32>
    tpu.vector_store %arg4[%c0_8, %c0_9], %13 {strides = array<i32>} : memref<320x64xf32, #tpu.memory_space<vmem>>, vector<320x64xf32>,
    return
  }
  func.func @transform_0(%arg0: i32) -> (i32, i32) {
    %c0_i32 = arith.constant 0 : i32
    %c0_i32_0 = arith.constant 0 : i32
    return %arg0, %c0_i32 : i32, i32
  }
  func.func @transform_1(%arg0: i32) -> (i32, i32) {
    %c0_i32 = arith.constant 0 : i32
    %c0_i32_0 = arith.constant 0 : i32
    %c0_i32_1 = arith.constant 0 : i32
    return %c0_i32, %c0_i32_0 : i32, i32
  }
  func.func @transform_2(%arg0: i32) -> (i32, i32) {
    %c0_i32 = arith.constant 0 : i32
    %c0_i32_0 = arith.constant 0 : i32
    %c0_i32_1 = arith.constant 0 : i32
    return %c0_i32, %c0_i32_0 : i32, i32
  }
  func.func @transform_3(%arg0: i32) -> (i32, i32) {
    %c0_i32 = arith.constant 0 : i32
    %c0_i32_0 = arith.constant 0 : i32
    return %arg0, %c0_i32 : i32, i32
  }
}

module attributes {stable_mosaic.version = 11 : i64} {
  func.func @_conv_mm_gelu_kernel(%arg0: i32, %arg1: memref<176x576xf32, #tpu.memory_space<vmem>>, %arg2: memref<576x64xf32, #tpu.memory_space<vmem>>, %arg3: memref<1x64xf32, #tpu.memory_space<vmem>>, %arg4: memref<176x64xf32, #tpu.memory_space<vmem>>) attributes {dimension_semantics = [#tpu.dimension_semantics<parallel>], iteration_bounds = array<i64: 2>, scalar_prefetch = 0 : i64, scratch_operands = 0 : i64, tpu.core_type = #tpu.core_type<tc>, window_params = [{transform_indices = @transform_0, window_bounds = array<i64: 176, 576>}, {pipeline_mode = #tpu.pipeline_mode<synchronous>, transform_indices = @transform_1, window_bounds = array<i64: 576, 64>}, {pipeline_mode = #tpu.pipeline_mode<synchronous>, transform_indices = @transform_2, window_bounds = array<i64: 1, 64>}, {transform_indices = @transform_3, window_bounds = array<i64: 176, 64>}]} {
    %c0 = arith.constant 0 : index
    %c0_0 = arith.constant 0 : index
    %0 = vector.load %arg1[%c0, %c0_0] : memref<176x576xf32, #tpu.memory_space<vmem>>, vector<176x576xf32>
    %c0_1 = arith.constant 0 : index
    %c0_2 = arith.constant 0 : index
    %1 = vector.load %arg2[%c0_1, %c0_2] : memref<576x64xf32, #tpu.memory_space<vmem>>, vector<576x64xf32>
    %cst = arith.constant dense<0.000000e+00> : vector<176x64xf32>
    %2 = tpu.matmul %0, %1, %cst {dimension_numbers = #tpu.dot_dimension_numbers<[1], [0], [0], [1], [0, 0, 1, 1], [], []>} : vector<176x576xf32>, vector<576x64xf32>, vector<176x64xf32> -> vector<176x64xf32>
    %c0_3 = arith.constant 0 : index
    %c0_4 = arith.constant 0 : index
    %3 = vector.load %arg3[%c0_3, %c0_4] : memref<1x64xf32, #tpu.memory_space<vmem>>, vector<1x64xf32>
    %4 = vector.broadcast %3 : vector<1x64xf32> to vector<176x64xf32>
    %5 = arith.addf %2, %4 : vector<176x64xf32>
    %cst_5 = arith.constant 5.000000e-01 : f32
    %6 = vector.broadcast %cst_5 : f32 to vector<176x64xf32>
    %7 = arith.mulf %6, %5 : vector<176x64xf32>
    %cst_6 = arith.constant 0.707106769 : f32
    %8 = vector.broadcast %cst_6 : f32 to vector<176x64xf32>
    %9 = arith.mulf %5, %8 : vector<176x64xf32>
    %10 = math.erf %9 : vector<176x64xf32>
    %cst_7 = arith.constant 1.000000e+00 : f32
    %11 = vector.broadcast %cst_7 : f32 to vector<176x64xf32>
    %12 = arith.addf %11, %10 : vector<176x64xf32>
    %13 = arith.mulf %7, %12 : vector<176x64xf32>
    %c0_8 = arith.constant 0 : index
    %c0_9 = arith.constant 0 : index
    %14 = vector.load %arg4[%c0_8, %c0_9] : memref<176x64xf32, #tpu.memory_space<vmem>>, vector<176x64xf32>
    tpu.vector_store %arg4[%c0_8, %c0_9], %13 {strides = array<i32>} : memref<176x64xf32, #tpu.memory_space<vmem>>, vector<176x64xf32>,
    return
  }
  func.func @transform_0(%arg0: i32) -> (i32, i32) {
    %c0_i32 = arith.constant 0 : i32
    %c0_i32_0 = arith.constant 0 : i32
    return %arg0, %c0_i32 : i32, i32
  }
  func.func @transform_1(%arg0: i32) -> (i32, i32) {
    %c0_i32 = arith.constant 0 : i32
    %c0_i32_0 = arith.constant 0 : i32
    %c0_i32_1 = arith.constant 0 : i32
    return %c0_i32, %c0_i32_0 : i32, i32
  }
  func.func @transform_2(%arg0: i32) -> (i32, i32) {
    %c0_i32 = arith.constant 0 : i32
    %c0_i32_0 = arith.constant 0 : i32
    %c0_i32_1 = arith.constant 0 : i32
    return %c0_i32, %c0_i32_0 : i32, i32
  }
  func.func @transform_3(%arg0: i32) -> (i32, i32) {
    %c0_i32 = arith.constant 0 : i32
    %c0_i32_0 = arith.constant 0 : i32
    return %arg0, %c0_i32 : i32, i32
  }
}

module attributes {stable_mosaic.version = 11 : i64} {
  func.func @_linear_kernel(%arg0: i32, %arg1: i32, %arg2: memref<8x1408xf32, #tpu.memory_space<vmem>>, %arg3: memref<1408x128xf32, #tpu.memory_space<vmem>>, %arg4: memref<8x128xf32, #tpu.memory_space<vmem>>, %arg5: memref<8x128xf32, #tpu.memory_space<vmem>>) attributes {dimension_semantics = [#tpu.dimension_semantics<parallel>, #tpu.dimension_semantics<arbitrary>], iteration_bounds = array<i64: 2, 4>, scalar_prefetch = 0 : i64, scratch_operands = 1 : i64, tpu.core_type = #tpu.core_type<tc>, window_params = [{transform_indices = @transform_0, window_bounds = array<i64: 8, 1408>}, {transform_indices = @transform_1, window_bounds = array<i64: 1408, 128>}, {transform_indices = @transform_2, window_bounds = array<i64: 8, 128>}]} {
    %c0_i32 = arith.constant 0 : i32
    %0 = arith.cmpi eq, %arg1, %c0_i32 : i32
    %1 = arith.extui %0 : i1 to i32
    %c0_i32_0 = arith.constant 0 : i32
    %2 = arith.cmpi ne, %1, %c0_i32_0 : i32
    scf.if %2 {
      %cst_9 = arith.constant 0.000000e+00 : f32
      %12 = vector.broadcast %cst_9 : f32 to vector<8x128xf32>
      %c0_10 = arith.constant 0 : index
      %c0_11 = arith.constant 0 : index
      %13 = vector.load %arg5[%c0_10, %c0_11] : memref<8x128xf32, #tpu.memory_space<vmem>>, vector<8x128xf32>
      tpu.vector_store %arg5[%c0_10, %c0_11], %12 {strides = array<i32>} : memref<8x128xf32, #tpu.memory_space<vmem>>, vector<8x128xf32>,
    } else {
    }
    %c0 = arith.constant 0 : index
    %c0_1 = arith.constant 0 : index
    %3 = vector.load %arg5[%c0, %c0_1] : memref<8x128xf32, #tpu.memory_space<vmem>>, vector<8x128xf32>
    %c0_2 = arith.constant 0 : index
    %c0_3 = arith.constant 0 : index
    %4 = vector.load %arg2[%c0_2, %c0_3] : memref<8x1408xf32, #tpu.memory_space<vmem>>, vector<8x1408xf32>
    %c0_4 = arith.constant 0 : index
    %c0_5 = arith.constant 0 : index
    %5 = vector.load %arg3[%c0_4, %c0_5] : memref<1408x128xf32, #tpu.memory_space<vmem>>, vector<1408x128xf32>
    %cst = arith.constant dense<0.000000e+00> : vector<8x128xf32>
    %6 = tpu.matmul %4, %5, %cst {dimension_numbers = #tpu.dot_dimension_numbers<[1], [0], [0], [1], [0, 0, 1, 1], [], []>} : vector<8x1408xf32>, vector<1408x128xf32>, vector<8x128xf32> -> vector<8x128xf32>
    %7 = arith.addf %3, %6 : vector<8x128xf32>
    %c0_6 = arith.constant 0 : index
    %c0_7 = arith.constant 0 : index
    %8 = vector.load %arg5[%c0_6, %c0_7] : memref<8x128xf32, #tpu.memory_space<vmem>>, vector<8x128xf32>
    tpu.vector_store %arg5[%c0_6, %c0_7], %7 {strides = array<i32>} : memref<8x128xf32, #tpu.memory_space<vmem>>, vector<8x128xf32>,
    %c3_i32 = arith.constant 3 : i32
    %9 = arith.cmpi eq, %arg1, %c3_i32 : i32
    %10 = arith.extui %9 : i1 to i32
    %c0_i32_8 = arith.constant 0 : i32
    %11 = arith.cmpi ne, %10, %c0_i32_8 : i32
    scf.if %11 {
      %c0_9 = arith.constant 0 : index
      %c0_10 = arith.constant 0 : index
      %12 = vector.load %arg5[%c0_9, %c0_10] : memref<8x128xf32, #tpu.memory_space<vmem>>, vector<8x128xf32>
      %c0_11 = arith.constant 0 : index
      %c0_12 = arith.constant 0 : index
      %13 = vector.load %arg4[%c0_11, %c0_12] : memref<8x128xf32, #tpu.memory_space<vmem>>, vector<8x128xf32>
      tpu.vector_store %arg4[%c0_11, %c0_12], %12 {strides = array<i32>} : memref<8x128xf32, #tpu.memory_space<vmem>>, vector<8x128xf32>,
    } else {
    }
    return
  }
  func.func @transform_0(%arg0: i32, %arg1: i32) -> (i32, i32) {
    %c4_i32 = arith.constant 4 : i32
    %0 = arith.muli %arg0, %c4_i32 : i32
    %1 = arith.addi %0, %arg1 : i32
    %c0_i32 = arith.constant 0 : i32
    %c0_i32_0 = arith.constant 0 : i32
    return %c0_i32, %1 : i32, i32
  }
  func.func @transform_1(%arg0: i32, %arg1: i32) -> (i32, i32) {
    %c4_i32 = arith.constant 4 : i32
    %0 = arith.muli %arg0, %c4_i32 : i32
    %1 = arith.addi %0, %arg1 : i32
    %c0_i32 = arith.constant 0 : i32
    %c0_i32_0 = arith.constant 0 : i32
    return %1, %c0_i32 : i32, i32
  }
  func.func @transform_2(%arg0: i32, %arg1: i32) -> (i32, i32) {
    %c0_i32 = arith.constant 0 : i32
    %c0_i32_0 = arith.constant 0 : i32
    return %arg0, %c0_i32 : i32, i32
  }
}

</mosaic_0001>

<llo_original>
// kernel: cnn_block_encoder.4
$region0: #{cnn_block_encoder.4}
  #allocation0 [shape = 'u32[]', space=smem, size = 0x4, offset = 0x4, fixed_abs, tag = 'smem constant byte address 0x4 - core index']
  #allocation1 [shape = 'u32[144,128]{1,0:T(1,128)}', space=vmem, size = 0x12000, scoped, tag = 'internal scratch']
  %s0 = inlined_call_operand.vmem [shape: f32[5024,18], index: 0, kind: input, shape index: {}]
  %s1 = inlined_call_operand.vmem [shape: f32[18,32], index: 1, kind: input, shape index: {}]
  %s2 = inlined_call_operand.vmem [shape: f32[1,32], index: 2, kind: input, shape index: {}]
  %s3 = inlined_call_operand.vmem [shape: f32[5024,32], index: 3, kind: output, shape index: {}]
  %s4 = sld [smem:[#allocation0]]
  $region45: #{cnn_block_encoder.4} parent=0
    _
  %s6 = ssub.s32 1, %s4
  %s7 = scalar_select 0, %s6, %s4
  loop: start=0, step=1, limit=6
  $region2: #{cnn_block_encoder.4} parent=0 // loop_pre_header
    _
  $region3: #{cnn_block_encoder.4} parent=0 // loop_header
    %s9 = sphi 0, %s13
    %p10 = scmp.ge.s32.totalorder %s9, 6
    %s19 = sphi 0, %s21
    %s22 = sphi 0, %s19
    %s23 = sphi 0, %s22
    %s39 = sphi 0, %s23
    %s43 = sphi 0, %s43
    %s45 = sphi 0, %s43
    %s46 = sphi 0, %s45
    %s60 = sphi 0, %s46
    %s64 = sphi 0, %s64
    %s66 = sphi 0, %s64
    %s67 = sphi 0, %s66
    %s81 = sphi 0, %s67
    %s87 = sphi 0, %s89
    %s90 = sphi 0, %s87
    %s91 = sphi 0, %s90
    %s107 = sphi 0, %s91
  $region4: #{cnn_block_encoder.4} parent=0 // loop_header_branch
    %12 = sbr.rel (%p10) target = $region8
  $region5: #{cnn_block_encoder.4} parent=0 // loop_body
    %s14 = ssub.s32 %s9, 1
    %s15 = ssub.s32 %s9, 2
    %s16 = sadd.s32 %s9, 1
    %s17 = ssub.s32 %s9, %s16
    %p18 = scmp.eq.s32.totalorder %s17, 0
    %s20 = sadd.s32 %s19, 1
    %s21 = scalar_select %p18, %s19, %s20
    %p24 = pneg %p18
    %p25 = scmp.eq.s32.totalorder %s9, 3
    %p26 = por %p24, %p25
    %p27 = scmp.ne.s32.totalorder %s19, %s22
    %p28 = scmp.eq.s32.totalorder %s9, 0
    %p29 = por %p27, %p28
    %p30 = scmp.ne.s32.totalorder %s19, %s22
    %p31 = scmp.eq.s32.totalorder %s14, 3
    %p32 = por %p30, %p31
    %p33 = scmp.ne.s32.totalorder %s22, %s23
    %p34 = scmp.eq.s32.totalorder %s14, 0
    %p35 = por %p33, %p34
    %p36 = scmp.ne.s32.totalorder %s22, %s23
    %p37 = scmp.eq.s32.totalorder %s15, 3
    %p38 = por %p36, %p37
    %p40 = scmp.ne.s32.totalorder %s23, %s39
    %p41 = scmp.eq.s32.totalorder %s15, 0
    %p42 = por %p40, %p41
    %s44 = sadd.s32 %s43, 1
    %p47 = scmp.eq.s32.totalorder %s9, 3
    %p48 = scmp.ne.s32.totalorder %s43, %s45
    %p49 = scmp.eq.s32.totalorder %s9, 0
    %p50 = por %p48, %p49
    %p51 = scmp.ne.s32.totalorder %s43, %s45
    %p52 = scmp.eq.s32.totalorder %s14, 3
    %p53 = por %p51, %p52
    %p54 = scmp.ne.s32.totalorder %s45, %s46
    %p55 = scmp.eq.s32.totalorder %s14, 0
    %p56 = por %p54, %p55
    %p57 = scmp.ne.s32.totalorder %s45, %s46
    %p58 = scmp.eq.s32.totalorder %s15, 3
    %p59 = por %p57, %p58
    %p61 = scmp.ne.s32.totalorder %s46, %s60
    %p62 = scmp.eq.s32.totalorder %s15, 0
    %p63 = por %p61, %p62
    %s65 = sadd.s32 %s64, 1
    %p68 = scmp.eq.s32.totalorder %s9, 3
    %p69 = scmp.ne.s32.totalorder %s64, %s66
    %p70 = scmp.eq.s32.totalorder %s9, 0
    %p71 = por %p69, %p70
    %p72 = scmp.ne.s32.totalorder %s64, %s66
    %p73 = scmp.eq.s32.totalorder %s14, 3
    %p74 = por %p72, %p73
    %p75 = scmp.ne.s32.totalorder %s66, %s67
    %p76 = scmp.eq.s32.totalorder %s14, 0
    %p77 = por %p75, %p76
    %p78 = scmp.ne.s32.totalorder %s66, %s67
    %p79 = scmp.eq.s32.totalorder %s15, 3
    %p80 = por %p78, %p79
    %p82 = scmp.ne.s32.totalorder %s67, %s81
    %p83 = scmp.eq.s32.totalorder %s15, 0
    %p84 = por %p82, %p83
    %s85 = ssub.s32 %s9, %s16
    %p86 = scmp.eq.s32.totalorder %s85, 0
    %s88 = sadd.s32 %s87, 1
    %s89 = scalar_select %p86, %s87, %s88
    %p92 = pneg %p86
    %p93 = scmp.eq.s32.totalorder %s9, 3
    %p94 = por %p92, %p93
    %p95 = scmp.ne.s32.totalorder %s87, %s90
    %p96 = scmp.eq.s32.totalorder %s9, 0
    %p97 = por %p95, %p96
    %p98 = scmp.ne.s32.totalorder %s87, %s90
    %p99 = scmp.eq.s32.totalorder %s14, 3
    %p100 = por %p98, %p99
    %p101 = scmp.ne.s32.totalorder %s90, %s91
    %p102 = scmp.eq.s32.totalorder %s14, 0
    %p103 = por %p101, %p102
    %p104 = scmp.ne.s32.totalorder %s90, %s91
    %p105 = scmp.eq.s32.totalorder %s15, 3
    %p106 = por %p104, %p105
    %p108 = scmp.ne.s32.totalorder %s91, %s107
    %p109 = scmp.eq.s32.totalorder %s15, 0
    %p110 = por %p108, %p109
    %p111 = scmp.le.s32.totalorder 1, %s9
    %p112 = scmp.lt.s32.totalorder %s9, 5
    %p113 = pnand %p111, %p112
    %p114 = pneg %p113
    // Predicated region
    $region9: #{cnn_block_encoder.4} parent=5 // pred_check
      _
    $region10: #{cnn_block_encoder.4} parent=5 // pred_check_branch
      %116 = sbr.rel (%p113) target = $region12
    $region11: #{cnn_block_encoder.4} parent=5 // pred_region
      %s117 = ssub.s32 %s9, 1
      // Predicated region
      $region13: #{cnn_block_encoder.4} parent=11 // pred_check
        %p118 = pneg %p56
      $region14: #{cnn_block_encoder.4} parent=11 // pred_check_branch
        %120 = sbr.rel (%p118) target = $region16
      $region15: #{cnn_block_encoder.4} parent=11 // pred_region
        _
      $region16: #{cnn_block_encoder.4} parent=11 // pred_fallthru
        _
      // Predicated region
      $region17: #{cnn_block_encoder.4} parent=11 // pred_check
        %p121 = pneg %p77
      $region18: #{cnn_block_encoder.4} parent=11 // pred_check_branch
        %123 = sbr.rel (%p121) target = $region20
      $region19: #{cnn_block_encoder.4} parent=11 // pred_region
        _
      $region20: #{cnn_block_encoder.4} parent=11 // pred_fallthru
        _
    $region12: #{cnn_block_encoder.4} parent=5 // pred_fallthru
      _
    %p124 = scmp.lt.s32.totalorder %s9, 4
    // Predicated region
    $region21: #{cnn_block_encoder.4} parent=5 // pred_check
      %p125 = pneg %p124
    $region22: #{cnn_block_encoder.4} parent=5 // pred_check_branch
      %127 = sbr.rel (%p125) target = $region24
    $region23: #{cnn_block_encoder.4} parent=5 // pred_region
      // Predicated region
      $region25: #{cnn_block_encoder.4} parent=23 // pred_check
        %p128 = pneg %p29
      $region26: #{cnn_block_encoder.4} parent=23 // pred_check_branch
        %130 = sbr.rel (%p128) target = $region28
      $region27: #{cnn_block_encoder.4} parent=23 // pred_region
        %s131 = smul.u32 157, %s9
        %p132 = scmp.lt.s32.totalorder %s131, 627
        %s133 = scalar_select %p132, %s131, 627
        %s134 = smul.addr %s133, 8
        %s135 = scalar_lea.vmem %s0, %s134
        %s136 = smul.u32 157, %s9
      $region28: #{cnn_block_encoder.4} parent=23 // pred_fallthru
        _
    $region24: #{cnn_block_encoder.4} parent=5 // pred_fallthru
      _
    %p137 = scmp.le.s32.totalorder 1, %s9
    %p138 = scmp.lt.s32.totalorder %s9, 5
    %p139 = pnand %p137, %p138
    %p140 = pneg %p139
    // Predicated region
    $region29: #{cnn_block_encoder.4} parent=5 // pred_check
      _
    $region30: #{cnn_block_encoder.4} parent=5 // pred_check_branch
      %142 = sbr.rel (%p139) target = $region32
    $region31: #{cnn_block_encoder.4} parent=5 // pred_region
      %s143 = ssub.s32 %s9, 1
      %s144 = smul.u32 157, %s14
      %p145 = scmp.lt.s32.totalorder %s144, 627
      %s146 = scalar_select %p145, %s144, 627
      %s147 = smul.addr %s146, 8
      %s148 = scalar_lea.vmem %s0, %s147
      %p149 = pneg %p35
      %p150 = pneg %p32
      %p151 = pneg %p56
      %p152 = pneg %p53
      %p153 = pneg %p77
      %p154 = pneg %p74
      %p155 = pneg %p103
      %p156 = pneg %p100
      %s157 = smul.u32 157, %s14
      %p158 = scmp.lt.s32.totalorder %s157, 627
      %s159 = scalar_select %p158, %s157, 627
      %s160 = smul.addr %s159, 8
      %s161 = scalar_lea.vmem %s3, %s160
      %s162 = smul.u32 157, %s14
      %p163 = scmp.lt.s32.totalorder %s162, 627
      %s164 = scalar_select %p163, %s162, 627
      %s165 = smul.addr %s164, 8
      %s166 = scalar_lea.vmem %s0, %s165
      %s167 = smul.u32 157, %s14
      %s168 = smul.u32 157, %s14
      %p169 = scmp.lt.s32.totalorder %s168, 627
      %s170 = scalar_select %p169, %s168, 627
      %s171 = smul.addr %s170, 8
      %s172 = scalar_lea.vmem %s3, %s171
      %s173 = smul.u32 157, %s14
      %v174 = vld [vmem:[%s166] sm:$0xff]
      %v175 = vld [vmem:[%s166 + $0x8] sm:$0xff]
      %v176 = vld [vmem:[%s166 + $0x10] sm:$0xff]
      %v177 = vld [vmem:[%s166 + $0x18] sm:$0xff]
      %v178 = vld [vmem:[%s166 + $0x20] sm:$0xff]
      %v179 = vld [vmem:[%s166 + $0x28] sm:$0xff]
      %v180 = vld [vmem:[%s166 + $0x30] sm:$0xff]
      %v181 = vld [vmem:[%s166 + $0x38] sm:$0xff]
      %v182 = vld [vmem:[%s166 + $0x40] sm:$0xff]
      %v183 = vld [vmem:[%s166 + $0x48] sm:$0xff]
      %v184 = vld [vmem:[%s166 + $0x50] sm:$0xff]
      %v185 = vld [vmem:[%s166 + $0x58] sm:$0xff]
      %v186 = vld [vmem:[%s166 + $0x60] sm:$0xff]
      %v187 = vld [vmem:[%s166 + $0x68] sm:$0xff]
      %v188 = vld [vmem:[%s166 + $0x70] sm:$0xff]
      %v189 = vld [vmem:[%s166 + $0x78] sm:$0xff]
      %v190 = vld [vmem:[%s166 + $0x80] sm:$0xff]
      %v191 = vld [vmem:[%s166 + $0x88] sm:$0xff]
      %v192 = vld [vmem:[%s166 + $0x90] sm:$0xff]
      %v193 = vld [vmem:[%s166 + $0x98] sm:$0xff]
      %v194 = vld [vmem:[%s166 + $0xa0] sm:$0xff]
      %v195 = vld [vmem:[%s166 + $0xa8] sm:$0xff]
      %v196 = vld [vmem:[%s166 + $0xb0] sm:$0xff]
      %v197 = vld [vmem:[%s166 + $0xb8] sm:$0xff]
      %v198 = vld [vmem:[%s166 + $0xc0] sm:$0xff]
      %v199 = vld [vmem:[%s166 + $0xc8] sm:$0xff]
      %v200 = vld [vmem:[%s166 + $0xd0] sm:$0xff]
      %v201 = vld [vmem:[%s166 + $0xd8] sm:$0xff]
      %v202 = vld [vmem:[%s166 + $0xe0] sm:$0xff]
      %v203 = vld [vmem:[%s166 + $0xe8] sm:$0xff]
      %v204 = vld [vmem:[%s166 + $0xf0] sm:$0xff]
      %v205 = vld [vmem:[%s166 + $0xf8] sm:$0xff]
      %v206 = vld [vmem:[%s166 + $0x100] sm:$0xff]
      %v207 = vld [vmem:[%s166 + $0x108] sm:$0xff]
      %v208 = vld [vmem:[%s166 + $0x110] sm:$0xff]
      %v209 = vld [vmem:[%s166 + $0x118] sm:$0xff]
      %v210 = vld [vmem:[%s166 + $0x120] sm:$0xff]
      %v211 = vld [vmem:[%s166 + $0x128] sm:$0xff]
      %v212 = vld [vmem:[%s166 + $0x130] sm:$0xff]
      %v213 = vld [vmem:[%s166 + $0x138] sm:$0xff]
      %v214 = vld [vmem:[%s166 + $0x140] sm:$0xff]
      %v215 = vld [vmem:[%s166 + $0x148] sm:$0xff]
      %v216 = vld [vmem:[%s166 + $0x150] sm:$0xff]
      %v217 = vld [vmem:[%s166 + $0x158] sm:$0xff]
      %v218 = vld [vmem:[%s166 + $0x160] sm:$0xff]
      %v219 = vld [vmem:[%s166 + $0x168] sm:$0xff]
      %v220 = vld [vmem:[%s166 + $0x170] sm:$0xff]
      %v221 = vld [vmem:[%s166 + $0x178] sm:$0xff]
      %v222 = vld [vmem:[%s166 + $0x180] sm:$0xff]
      %v223 = vld [vmem:[%s166 + $0x188] sm:$0xff]
      %v224 = vld [vmem:[%s166 + $0x190] sm:$0xff]
      %v225 = vld [vmem:[%s166 + $0x198] sm:$0xff]
      %v226 = vld [vmem:[%s166 + $0x1a0] sm:$0xff]
      %v227 = vld [vmem:[%s166 + $0x1a8] sm:$0xff]
      %v228 = vld [vmem:[%s166 + $0x1b0] sm:$0xff]
      %v229 = vld [vmem:[%s166 + $0x1b8] sm:$0xff]
      %v230 = vld [vmem:[%s166 + $0x1c0] sm:$0xff]
      %v231 = vld [vmem:[%s166 + $0x1c8] sm:$0xff]
      %v232 = vld [vmem:[%s166 + $0x1d0] sm:$0xff]
      %v233 = vld [vmem:[%s166 + $0x1d8] sm:$0xff]
      %v234 = vld [vmem:[%s166 + $0x1e0] sm:$0xff]
      %v235 = vld [vmem:[%s166 + $0x1e8] sm:$0xff]
      %v236 = vld [vmem:[%s166 + $0x1f0] sm:$0xff]
      %v237 = vld [vmem:[%s166 + $0x1f8] sm:$0xff]
      %v238 = vld [vmem:[%s166 + $0x200] sm:$0xff]
      %v239 = vld [vmem:[%s166 + $0x208] sm:$0xff]
      %v240 = vld [vmem:[%s166 + $0x210] sm:$0xff]
      %v241 = vld [vmem:[%s166 + $0x218] sm:$0xff]
      %v242 = vld [vmem:[%s166 + $0x220] sm:$0xff]
      %v243 = vld [vmem:[%s166 + $0x228] sm:$0xff]
      %v244 = vld [vmem:[%s166 + $0x230] sm:$0xff]
      %v245 = vld [vmem:[%s166 + $0x238] sm:$0xff]
      %v246 = vld [vmem:[%s166 + $0x240] sm:$0xff]
      %v247 = vld [vmem:[%s166 + $0x248] sm:$0xff]
      %v248 = vld [vmem:[%s166 + $0x250] sm:$0xff]
      %v249 = vld [vmem:[%s166 + $0x258] sm:$0xff]
      %v250 = vld [vmem:[%s166 + $0x260] sm:$0xff]
      %v251 = vld [vmem:[%s166 + $0x268] sm:$0xff]
      %v252 = vld [vmem:[%s166 + $0x270] sm:$0xff]
      %v253 = vld [vmem:[%s166 + $0x278] sm:$0xff]
      %v254 = vld [vmem:[%s166 + $0x280] sm:$0xff]
      %v255 = vld [vmem:[%s166 + $0x288] sm:$0xff]
      %v256 = vld [vmem:[%s166 + $0x290] sm:$0xff]
      %v257 = vld [vmem:[%s166 + $0x298] sm:$0xff]
      %v258 = vld [vmem:[%s166 + $0x2a0] sm:$0xff]
      %v259 = vld [vmem:[%s166 + $0x2a8] sm:$0xff]
      %v260 = vld [vmem:[%s166 + $0x2b0] sm:$0xff]
      %v261 = vld [vmem:[%s166 + $0x2b8] sm:$0xff]
      %v262 = vld [vmem:[%s166 + $0x2c0] sm:$0xff]
      %v263 = vld [vmem:[%s166 + $0x2c8] sm:$0xff]
      %v264 = vld [vmem:[%s166 + $0x2d0] sm:$0xff]
      %v265 = vld [vmem:[%s166 + $0x2d8] sm:$0xff]
      %v266 = vld [vmem:[%s166 + $0x2e0] sm:$0xff]
      %v267 = vld [vmem:[%s166 + $0x2e8] sm:$0xff]
      %v268 = vld [vmem:[%s166 + $0x2f0] sm:$0xff]
      %v269 = vld [vmem:[%s166 + $0x2f8] sm:$0xff]
      %v270 = vld [vmem:[%s166 + $0x300] sm:$0xff]
      %v271 = vld [vmem:[%s166 + $0x308] sm:$0xff]
      %v272 = vld [vmem:[%s166 + $0x310] sm:$0xff]
      %v273 = vld [vmem:[%s166 + $0x318] sm:$0xff]
      %v274 = vld [vmem:[%s166 + $0x320] sm:$0xff]
      %v275 = vld [vmem:[%s166 + $0x328] sm:$0xff]
      %v276 = vld [vmem:[%s166 + $0x330] sm:$0xff]
      %v277 = vld [vmem:[%s166 + $0x338] sm:$0xff]
      %v278 = vld [vmem:[%s166 + $0x340] sm:$0xff]
      %v279 = vld [vmem:[%s166 + $0x348] sm:$0xff]
      %v280 = vld [vmem:[%s166 + $0x350] sm:$0xff]
      %v281 = vld [vmem:[%s166 + $0x358] sm:$0xff]
      %v282 = vld [vmem:[%s166 + $0x360] sm:$0xff]
      %v283 = vld [vmem:[%s166 + $0x368] sm:$0xff]
      %v284 = vld [vmem:[%s166 + $0x370] sm:$0xff]
      %v285 = vld [vmem:[%s166 + $0x378] sm:$0xff]
      %v286 = vld [vmem:[%s166 + $0x380] sm:$0xff]
      %v287 = vld [vmem:[%s166 + $0x388] sm:$0xff]
      %v288 = vld [vmem:[%s166 + $0x390] sm:$0xff]
      %v289 = vld [vmem:[%s166 + $0x398] sm:$0xff]
      %v290 = vld [vmem:[%s166 + $0x3a0] sm:$0xff]
      %v291 = vld [vmem:[%s166 + $0x3a8] sm:$0xff]
      %v292 = vld [vmem:[%s166 + $0x3b0] sm:$0xff]
      %v293 = vld [vmem:[%s166 + $0x3b8] sm:$0xff]
      %v294 = vld [vmem:[%s166 + $0x3c0] sm:$0xff]
      %v295 = vld [vmem:[%s166 + $0x3c8] sm:$0xff]
      %v296 = vld [vmem:[%s166 + $0x3d0] sm:$0xff]
      %v297 = vld [vmem:[%s166 + $0x3d8] sm:$0xff]
      %v298 = vld [vmem:[%s166 + $0x3e0] sm:$0xff]
      %v299 = vld [vmem:[%s166 + $0x3e8] sm:$0xff]
      %v300 = vld [vmem:[%s166 + $0x3f0] sm:$0xff]
      %v301 = vld [vmem:[%s166 + $0x3f8] sm:$0xff]
      %v302 = vld [vmem:[%s166 + $0x400] sm:$0xff]
      %v303 = vld [vmem:[%s166 + $0x408] sm:$0xff]
      %v304 = vld [vmem:[%s166 + $0x410] sm:$0xff]
      %v305 = vld [vmem:[%s166 + $0x418] sm:$0xff]
      %v306 = vld [vmem:[%s166 + $0x420] sm:$0xff]
      %v307 = vld [vmem:[%s166 + $0x428] sm:$0xff]
      %v308 = vld [vmem:[%s166 + $0x430] sm:$0xff]
      %v309 = vld [vmem:[%s166 + $0x438] sm:$0xff]
      %v310 = vld [vmem:[%s166 + $0x440] sm:$0xff]
      %v311 = vld [vmem:[%s166 + $0x448] sm:$0xff]
      %v312 = vld [vmem:[%s166 + $0x450] sm:$0xff]
      %v313 = vld [vmem:[%s166 + $0x458] sm:$0xff]
      %v314 = vld [vmem:[%s166 + $0x460] sm:$0xff]
      %v315 = vld [vmem:[%s166 + $0x468] sm:$0xff]
      %v316 = vld [vmem:[%s166 + $0x470] sm:$0xff]
      %v317 = vld [vmem:[%s166 + $0x478] sm:$0xff]
      %v318 = vld [vmem:[%s166 + $0x480] sm:$0xff]
      %v319 = vld [vmem:[%s166 + $0x488] sm:$0xff]
      %v320 = vld [vmem:[%s166 + $0x490] sm:$0xff]
      %v321 = vld [vmem:[%s166 + $0x498] sm:$0xff]
      %v322 = vld [vmem:[%s166 + $0x4a0] sm:$0xff]
      %v323 = vld [vmem:[%s166 + $0x4a8] sm:$0xff]
      %v324 = vld [vmem:[%s166 + $0x4b0] sm:$0xff]
      %v325 = vld [vmem:[%s166 + $0x4b8] sm:$0xff]
      %v326 = vld [vmem:[%s166 + $0x4c0] sm:$0xff]
      %v327 = vld [vmem:[%s166 + $0x4c8] sm:$0xff]
      %v328 = vld [vmem:[%s166 + $0x4d0] sm:$0xff]
      %v329 = vld [vmem:[%s166 + $0x4d8] sm:$0xff]
      %v330 = vld [vmem:[%s166 + $0x4e0] sm:$0xff]
      %v331 = vld [vmem:[%s1] sm:$0xff]
      %v332 = vld [vmem:[%s1 + $0x8] sm:$0xff]
      %v333 = vld [vmem:[%s1 + $0x10] sm:$0x3]
      %v334 = vld [vmem:[%s2] sm:$0x1]
      %v336 = vlaneseq
      %v337 = vshrl.u32 %v336, 7
      %v338 = vsub.s32 0, %v337
      %v339 = vrot.slane %v334, %v338
      %vm341 = vcmask 146432
      %v343 = vsel %vm341, %v174, 0
      %v346 = vsel %vm341, %v175, 0
      %v349 = vsel %vm341, %v176, 0
      %v352 = vsel %vm341, %v177, 0
      %v355 = vsel %vm341, %v178, 0
      %v358 = vsel %vm341, %v179, 0
      %v361 = vsel %vm341, %v180, 0
      %v364 = vsel %vm341, %v181, 0
      %v367 = vsel %vm341, %v182, 0
      %v370 = vsel %vm341, %v183, 0
      %v373 = vsel %vm341, %v184, 0
      %v376 = vsel %vm341, %v185, 0
      %v379 = vsel %vm341, %v186, 0
      %v382 = vsel %vm341, %v187, 0
      %v385 = vsel %vm341, %v188, 0
      %v388 = vsel %vm341, %v189, 0
      %v391 = vsel %vm341, %v190, 0
      %v394 = vsel %vm341, %v191, 0
      %v397 = vsel %vm341, %v192, 0
      %v400 = vsel %vm341, %v193, 0
      %v403 = vsel %vm341, %v194, 0
      %v406 = vsel %vm341, %v195, 0
      %v409 = vsel %vm341, %v196, 0
      %v412 = vsel %vm341, %v197, 0
      %v415 = vsel %vm341, %v198, 0
      %v418 = vsel %vm341, %v199, 0
      %v421 = vsel %vm341, %v200, 0
      %v424 = vsel %vm341, %v201, 0
      %v427 = vsel %vm341, %v202, 0
      %v430 = vsel %vm341, %v203, 0
      %v433 = vsel %vm341, %v204, 0
      %v436 = vsel %vm341, %v205, 0
      %v439 = vsel %vm341, %v206, 0
      %v442 = vsel %vm341, %v207, 0
      %v445 = vsel %vm341, %v208, 0
      %v448 = vsel %vm341, %v209, 0
      %v451 = vsel %vm341, %v210, 0
      %v454 = vsel %vm341, %v211, 0
      %v457 = vsel %vm341, %v212, 0
      %v460 = vsel %vm341, %v213, 0
      %v463 = vsel %vm341, %v214, 0
      %v466 = vsel %vm341, %v215, 0
      %v469 = vsel %vm341, %v216, 0
      %v472 = vsel %vm341, %v217, 0
      %v475 = vsel %vm341, %v218, 0
      %v478 = vsel %vm341, %v219, 0
      %v481 = vsel %vm341, %v220, 0
      %v484 = vsel %vm341, %v221, 0
      %v487 = vsel %vm341, %v222, 0
      %v490 = vsel %vm341, %v223, 0
      %v493 = vsel %vm341, %v224, 0
      %v496 = vsel %vm341, %v225, 0
      %v499 = vsel %vm341, %v226, 0
      %v502 = vsel %vm341, %v227, 0
      %v505 = vsel %vm341, %v228, 0
      %v508 = vsel %vm341, %v229, 0
      %v511 = vsel %vm341, %v230, 0
      %v514 = vsel %vm341, %v231, 0
      %v517 = vsel %vm341, %v232, 0
      %v520 = vsel %vm341, %v233, 0
      %v523 = vsel %vm341, %v234, 0
      %v526 = vsel %vm341, %v235, 0
      %v529 = vsel %vm341, %v236, 0
      %v532 = vsel %vm341, %v237, 0
      %v535 = vsel %vm341, %v238, 0
      %v538 = vsel %vm341, %v239, 0
      %v541 = vsel %vm341, %v240, 0
      %v544 = vsel %vm341, %v241, 0
      %v547 = vsel %vm341, %v242, 0
      %v550 = vsel %vm341, %v243, 0
      %v553 = vsel %vm341, %v244, 0
      %v556 = vsel %vm341, %v245, 0
      %v559 = vsel %vm341, %v246, 0
      %v562 = vsel %vm341, %v247, 0
      %v565 = vsel %vm341, %v248, 0
      %v568 = vsel %vm341, %v249, 0
      %v571 = vsel %vm341, %v250, 0
      %v574 = vsel %vm341, %v251, 0
      %v577 = vsel %vm341, %v252, 0
      %v580 = vsel %vm341, %v253, 0
      %v583 = vsel %vm341, %v254, 0
      %v586 = vsel %vm341, %v255, 0
      %v589 = vsel %vm341, %v256, 0
      %v592 = vsel %vm341, %v257, 0
      %v595 = vsel %vm341, %v258, 0
      %v598 = vsel %vm341, %v259, 0
      %v601 = vsel %vm341, %v260, 0
      %v604 = vsel %vm341, %v261, 0
      %v607 = vsel %vm341, %v262, 0
      %v610 = vsel %vm341, %v263, 0
      %v613 = vsel %vm341, %v264, 0
      %v616 = vsel %vm341, %v265, 0
      %v619 = vsel %vm341, %v266, 0
      %v622 = vsel %vm341, %v267, 0
      %v625 = vsel %vm341, %v268, 0
      %v628 = vsel %vm341, %v269, 0
      %v631 = vsel %vm341, %v270, 0
      %v634 = vsel %vm341, %v271, 0
      %v637 = vsel %vm341, %v272, 0
      %v640 = vsel %vm341, %v273, 0
      %v643 = vsel %vm341, %v274, 0
      %v646 = vsel %vm341, %v275, 0
      %v649 = vsel %vm341, %v276, 0
      %v652 = vsel %vm341, %v277, 0
      %v655 = vsel %vm341, %v278, 0
      %v658 = vsel %vm341, %v279, 0
      %v661 = vsel %vm341, %v280, 0
      %v664 = vsel %vm341, %v281, 0
      %v667 = vsel %vm341, %v282, 0
      %v670 = vsel %vm341, %v283, 0
      %v673 = vsel %vm341, %v284, 0
      %v676 = vsel %vm341, %v285, 0
      %v679 = vsel %vm341, %v286, 0
      %v682 = vsel %vm341, %v287, 0
      %v685 = vsel %vm341, %v288, 0
      %v688 = vsel %vm341, %v289, 0
      %v691 = vsel %vm341, %v290, 0
      %v694 = vsel %vm341, %v291, 0
      %v697 = vsel %vm341, %v292, 0
      %v700 = vsel %vm341, %v293, 0
      %v703 = vsel %vm341, %v294, 0
      %v706 = vsel %vm341, %v295, 0
      %v709 = vsel %vm341, %v296, 0
      %v712 = vsel %vm341, %v297, 0
      %v715 = vsel %vm341, %v298, 0
      %v718 = vsel %vm341, %v299, 0
      %v721 = vsel %vm341, %v300, 0
      %v724 = vsel %vm341, %v301, 0
      %v727 = vsel %vm341, %v302, 0
      %v730 = vsel %vm341, %v303, 0
      %v733 = vsel %vm341, %v304, 0
      %v736 = vsel %vm341, %v305, 0
      %v739 = vsel %vm341, %v306, 0
      %v742 = vsel %vm341, %v307, 0
      %v745 = vsel %vm341, %v308, 0
      %v748 = vsel %vm341, %v309, 0
      %v751 = vsel %vm341, %v310, 0
      %v754 = vsel %vm341, %v311, 0
      %v757 = vsel %vm341, %v312, 0
      %v760 = vsel %vm341, %v313, 0
      %v763 = vsel %vm341, %v314, 0
      %v766 = vsel %vm341, %v315, 0
      %v769 = vsel %vm341, %v316, 0
      %v772 = vsel %vm341, %v317, 0
      %v775 = vsel %vm341, %v318, 0
      %v778 = vsel %vm341, %v319, 0
      %v781 = vsel %vm341, %v320, 0
      %v784 = vsel %vm341, %v321, 0
      %v787 = vsel %vm341, %v322, 0
      %v790 = vsel %vm341, %v323, 0
      %v793 = vsel %vm341, %v324, 0
      %v796 = vsel %vm341, %v325, 0
      %v799 = vsel %vm341, %v326, 0
      %v802 = vsel %vm341, %v327, 0
      %v805 = vsel %vm341, %v328, 0
      %v808 = vsel %vm341, %v329, 0
      %v811 = vsel %vm341, %v330, 0
      %vm813 = vcmask 1041408
      %v815 = vsel %vm813, %v333, 0
      %817 = vmatprep.subr.mxu0 0.0
      %818 = vmatpush1.msra.mxu0 0.0
      %819 = vmatprep.subr.mxu0 0.0
      %820 = vmatpush1.msra.mxu0 0.0
      %821 = vmatprep.subr.mxu0 0.0
      %822 = vmatpush1.msra.mxu0 0.0
      %823 = vmatprep.subr.mxu0 0.0
      %824 = vmatpush1.msra.mxu0 0.0
      %825 = vmatprep.subr.mxu0 0.0
      %826 = vmatpush1.msra.mxu0 0.0
      %827 = vmatprep.subr.mxu0 0.0
      %828 = vmatpush1.msra.mxu0 0.0
      %829 = vmatprep.subr.mxu0 0.0
      %830 = vmatpush1.msra.mxu0 0.0
      %831 = vmatprep.subr.mxu0 0.0
      %832 = vmatpush1.msra.mxu0 0.0
      %833 = vmatprep.subr.mxu0 0.0
      %834 = vmatpush1.msra.mxu0 0.0
      %835 = vmatprep.subr.mxu0 0.0
      %836 = vmatpush1.msra.mxu0 0.0
      %837 = vmatprep.subr.mxu0 0.0
      %838 = vmatpush1.msra.mxu0 0.0
      %839 = vmatprep.subr.mxu0 0.0
      %840 = vmatpush1.msra.mxu0 0.0
      %841 = vmatprep.subr.mxu0 0.0
      %842 = vmatpush1.msra.mxu0 0.0
      %843 = vmatprep.subr.mxu0 0.0
      %844 = vmatpush1.msra.mxu0 %v815
      %845 = vmatprep.subr.mxu0 0.0
      %846 = vmatpush1.msra.mxu0 %v332
      %847 = vmatprep.subr.mxu0 0.0
      %848 = vmatpush1.msra.mxu0 %v331
      %849 = vmatprep.subr.mxu0 0.0
      %850 = vmatpush2.msra.mxu0 0.0
      %851 = vmatprep.subr.mxu0 0.0
      %852 = vmatpush2.msra.mxu0 0.0
      %853 = vmatprep.subr.mxu0 0.0
      %854 = vmatpush2.msra.mxu0 0.0
      %855 = vmatprep.subr.mxu0 0.0
      %856 = vmatpush2.msra.mxu0 0.0
      %857 = vmatprep.subr.mxu0 0.0
      %858 = vmatpush2.msra.mxu0 0.0
      %859 = vmatprep.subr.mxu0 0.0
      %860 = vmatpush2.msra.mxu0 0.0
      %861 = vmatprep.subr.mxu0 0.0
      %862 = vmatpush2.msra.mxu0 0.0
      %863 = vmatprep.subr.mxu0 0.0
      %864 = vmatpush2.msra.mxu0 0.0
      %865 = vmatprep.subr.mxu0 0.0
      %866 = vmatpush2.msra.mxu0 0.0
      %867 = vmatprep.subr.mxu0 0.0
      %868 = vmatpush2.msra.mxu0 0.0
      %869 = vmatprep.subr.mxu0 0.0
      %870 = vmatpush2.msra.mxu0 0.0
      %871 = vmatprep.subr.mxu0 0.0
      %872 = vmatpush2.msra.mxu0 0.0
      %873 = vmatprep.subr.mxu0 0.0
      %874 = vmatpush2.msra.mxu0 0.0
      %875 = vmatprep.subr.mxu0 0.0
      %876 = vmatpush2.msra.mxu0 0.0
      %877 = vmatprep.subr.mxu0 0.0
      %878 = vmatpush2.msra.mxu0 0.0
      %879 = vmatprep.subr.mxu0 0.0
      %880 = vmatpush2.msra.mxu0 0.0
      %881 = vmatprep.mubr.f32.mxu0 0.0
      %882 = vmatmul.mubr.f32.gmra.mxu0 %v343
      %v883 = vpop.f32.mrf.mxu0
      %v884 = vadd.f32 %v339, %v883
      %v885 = vpop.f32.mrf.mxu0
      %886 = vmatprep.mubr.f32.mxu0 0.0
      %887 = vmatmul.mubr.f32.gmra.mxu0 %v346
      %v888 = vpop.f32.mrf.mxu0
      %v889 = vadd.f32 %v339, %v888
      %v890 = vpop.f32.mrf.mxu0
      %891 = vmatprep.mubr.f32.mxu0 0.0
      %892 = vmatmul.mubr.f32.gmra.mxu0 %v349
      %v893 = vpop.f32.mrf.mxu0
      %v894 = vadd.f32 %v339, %v893
      %v895 = vpop.f32.mrf.mxu0
      %896 = vmatprep.mubr.f32.mxu0 0.0
      %897 = vmatmul.mubr.f32.gmra.mxu0 %v352
      %v898 = vpop.f32.mrf.mxu0
      %v899 = vadd.f32 %v339, %v898
      %v900 = vpop.f32.mrf.mxu0
      %901 = vmatprep.mubr.f32.mxu0 0.0
      %902 = vmatmul.mubr.f32.gmra.mxu0 %v355
      %v903 = vpop.f32.mrf.mxu0
      %v904 = vadd.f32 %v339, %v903
      %v905 = vpop.f32.mrf.mxu0
      %906 = vmatprep.mubr.f32.mxu0 0.0
      %907 = vmatmul.mubr.f32.gmra.mxu0 %v358
      %v908 = vpop.f32.mrf.mxu0
      %v909 = vadd.f32 %v339, %v908
      %v910 = vpop.f32.mrf.mxu0
      %911 = vmatprep.mubr.f32.mxu0 0.0
      %912 = vmatmul.mubr.f32.gmra.mxu0 %v361
      %v913 = vpop.f32.mrf.mxu0
      %v914 = vadd.f32 %v339, %v913
      %v915 = vpop.f32.mrf.mxu0
      %916 = vmatprep.mubr.f32.mxu0 0.0
      %917 = vmatmul.mubr.f32.gmra.mxu0 %v364
      %v918 = vpop.f32.mrf.mxu0
      %v919 = vadd.f32 %v339, %v918
      %v920 = vpop.f32.mrf.mxu0
      %921 = vmatprep.mubr.f32.mxu0 0.0
      %922 = vmatmul.mubr.f32.gmra.mxu0 %v367
      %v923 = vpop.f32.mrf.mxu0
      %v924 = vadd.f32 %v339, %v923
      %v925 = vpop.f32.mrf.mxu0
      %926 = vmatprep.mubr.f32.mxu0 0.0
      %927 = vmatmul.mubr.f32.gmra.mxu0 %v370
      %v928 = vpop.f32.mrf.mxu0
      %v929 = vadd.f32 %v339, %v928
      %v930 = vpop.f32.mrf.mxu0
      %931 = vmatprep.mubr.f32.mxu0 0.0
      %932 = vmatmul.mubr.f32.gmra.mxu0 %v373
      %v933 = vpop.f32.mrf.mxu0
      %v934 = vadd.f32 %v339, %v933
      %v935 = vpop.f32.mrf.mxu0
      %936 = vmatprep.mubr.f32.mxu0 0.0
      %937 = vmatmul.mubr.f32.gmra.mxu0 %v376
      %v938 = vpop.f32.mrf.mxu0
      %v939 = vadd.f32 %v339, %v938
      %v940 = vpop.f32.mrf.mxu0
      %941 = vmatprep.mubr.f32.mxu0 0.0
      %942 = vmatmul.mubr.f32.gmra.mxu0 %v379
      %v943 = vpop.f32.mrf.mxu0
      %v944 = vadd.f32 %v339, %v943
      %v945 = vpop.f32.mrf.mxu0
      %946 = vmatprep.mubr.f32.mxu0 0.0
      %947 = vmatmul.mubr.f32.gmra.mxu0 %v382
      %v948 = vpop.f32.mrf.mxu0
      %v949 = vadd.f32 %v339, %v948
      %v950 = vpop.f32.mrf.mxu0
      %951 = vmatprep.mubr.f32.mxu0 0.0
      %952 = vmatmul.mubr.f32.gmra.mxu0 %v385
      %v953 = vpop.f32.mrf.mxu0
      %v954 = vadd.f32 %v339, %v953
      %v955 = vpop.f32.mrf.mxu0
      %956 = vmatprep.mubr.f32.mxu0 0.0
      %957 = vmatmul.mubr.f32.gmra.mxu0 %v388
      %v958 = vpop.f32.mrf.mxu0
      %v959 = vadd.f32 %v339, %v958
      %v960 = vpop.f32.mrf.mxu0
      %961 = vmatprep.mubr.f32.mxu0 0.0
      %962 = vmatmul.mubr.f32.gmra.mxu0 %v391
      %v963 = vpop.f32.mrf.mxu0
      %v964 = vadd.f32 %v339, %v963
      %v965 = vpop.f32.mrf.mxu0
      %966 = vmatprep.mubr.f32.mxu0 0.0
      %967 = vmatmul.mubr.f32.gmra.mxu0 %v394
      %v968 = vpop.f32.mrf.mxu0
      %v969 = vadd.f32 %v339, %v968
      %v970 = vpop.f32.mrf.mxu0
      %971 = vmatprep.mubr.f32.mxu0 0.0
      %972 = vmatmul.mubr.f32.gmra.mxu0 %v397
      %v973 = vpop.f32.mrf.mxu0
      %v974 = vadd.f32 %v339, %v973
      %v975 = vpop.f32.mrf.mxu0
      %976 = vmatprep.mubr.f32.mxu0 0.0
      %977 = vmatmul.mubr.f32.gmra.mxu0 %v400
      %v978 = vpop.f32.mrf.mxu0
      %v979 = vadd.f32 %v339, %v978
      %v980 = vpop.f32.mrf.mxu0
      %981 = vmatprep.mubr.f32.mxu0 0.0
      %982 = vmatmul.mubr.f32.gmra.mxu0 %v403
      %v983 = vpop.f32.mrf.mxu0
      %v984 = vadd.f32 %v339, %v983
      %v985 = vpop.f32.mrf.mxu0
      %986 = vmatprep.mubr.f32.mxu0 0.0
      %987 = vmatmul.mubr.f32.gmra.mxu0 %v406
      %v988 = vpop.f32.mrf.mxu0
      %v989 = vadd.f32 %v339, %v988
      %v990 = vpop.f32.mrf.mxu0
      %991 = vmatprep.mubr.f32.mxu0 0.0
      %992 = vmatmul.mubr.f32.gmra.mxu0 %v409
      %v993 = vpop.f32.mrf.mxu0
      %v994 = vadd.f32 %v339, %v993
      %v995 = vpop.f32.mrf.mxu0
      %996 = vmatprep.mubr.f32.mxu0 0.0
      %997 = vmatmul.mubr.f32.gmra.mxu0 %v412
      %v998 = vpop.f32.mrf.mxu0
      %v999 = vadd.f32 %v339, %v998
      %v1000 = vpop.f32.mrf.mxu0
      %1001 = vmatprep.mubr.f32.mxu0 0.0
      %1002 = vmatmul.mubr.f32.gmra.mxu0 %v415
      %v1003 = vpop.f32.mrf.mxu0
      %v1004 = vadd.f32 %v339, %v1003
      %v1005 = vpop.f32.mrf.mxu0
      %1006 = vmatprep.mubr.f32.mxu0 0.0
      %1007 = vmatmul.mubr.f32.gmra.mxu0 %v418
      %v1008 = vpop.f32.mrf.mxu0
      %v1009 = vadd.f32 %v339, %v1008
      %v1010 = vpop.f32.mrf.mxu0
      %1011 = vmatprep.mubr.f32.mxu0 0.0
      %1012 = vmatmul.mubr.f32.gmra.mxu0 %v421
      %v1013 = vpop.f32.mrf.mxu0
      %v1014 = vadd.f32 %v339, %v1013
      %v1015 = vpop.f32.mrf.mxu0
      %1016 = vmatprep.mubr.f32.mxu0 0.0
      %1017 = vmatmul.mubr.f32.gmra.mxu0 %v424
      %v1018 = vpop.f32.mrf.mxu0
      %v1019 = vadd.f32 %v339, %v1018
      %v1020 = vpop.f32.mrf.mxu0
      %1021 = vmatprep.mubr.f32.mxu0 0.0
      %1022 = vmatmul.mubr.f32.gmra.mxu0 %v427
      %v1023 = vpop.f32.mrf.mxu0
      %v1024 = vadd.f32 %v339, %v1023
      %v1025 = vpop.f32.mrf.mxu0
      %1026 = vmatprep.mubr.f32.mxu0 0.0
      %1027 = vmatmul.mubr.f32.gmra.mxu0 %v430
      %v1028 = vpop.f32.mrf.mxu0
      %v1029 = vadd.f32 %v339, %v1028
      %v1030 = vpop.f32.mrf.mxu0
      %1031 = vmatprep.mubr.f32.mxu0 0.0
      %1032 = vmatmul.mubr.f32.gmra.mxu0 %v433
      %v1033 = vpop.f32.mrf.mxu0
      %v1034 = vadd.f32 %v339, %v1033
      %v1035 = vpop.f32.mrf.mxu0
      %1036 = vmatprep.mubr.f32.mxu0 0.0
      %1037 = vmatmul.mubr.f32.gmra.mxu0 %v436
      %v1038 = vpop.f32.mrf.mxu0
      %v1039 = vadd.f32 %v339, %v1038
      %v1040 = vpop.f32.mrf.mxu0
      %1041 = vmatprep.mubr.f32.mxu0 0.0
      %1042 = vmatmul.mubr.f32.gmra.mxu0 %v439
      %v1043 = vpop.f32.mrf.mxu0
      %v1044 = vadd.f32 %v339, %v1043
      %v1045 = vpop.f32.mrf.mxu0
      %1046 = vmatprep.mubr.f32.mxu0 0.0
      %1047 = vmatmul.mubr.f32.gmra.mxu0 %v442
      %v1048 = vpop.f32.mrf.mxu0
      %v1049 = vadd.f32 %v339, %v1048
      %v1050 = vpop.f32.mrf.mxu0
      %1051 = vmatprep.mubr.f32.mxu0 0.0
      %1052 = vmatmul.mubr.f32.gmra.mxu0 %v445
      %v1053 = vpop.f32.mrf.mxu0
      %v1054 = vadd.f32 %v339, %v1053
      %v1055 = vpop.f32.mrf.mxu0
      %1056 = vmatprep.mubr.f32.mxu0 0.0
      %1057 = vmatmul.mubr.f32.gmra.mxu0 %v448
      %v1058 = vpop.f32.mrf.mxu0
      %v1059 = vadd.f32 %v339, %v1058
      %v1060 = vpop.f32.mrf.mxu0
      %1061 = vmatprep.mubr.f32.mxu0 0.0
      %1062 = vmatmul.mubr.f32.gmra.mxu0 %v451
      %v1063 = vpop.f32.mrf.mxu0
      %v1064 = vadd.f32 %v339, %v1063
      %v1065 = vpop.f32.mrf.mxu0
      %1066 = vmatprep.mubr.f32.mxu0 0.0
      %1067 = vmatmul.mubr.f32.gmra.mxu0 %v454
      %v1068 = vpop.f32.mrf.mxu0
      %v1069 = vadd.f32 %v339, %v1068
      %v1070 = vpop.f32.mrf.mxu0
      %1071 = vmatprep.mubr.f32.mxu0 0.0
      %1072 = vmatmul.mubr.f32.gmra.mxu0 %v457
      %v1073 = vpop.f32.mrf.mxu0
      %v1074 = vadd.f32 %v339, %v1073
      %v1075 = vpop.f32.mrf.mxu0
      %1076 = vmatprep.mubr.f32.mxu0 0.0
      %1077 = vmatmul.mubr.f32.gmra.mxu0 %v460
      %v1078 = vpop.f32.mrf.mxu0
      %v1079 = vadd.f32 %v339, %v1078
      %v1080 = vpop.f32.mrf.mxu0
      %1081 = vmatprep.mubr.f32.mxu0 0.0
      %1082 = vmatmul.mubr.f32.gmra.mxu0 %v463
      %v1083 = vpop.f32.mrf.mxu0
      %v1084 = vadd.f32 %v339, %v1083
      %v1085 = vpop.f32.mrf.mxu0
      %1086 = vmatprep.mubr.f32.mxu0 0.0
      %1087 = vmatmul.mubr.f32.gmra.mxu0 %v466
      %v1088 = vpop.f32.mrf.mxu0
      %v1089 = vadd.f32 %v339, %v1088
      %v1090 = vpop.f32.mrf.mxu0
      %1091 = vmatprep.mubr.f32.mxu0 0.0
      %1092 = vmatmul.mubr.f32.gmra.mxu0 %v469
      %v1093 = vpop.f32.mrf.mxu0
      %v1094 = vadd.f32 %v339, %v1093
      %v1095 = vpop.f32.mrf.mxu0
      %1096 = vmatprep.mubr.f32.mxu0 0.0
      %1097 = vmatmul.mubr.f32.gmra.mxu0 %v472
      %v1098 = vpop.f32.mrf.mxu0
      %v1099 = vadd.f32 %v339, %v1098
      %v1100 = vpop.f32.mrf.mxu0
      %1101 = vmatprep.mubr.f32.mxu0 0.0
      %1102 = vmatmul.mubr.f32.gmra.mxu0 %v475
      %v1103 = vpop.f32.mrf.mxu0
      %v1104 = vadd.f32 %v339, %v1103
      %v1105 = vpop.f32.mrf.mxu0
      %1106 = vmatprep.mubr.f32.mxu0 0.0
      %1107 = vmatmul.mubr.f32.gmra.mxu0 %v478
      %v1108 = vpop.f32.mrf.mxu0
      %v1109 = vadd.f32 %v339, %v1108
      %v1110 = vpop.f32.mrf.mxu0
      %1111 = vmatprep.mubr.f32.mxu0 0.0
      %1112 = vmatmul.mubr.f32.gmra.mxu0 %v481
      %v1113 = vpop.f32.mrf.mxu0
      %v1114 = vadd.f32 %v339, %v1113
      %v1115 = vpop.f32.mrf.mxu0
      %1116 = vmatprep.mubr.f32.mxu0 0.0
      %1117 = vmatmul.mubr.f32.gmra.mxu0 %v484
      %v1118 = vpop.f32.mrf.mxu0
      %v1119 = vadd.f32 %v339, %v1118
      %v1120 = vpop.f32.mrf.mxu0
      %1121 = vmatprep.mubr.f32.mxu0 0.0
      %1122 = vmatmul.mubr.f32.gmra.mxu0 %v487
      %v1123 = vpop.f32.mrf.mxu0
      %v1124 = vadd.f32 %v339, %v1123
      %v1125 = vpop.f32.mrf.mxu0
      %1126 = vmatprep.mubr.f32.mxu0 0.0
      %1127 = vmatmul.mubr.f32.gmra.mxu0 %v490
      %v1128 = vpop.f32.mrf.mxu0
      %v1129 = vadd.f32 %v339, %v1128
      %v1130 = vpop.f32.mrf.mxu0
      %1131 = vmatprep.mubr.f32.mxu0 0.0
      %1132 = vmatmul.mubr.f32.gmra.mxu0 %v493
      %v1133 = vpop.f32.mrf.mxu0
      %v1134 = vadd.f32 %v339, %v1133
      %v1135 = vpop.f32.mrf.mxu0
      %1136 = vmatprep.mubr.f32.mxu0 0.0
      %1137 = vmatmul.mubr.f32.gmra.mxu0 %v496
      %v1138 = vpop.f32.mrf.mxu0
      %v1139 = vadd.f32 %v339, %v1138
      %v1140 = vpop.f32.mrf.mxu0
      %1141 = vmatprep.mubr.f32.mxu0 0.0
      %1142 = vmatmul.mubr.f32.gmra.mxu0 %v499
      %v1143 = vpop.f32.mrf.mxu0
      %v1144 = vadd.f32 %v339, %v1143
      %v1145 = vpop.f32.mrf.mxu0
      %1146 = vmatprep.mubr.f32.mxu0 0.0
      %1147 = vmatmul.mubr.f32.gmra.mxu0 %v502
      %v1148 = vpop.f32.mrf.mxu0
      %v1149 = vadd.f32 %v339, %v1148
      %v1150 = vpop.f32.mrf.mxu0
      %1151 = vmatprep.mubr.f32.mxu0 0.0
      %1152 = vmatmul.mubr.f32.gmra.mxu0 %v505
      %v1153 = vpop.f32.mrf.mxu0
      %v1154 = vadd.f32 %v339, %v1153
      %v1155 = vpop.f32.mrf.mxu0
      %1156 = vmatprep.mubr.f32.mxu0 0.0
      %1157 = vmatmul.mubr.f32.gmra.mxu0 %v508
      %v1158 = vpop.f32.mrf.mxu0
      %v1159 = vadd.f32 %v339, %v1158
      %v1160 = vpop.f32.mrf.mxu0
      %1161 = vmatprep.mubr.f32.mxu0 0.0
      %1162 = vmatmul.mubr.f32.gmra.mxu0 %v511
      %v1163 = vpop.f32.mrf.mxu0
      %v1164 = vadd.f32 %v339, %v1163
      %v1165 = vpop.f32.mrf.mxu0
      %1166 = vmatprep.mubr.f32.mxu0 0.0
      %1167 = vmatmul.mubr.f32.gmra.mxu0 %v514
      %v1168 = vpop.f32.mrf.mxu0
      %v1169 = vadd.f32 %v339, %v1168
      %v1170 = vpop.f32.mrf.mxu0
      %1171 = vmatprep.mubr.f32.mxu0 0.0
      %1172 = vmatmul.mubr.f32.gmra.mxu0 %v517
      %v1173 = vpop.f32.mrf.mxu0
      %v1174 = vadd.f32 %v339, %v1173
      %v1175 = vpop.f32.mrf.mxu0
      %1176 = vmatprep.mubr.f32.mxu0 0.0
      %1177 = vmatmul.mubr.f32.gmra.mxu0 %v520
      %v1178 = vpop.f32.mrf.mxu0
      %v1179 = vadd.f32 %v339, %v1178
      %v1180 = vpop.f32.mrf.mxu0
      %1181 = vmatprep.mubr.f32.mxu0 0.0
      %1182 = vmatmul.mubr.f32.gmra.mxu0 %v523
      %v1183 = vpop.f32.mrf.mxu0
      %v1184 = vadd.f32 %v339, %v1183
      %v1185 = vpop.f32.mrf.mxu0
      %1186 = vmatprep.mubr.f32.mxu0 0.0
      %1187 = vmatmul.mubr.f32.gmra.mxu0 %v526
      %v1188 = vpop.f32.mrf.mxu0
      %v1189 = vadd.f32 %v339, %v1188
      %v1190 = vpop.f32.mrf.mxu0
      %1191 = vmatprep.mubr.f32.mxu0 0.0
      %1192 = vmatmul.mubr.f32.gmra.mxu0 %v529
      %v1193 = vpop.f32.mrf.mxu0
      %v1194 = vadd.f32 %v339, %v1193
      %v1195 = vpop.f32.mrf.mxu0
      %1196 = vmatprep.mubr.f32.mxu0 0.0
      %1197 = vmatmul.mubr.f32.gmra.mxu0 %v532
      %v1198 = vpop.f32.mrf.mxu0
      %v1199 = vadd.f32 %v339, %v1198
      %v1200 = vpop.f32.mrf.mxu0
      %1201 = vmatprep.mubr.f32.mxu0 0.0
      %1202 = vmatmul.mubr.f32.gmra.mxu0 %v535
      %v1203 = vpop.f32.mrf.mxu0
      %v1204 = vadd.f32 %v339, %v1203
      %v1205 = vpop.f32.mrf.mxu0
      %1206 = vmatprep.mubr.f32.mxu0 0.0
      %1207 = vmatmul.mubr.f32.gmra.mxu0 %v538
      %v1208 = vpop.f32.mrf.mxu0
      %v1209 = vadd.f32 %v339, %v1208
      %v1210 = vpop.f32.mrf.mxu0
      %1211 = vmatprep.mubr.f32.mxu0 0.0
      %1212 = vmatmul.mubr.f32.gmra.mxu0 %v541
      %v1213 = vpop.f32.mrf.mxu0
      %v1214 = vadd.f32 %v339, %v1213
      %v1215 = vpop.f32.mrf.mxu0
      %1216 = vmatprep.mubr.f32.mxu0 0.0
      %1217 = vmatmul.mubr.f32.gmra.mxu0 %v544
      %v1218 = vpop.f32.mrf.mxu0
      %v1219 = vadd.f32 %v339, %v1218
      %v1220 = vpop.f32.mrf.mxu0
      %1221 = vmatprep.mubr.f32.mxu0 0.0
      %1222 = vmatmul.mubr.f32.gmra.mxu0 %v547
      %v1223 = vpop.f32.mrf.mxu0
      %v1224 = vadd.f32 %v339, %v1223
      %v1225 = vpop.f32.mrf.mxu0
      %1226 = vmatprep.mubr.f32.mxu0 0.0
      %1227 = vmatmul.mubr.f32.gmra.mxu0 %v550
      %v1228 = vpop.f32.mrf.mxu0
      %v1229 = vadd.f32 %v339, %v1228
      %v1230 = vpop.f32.mrf.mxu0
      %1231 = vmatprep.mubr.f32.mxu0 0.0
      %1232 = vmatmul.mubr.f32.gmra.mxu0 %v553
      %v1233 = vpop.f32.mrf.mxu0
      %v1234 = vadd.f32 %v339, %v1233
      %v1235 = vpop.f32.mrf.mxu0
      %1236 = vmatprep.mubr.f32.mxu0 0.0
      %1237 = vmatmul.mubr.f32.gmra.mxu0 %v556
      %v1238 = vpop.f32.mrf.mxu0
      %v1239 = vadd.f32 %v339, %v1238
      %v1240 = vpop.f32.mrf.mxu0
      %1241 = vmatprep.mubr.f32.mxu0 0.0
      %1242 = vmatmul.mubr.f32.gmra.mxu0 %v559
      %v1243 = vpop.f32.mrf.mxu0
      %v1244 = vadd.f32 %v339, %v1243
      %v1245 = vpop.f32.mrf.mxu0
      %1246 = vmatprep.mubr.f32.mxu0 0.0
      %1247 = vmatmul.mubr.f32.gmra.mxu0 %v562
      %v1248 = vpop.f32.mrf.mxu0
      %v1249 = vadd.f32 %v339, %v1248
      %v1250 = vpop.f32.mrf.mxu0
      %1251 = vmatprep.mubr.f32.mxu0 0.0
      %1252 = vmatmul.mubr.f32.gmra.mxu0 %v565
      %v1253 = vpop.f32.mrf.mxu0
      %v1254 = vadd.f32 %v339, %v1253
      %v1255 = vpop.f32.mrf.mxu0
      %1256 = vmatprep.mubr.f32.mxu0 0.0
      %1257 = vmatmul.mubr.f32.gmra.mxu0 %v568
      %v1258 = vpop.f32.mrf.mxu0
      %v1259 = vadd.f32 %v339, %v1258
      %v1260 = vpop.f32.mrf.mxu0
      %1261 = vmatprep.mubr.f32.mxu0 0.0
      %1262 = vmatmul.mubr.f32.gmra.mxu0 %v571
      %v1263 = vpop.f32.mrf.mxu0
      %v1264 = vadd.f32 %v339, %v1263
      %v1265 = vpop.f32.mrf.mxu0
      %1266 = vmatprep.mubr.f32.mxu0 0.0
      %1267 = vmatmul.mubr.f32.gmra.mxu0 %v574
      %v1268 = vpop.f32.mrf.mxu0
      %v1269 = vadd.f32 %v339, %v1268
      %v1270 = vpop.f32.mrf.mxu0
      %1271 = vmatprep.mubr.f32.mxu0 0.0
      %1272 = vmatmul.mubr.f32.gmra.mxu0 %v577
      %v1273 = vpop.f32.mrf.mxu0
      %v1274 = vadd.f32 %v339, %v1273
      %v1275 = vpop.f32.mrf.mxu0
      %1276 = vmatprep.mubr.f32.mxu0 0.0
      %1277 = vmatmul.mubr.f32.gmra.mxu0 %v580
      %v1278 = vpop.f32.mrf.mxu0
      %v1279 = vadd.f32 %v339, %v1278
      %v1280 = vpop.f32.mrf.mxu0
      %1281 = vmatprep.mubr.f32.mxu0 0.0
      %1282 = vmatmul.mubr.f32.gmra.mxu0 %v583
      %v1283 = vpop.f32.mrf.mxu0
      %v1284 = vadd.f32 %v339, %v1283
      %v1285 = vpop.f32.mrf.mxu0
      %1286 = vmatprep.mubr.f32.mxu0 0.0
      %1287 = vmatmul.mubr.f32.gmra.mxu0 %v586
      %v1288 = vpop.f32.mrf.mxu0
      %v1289 = vadd.f32 %v339, %v1288
      %v1290 = vpop.f32.mrf.mxu0
      %1291 = vmatprep.mubr.f32.mxu0 0.0
      %1292 = vmatmul.mubr.f32.gmra.mxu0 %v589
      %v1293 = vpop.f32.mrf.mxu0
      %v1294 = vadd.f32 %v339, %v1293
      %v1295 = vpop.f32.mrf.mxu0
      %1296 = vmatprep.mubr.f32.mxu0 0.0
      %1297 = vmatmul.mubr.f32.gmra.mxu0 %v592
      %v1298 = vpop.f32.mrf.mxu0
      %v1299 = vadd.f32 %v339, %v1298
      %v1300 = vpop.f32.mrf.mxu0
      %1301 = vmatprep.mubr.f32.mxu0 0.0
      %1302 = vmatmul.mubr.f32.gmra.mxu0 %v595
      %v1303 = vpop.f32.mrf.mxu0
      %v1304 = vadd.f32 %v339, %v1303
      %v1305 = vpop.f32.mrf.mxu0
      %1306 = vmatprep.mubr.f32.mxu0 0.0
      %1307 = vmatmul.mubr.f32.gmra.mxu0 %v598
      %v1308 = vpop.f32.mrf.mxu0
      %v1309 = vadd.f32 %v339, %v1308
      %v1310 = vpop.f32.mrf.mxu0
      %1311 = vmatprep.mubr.f32.mxu0 0.0
      %1312 = vmatmul.mubr.f32.gmra.mxu0 %v601
      %v1313 = vpop.f32.mrf.mxu0
      %v1314 = vadd.f32 %v339, %v1313
      %v1315 = vpop.f32.mrf.mxu0
      %1316 = vmatprep.mubr.f32.mxu0 0.0
      %1317 = vmatmul.mubr.f32.gmra.mxu0 %v604
      %v1318 = vpop.f32.mrf.mxu0
      %v1319 = vadd.f32 %v339, %v1318
      %v1320 = vpop.f32.mrf.mxu0
      %1321 = vmatprep.mubr.f32.mxu0 0.0
      %1322 = vmatmul.mubr.f32.gmra.mxu0 %v607
      %v1323 = vpop.f32.mrf.mxu0
      %v1324 = vadd.f32 %v339, %v1323
      %v1325 = vpop.f32.mrf.mxu0
      %1326 = vmatprep.mubr.f32.mxu0 0.0
      %1327 = vmatmul.mubr.f32.gmra.mxu0 %v610
      %v1328 = vpop.f32.mrf.mxu0
      %v1329 = vadd.f32 %v339, %v1328
      %v1330 = vpop.f32.mrf.mxu0
      %1331 = vmatprep.mubr.f32.mxu0 0.0
      %1332 = vmatmul.mubr.f32.gmra.mxu0 %v613
      %v1333 = vpop.f32.mrf.mxu0
      %v1334 = vadd.f32 %v339, %v1333
      %v1335 = vpop.f32.mrf.mxu0
      %1336 = vmatprep.mubr.f32.mxu0 0.0
      %1337 = vmatmul.mubr.f32.gmra.mxu0 %v616
      %v1338 = vpop.f32.mrf.mxu0
      %v1339 = vadd.f32 %v339, %v1338
      %v1340 = vpop.f32.mrf.mxu0
      %1341 = vmatprep.mubr.f32.mxu0 0.0
      %1342 = vmatmul.mubr.f32.gmra.mxu0 %v619
      %v1343 = vpop.f32.mrf.mxu0
      %v1344 = vadd.f32 %v339, %v1343
      %v1345 = vpop.f32.mrf.mxu0
      %1346 = vmatprep.mubr.f32.mxu0 0.0
      %1347 = vmatmul.mubr.f32.gmra.mxu0 %v622
      %v1348 = vpop.f32.mrf.mxu0
      %v1349 = vadd.f32 %v339, %v1348
      %v1350 = vpop.f32.mrf.mxu0
      %1351 = vmatprep.mubr.f32.mxu0 0.0
      %1352 = vmatmul.mubr.f32.gmra.mxu0 %v625
      %v1353 = vpop.f32.mrf.mxu0
      %v1354 = vadd.f32 %v339, %v1353
      %v1355 = vpop.f32.mrf.mxu0
      %1356 = vmatprep.mubr.f32.mxu0 0.0
      %1357 = vmatmul.mubr.f32.gmra.mxu0 %v628
      %v1358 = vpop.f32.mrf.mxu0
      %v1359 = vadd.f32 %v339, %v1358
      %v1360 = vpop.f32.mrf.mxu0
      %1361 = vmatprep.mubr.f32.mxu0 0.0
      %1362 = vmatmul.mubr.f32.gmra.mxu0 %v631
      %v1363 = vpop.f32.mrf.mxu0
      %v1364 = vadd.f32 %v339, %v1363
      %v1365 = vpop.f32.mrf.mxu0
      %1366 = vmatprep.mubr.f32.mxu0 0.0
      %1367 = vmatmul.mubr.f32.gmra.mxu0 %v634
      %v1368 = vpop.f32.mrf.mxu0
      %v1369 = vadd.f32 %v339, %v1368
      %v1370 = vpop.f32.mrf.mxu0
      %1371 = vmatprep.mubr.f32.mxu0 0.0
      %1372 = vmatmul.mubr.f32.gmra.mxu0 %v637
      %v1373 = vpop.f32.mrf.mxu0
      %v1374 = vadd.f32 %v339, %v1373
      %v1375 = vpop.f32.mrf.mxu0
      %1376 = vmatprep.mubr.f32.mxu0 0.0
      %1377 = vmatmul.mubr.f32.gmra.mxu0 %v640
      %v1378 = vpop.f32.mrf.mxu0
      %v1379 = vadd.f32 %v339, %v1378
      %v1380 = vpop.f32.mrf.mxu0
      %1381 = vmatprep.mubr.f32.mxu0 0.0
      %1382 = vmatmul.mubr.f32.gmra.mxu0 %v643
      %v1383 = vpop.f32.mrf.mxu0
      %v1384 = vadd.f32 %v339, %v1383
      %v1385 = vpop.f32.mrf.mxu0
      %1386 = vmatprep.mubr.f32.mxu0 0.0
      %1387 = vmatmul.mubr.f32.gmra.mxu0 %v646
      %v1388 = vpop.f32.mrf.mxu0
      %v1389 = vadd.f32 %v339, %v1388
      %v1390 = vpop.f32.mrf.mxu0
      %1391 = vmatprep.mubr.f32.mxu0 0.0
      %1392 = vmatmul.mubr.f32.gmra.mxu0 %v649
      %v1393 = vpop.f32.mrf.mxu0
      %v1394 = vadd.f32 %v339, %v1393
      %v1395 = vpop.f32.mrf.mxu0
      %1396 = vmatprep.mubr.f32.mxu0 0.0
      %1397 = vmatmul.mubr.f32.gmra.mxu0 %v652
      %v1398 = vpop.f32.mrf.mxu0
      %v1399 = vadd.f32 %v339, %v1398
      %v1400 = vpop.f32.mrf.mxu0
      %1401 = vmatprep.mubr.f32.mxu0 0.0
      %1402 = vmatmul.mubr.f32.gmra.mxu0 %v655
      %v1403 = vpop.f32.mrf.mxu0
      %v1404 = vadd.f32 %v339, %v1403
      %v1405 = vpop.f32.mrf.mxu0
      %1406 = vmatprep.mubr.f32.mxu0 0.0
      %1407 = vmatmul.mubr.f32.gmra.mxu0 %v658
      %v1408 = vpop.f32.mrf.mxu0
      %v1409 = vadd.f32 %v339, %v1408
      %v1410 = vpop.f32.mrf.mxu0
      %1411 = vmatprep.mubr.f32.mxu0 0.0
      %1412 = vmatmul.mubr.f32.gmra.mxu0 %v661
      %v1413 = vpop.f32.mrf.mxu0
      %v1414 = vadd.f32 %v339, %v1413
      %v1415 = vpop.f32.mrf.mxu0
      %1416 = vmatprep.mubr.f32.mxu0 0.0
      %1417 = vmatmul.mubr.f32.gmra.mxu0 %v664
      %v1418 = vpop.f32.mrf.mxu0
      %v1419 = vadd.f32 %v339, %v1418
      %v1420 = vpop.f32.mrf.mxu0
      %1421 = vmatprep.mubr.f32.mxu0 0.0
      %1422 = vmatmul.mubr.f32.gmra.mxu0 %v667
      %v1423 = vpop.f32.mrf.mxu0
      %v1424 = vadd.f32 %v339, %v1423
      %v1425 = vpop.f32.mrf.mxu0
      %1426 = vmatprep.mubr.f32.mxu0 0.0
      %1427 = vmatmul.mubr.f32.gmra.mxu0 %v670
      %v1428 = vpop.f32.mrf.mxu0
      %v1429 = vadd.f32 %v339, %v1428
      %v1430 = vpop.f32.mrf.mxu0
      %1431 = vmatprep.mubr.f32.mxu0 0.0
      %1432 = vmatmul.mubr.f32.gmra.mxu0 %v673
      %v1433 = vpop.f32.mrf.mxu0
      %v1434 = vadd.f32 %v339, %v1433
      %v1435 = vpop.f32.mrf.mxu0
      %1436 = vmatprep.mubr.f32.mxu0 0.0
      %1437 = vmatmul.mubr.f32.gmra.mxu0 %v676
      %v1438 = vpop.f32.mrf.mxu0
      %v1439 = vadd.f32 %v339, %v1438
      %v1440 = vpop.f32.mrf.mxu0
      %1441 = vmatprep.mubr.f32.mxu0 0.0
      %1442 = vmatmul.mubr.f32.gmra.mxu0 %v679
      %v1443 = vpop.f32.mrf.mxu0
      %v1444 = vadd.f32 %v339, %v1443
      %v1445 = vpop.f32.mrf.mxu0
      %1446 = vmatprep.mubr.f32.mxu0 0.0
      %1447 = vmatmul.mubr.f32.gmra.mxu0 %v682
      %v1448 = vpop.f32.mrf.mxu0
      %v1449 = vadd.f32 %v339, %v1448
      %v1450 = vpop.f32.mrf.mxu0
      %1451 = vmatprep.mubr.f32.mxu0 0.0
      %1452 = vmatmul.mubr.f32.gmra.mxu0 %v685
      %v1453 = vpop.f32.mrf.mxu0
      %v1454 = vadd.f32 %v339, %v1453
      %v1455 = vpop.f32.mrf.mxu0
      %1456 = vmatprep.mubr.f32.mxu0 0.0
      %1457 = vmatmul.mubr.f32.gmra.mxu0 %v688
      %v1458 = vpop.f32.mrf.mxu0
      %v1459 = vadd.f32 %v339, %v1458
      %v1460 = vpop.f32.mrf.mxu0
      %1461 = vmatprep.mubr.f32.mxu0 0.0
      %1462 = vmatmul.mubr.f32.gmra.mxu0 %v691
      %v1463 = vpop.f32.mrf.mxu0
      %v1464 = vadd.f32 %v339, %v1463
      %v1465 = vpop.f32.mrf.mxu0
      %1466 = vmatprep.mubr.f32.mxu0 0.0
      %1467 = vmatmul.mubr.f32.gmra.mxu0 %v694
      %v1468 = vpop.f32.mrf.mxu0
      %v1469 = vadd.f32 %v339, %v1468
      %v1470 = vpop.f32.mrf.mxu0
      %1471 = vmatprep.mubr.f32.mxu0 0.0
      %1472 = vmatmul.mubr.f32.gmra.mxu0 %v697
      %v1473 = vpop.f32.mrf.mxu0
      %v1474 = vadd.f32 %v339, %v1473
      %v1475 = vpop.f32.mrf.mxu0
      %1476 = vmatprep.mubr.f32.mxu0 0.0
      %1477 = vmatmul.mubr.f32.gmra.mxu0 %v700
      %v1478 = vpop.f32.mrf.mxu0
      %v1479 = vadd.f32 %v339, %v1478
      %v1480 = vpop.f32.mrf.mxu0
      %1481 = vmatprep.mubr.f32.mxu0 0.0
      %1482 = vmatmul.mubr.f32.gmra.mxu0 %v703
      %v1483 = vpop.f32.mrf.mxu0
      %v1484 = vadd.f32 %v339, %v1483
      %v1485 = vpop.f32.mrf.mxu0
      %1486 = vmatprep.mubr.f32.mxu0 0.0
      %1487 = vmatmul.mubr.f32.gmra.mxu0 %v706
      %v1488 = vpop.f32.mrf.mxu0
      %v1489 = vadd.f32 %v339, %v1488
      %v1490 = vpop.f32.mrf.mxu0
      %1491 = vmatprep.mubr.f32.mxu0 0.0
      %1492 = vmatmul.mubr.f32.gmra.mxu0 %v709
      %v1493 = vpop.f32.mrf.mxu0
      %v1494 = vadd.f32 %v339, %v1493
      %v1495 = vpop.f32.mrf.mxu0
      %1496 = vmatprep.mubr.f32.mxu0 0.0
      %1497 = vmatmul.mubr.f32.gmra.mxu0 %v712
      %v1498 = vpop.f32.mrf.mxu0
      %v1499 = vadd.f32 %v339, %v1498
      %v1500 = vpop.f32.mrf.mxu0
      %1501 = vmatprep.mubr.f32.mxu0 0.0
      %1502 = vmatmul.mubr.f32.gmra.mxu0 %v715
      %v1503 = vpop.f32.mrf.mxu0
      %v1504 = vadd.f32 %v339, %v1503
      %v1505 = vpop.f32.mrf.mxu0
      %1506 = vmatprep.mubr.f32.mxu0 0.0
      %1507 = vmatmul.mubr.f32.gmra.mxu0 %v718
      %v1508 = vpop.f32.mrf.mxu0
      %v1509 = vadd.f32 %v339, %v1508
      %v1510 = vpop.f32.mrf.mxu0
      %1511 = vmatprep.mubr.f32.mxu0 0.0
      %1512 = vmatmul.mubr.f32.gmra.mxu0 %v721
      %v1513 = vpop.f32.mrf.mxu0
      %v1514 = vadd.f32 %v339, %v1513
      %v1515 = vpop.f32.mrf.mxu0
      %1516 = vmatprep.mubr.f32.mxu0 0.0
      %1517 = vmatmul.mubr.f32.gmra.mxu0 %v724
      %v1518 = vpop.f32.mrf.mxu0
      %v1519 = vadd.f32 %v339, %v1518
      %v1520 = vpop.f32.mrf.mxu0
      %1521 = vmatprep.mubr.f32.mxu0 0.0
      %1522 = vmatmul.mubr.f32.gmra.mxu0 %v727
      %v1523 = vpop.f32.mrf.mxu0
      %v1524 = vadd.f32 %v339, %v1523
      %v1525 = vpop.f32.mrf.mxu0
      %1526 = vmatprep.mubr.f32.mxu0 0.0
      %1527 = vmatmul.mubr.f32.gmra.mxu0 %v730
      %v1528 = vpop.f32.mrf.mxu0
      %v1529 = vadd.f32 %v339, %v1528
      %v1530 = vpop.f32.mrf.mxu0
      %1531 = vmatprep.mubr.f32.mxu0 0.0
      %1532 = vmatmul.mubr.f32.gmra.mxu0 %v733
      %v1533 = vpop.f32.mrf.mxu0
      %v1534 = vadd.f32 %v339, %v1533
      %v1535 = vpop.f32.mrf.mxu0
      %1536 = vmatprep.mubr.f32.mxu0 0.0
      %1537 = vmatmul.mubr.f32.gmra.mxu0 %v736
      %v1538 = vpop.f32.mrf.mxu0
      %v1539 = vadd.f32 %v339, %v1538
      %v1540 = vpop.f32.mrf.mxu0
      %1541 = vmatprep.mubr.f32.mxu0 0.0
      %1542 = vmatmul.mubr.f32.gmra.mxu0 %v739
      %v1543 = vpop.f32.mrf.mxu0
      %v1544 = vadd.f32 %v339, %v1543
      %v1545 = vpop.f32.mrf.mxu0
      %1546 = vmatprep.mubr.f32.mxu0 0.0
      %1547 = vmatmul.mubr.f32.gmra.mxu0 %v742
      %v1548 = vpop.f32.mrf.mxu0
      %v1549 = vadd.f32 %v339, %v1548
      %v1550 = vpop.f32.mrf.mxu0
      %1551 = vmatprep.mubr.f32.mxu0 0.0
      %1552 = vmatmul.mubr.f32.gmra.mxu0 %v745
      %v1553 = vpop.f32.mrf.mxu0
      %v1554 = vadd.f32 %v339, %v1553
      %v1555 = vpop.f32.mrf.mxu0
      %1556 = vmatprep.mubr.f32.mxu0 0.0
      %1557 = vmatmul.mubr.f32.gmra.mxu0 %v748
      %v1558 = vpop.f32.mrf.mxu0
      %v1559 = vadd.f32 %v339, %v1558
      %v1560 = vpop.f32.mrf.mxu0
      %1561 = vmatprep.mubr.f32.mxu0 0.0
      %1562 = vmatmul.mubr.f32.gmra.mxu0 %v751
      %v1563 = vpop.f32.mrf.mxu0
      %v1564 = vadd.f32 %v339, %v1563
      %v1565 = vpop.f32.mrf.mxu0
      %1566 = vmatprep.mubr.f32.mxu0 0.0
      %1567 = vmatmul.mubr.f32.gmra.mxu0 %v754
      %v1568 = vpop.f32.mrf.mxu0
      %v1569 = vadd.f32 %v339, %v1568
      %v1570 = vpop.f32.mrf.mxu0
      %1571 = vmatprep.mubr.f32.mxu0 0.0
      %1572 = vmatmul.mubr.f32.gmra.mxu0 %v757
      %v1573 = vpop.f32.mrf.mxu0
      %v1574 = vadd.f32 %v339, %v1573
      %v1575 = vpop.f32.mrf.mxu0
      %1576 = vmatprep.mubr.f32.mxu0 0.0
      %1577 = vmatmul.mubr.f32.gmra.mxu0 %v760
      %v1578 = vpop.f32.mrf.mxu0
      %v1579 = vadd.f32 %v339, %v1578
      %v1580 = vpop.f32.mrf.mxu0
      %1581 = vmatprep.mubr.f32.mxu0 0.0
      %1582 = vmatmul.mubr.f32.gmra.mxu0 %v763
      %v1583 = vpop.f32.mrf.mxu0
      %v1584 = vadd.f32 %v339, %v1583
      %v1585 = vpop.f32.mrf.mxu0
      %1586 = vmatprep.mubr.f32.mxu0 0.0
      %1587 = vmatmul.mubr.f32.gmra.mxu0 %v766
      %v1588 = vpop.f32.mrf.mxu0
      %v1589 = vadd.f32 %v339, %v1588
      %v1590 = vpop.f32.mrf.mxu0
      %1591 = vmatprep.mubr.f32.mxu0 0.0
      %1592 = vmatmul.mubr.f32.gmra.mxu0 %v769
      %v1593 = vpop.f32.mrf.mxu0
      %v1594 = vadd.f32 %v339, %v1593
      %v1595 = vpop.f32.mrf.mxu0
      %1596 = vmatprep.mubr.f32.mxu0 0.0
      %1597 = vmatmul.mubr.f32.gmra.mxu0 %v772
      %v1598 = vpop.f32.mrf.mxu0
      %v1599 = vadd.f32 %v339, %v1598
      %v1600 = vpop.f32.mrf.mxu0
      %1601 = vmatprep.mubr.f32.mxu0 0.0
      %1602 = vmatmul.mubr.f32.gmra.mxu0 %v775
      %v1603 = vpop.f32.mrf.mxu0
      %v1604 = vadd.f32 %v339, %v1603
      %v1605 = vpop.f32.mrf.mxu0
      %1606 = vmatprep.mubr.f32.mxu0 0.0
      %1607 = vmatmul.mubr.f32.gmra.mxu0 %v778
      %v1608 = vpop.f32.mrf.mxu0
      %v1609 = vadd.f32 %v339, %v1608
      %v1610 = vpop.f32.mrf.mxu0
      %1611 = vmatprep.mubr.f32.mxu0 0.0
      %1612 = vmatmul.mubr.f32.gmra.mxu0 %v781
      %v1613 = vpop.f32.mrf.mxu0
      %v1614 = vadd.f32 %v339, %v1613
      %v1615 = vpop.f32.mrf.mxu0
      %1616 = vmatprep.mubr.f32.mxu0 0.0
      %1617 = vmatmul.mubr.f32.gmra.mxu0 %v784
      %v1618 = vpop.f32.mrf.mxu0
      %v1619 = vadd.f32 %v339, %v1618
      %v1620 = vpop.f32.mrf.mxu0
      %1621 = vmatprep.mubr.f32.mxu0 0.0
      %1622 = vmatmul.mubr.f32.gmra.mxu0 %v787
      %v1623 = vpop.f32.mrf.mxu0
      %v1624 = vadd.f32 %v339, %v1623
      %v1625 = vpop.f32.mrf.mxu0
      %1626 = vmatprep.mubr.f32.mxu0 0.0
      %1627 = vmatmul.mubr.f32.gmra.mxu0 %v790
      %v1628 = vpop.f32.mrf.mxu0
      %v1629 = vadd.f32 %v339, %v1628
      %v1630 = vpop.f32.mrf.mxu0
      %1631 = vmatprep.mubr.f32.mxu0 0.0
      %1632 = vmatmul.mubr.f32.gmra.mxu0 %v793
      %v1633 = vpop.f32.mrf.mxu0
      %v1634 = vadd.f32 %v339, %v1633
      %v1635 = vpop.f32.mrf.mxu0
      %1636 = vmatprep.mubr.f32.mxu0 0.0
      %1637 = vmatmul.mubr.f32.gmra.mxu0 %v796
      %v1638 = vpop.f32.mrf.mxu0
      %v1639 = vadd.f32 %v339, %v1638
      %v1640 = vpop.f32.mrf.mxu0
      %1641 = vmatprep.mubr.f32.mxu0 0.0
      %1642 = vmatmul.mubr.f32.gmra.mxu0 %v799
      %v1643 = vpop.f32.mrf.mxu0
      %v1644 = vadd.f32 %v339, %v1643
      %v1645 = vpop.f32.mrf.mxu0
      %1646 = vmatprep.mubr.f32.mxu0 0.0
      %1647 = vmatmul.mubr.f32.gmra.mxu0 %v802
      %v1648 = vpop.f32.mrf.mxu0
      %v1649 = vadd.f32 %v339, %v1648
      %v1650 = vpop.f32.mrf.mxu0
      %1651 = vmatprep.mubr.f32.mxu0 0.0
      %1652 = vmatmul.mubr.f32.gmra.mxu0 %v805
      %v1653 = vpop.f32.mrf.mxu0
      %v1654 = vadd.f32 %v339, %v1653
      %v1655 = vpop.f32.mrf.mxu0
      %1656 = vmatprep.mubr.f32.mxu0 0.0
      %1657 = vmatmul.mubr.f32.gmra.mxu0 %v808
      %v1658 = vpop.f32.mrf.mxu0
      %v1659 = vadd.f32 %v339, %v1658
      %v1660 = vpop.f32.mrf.mxu0
      %1661 = vmatprep.mubr.f32.mxu0 0.0
      %1662 = vmatmul.mubr.f32.gmra.mxu0 %v811
      %v1663 = vpop.f32.mrf.mxu0
      %v1664 = vadd.f32 %v339, %v1663
      %v1665 = vpop.f32.mrf.mxu0
      %1666 = vdwg.mxu0
      %v1667 = vmul.f32 %v884, 0.5
      %v1668 = vmul.f32 %v889, 0.5
      %v1669 = vmul.f32 %v894, 0.5
      %v1670 = vmul.f32 %v899, 0.5
      %v1671 = vmul.f32 %v904, 0.5
      %v1672 = vmul.f32 %v909, 0.5
      %v1673 = vmul.f32 %v914, 0.5
      %v1674 = vmul.f32 %v919, 0.5
      %v1675 = vmul.f32 %v924, 0.5
      %v1676 = vmul.f32 %v929, 0.5
      %v1677 = vmul.f32 %v934, 0.5
      %v1678 = vmul.f32 %v939, 0.5
      %v1679 = vmul.f32 %v944, 0.5
      %v1680 = vmul.f32 %v949, 0.5
      %v1681 = vmul.f32 %v954, 0.5
      %v1682 = vmul.f32 %v959, 0.5
      %v1683 = vmul.f32 %v964, 0.5
      %v1684 = vmul.f32 %v969, 0.5
      %v1685 = vmul.f32 %v974, 0.5
      %v1686 = vmul.f32 %v979, 0.5
      %v1687 = vmul.f32 %v984, 0.5
      %v1688 = vmul.f32 %v989, 0.5
      %v1689 = vmul.f32 %v994, 0.5
      %v1690 = vmul.f32 %v999, 0.5
      %v1691 = vmul.f32 %v1004, 0.5
      %v1692 = vmul.f32 %v1009, 0.5
      %v1693 = vmul.f32 %v1014, 0.5
      %v1694 = vmul.f32 %v1019, 0.5
      %v1695 = vmul.f32 %v1024, 0.5
      %v1696 = vmul.f32 %v1029, 0.5
      %v1697 = vmul.f32 %v1034, 0.5
      %v1698 = vmul.f32 %v1039, 0.5
      %v1699 = vmul.f32 %v1044, 0.5
      %v1700 = vmul.f32 %v1049, 0.5
      %v1701 = vmul.f32 %v1054, 0.5
      %v1702 = vmul.f32 %v1059, 0.5
      %v1703 = vmul.f32 %v1064, 0.5
      %v1704 = vmul.f32 %v1069, 0.5
      %v1705 = vmul.f32 %v1074, 0.5
      %v1706 = vmul.f32 %v1079, 0.5
      %v1707 = vmul.f32 %v1084, 0.5
      %v1708 = vmul.f32 %v1089, 0.5
      %v1709 = vmul.f32 %v1094, 0.5
      %v1710 = vmul.f32 %v1099, 0.5
      %v1711 = vmul.f32 %v1104, 0.5
      %v1712 = vmul.f32 %v1109, 0.5
      %v1713 = vmul.f32 %v1114, 0.5
      %v1714 = vmul.f32 %v1119, 0.5
      %v1715 = vmul.f32 %v1124, 0.5
      %v1716 = vmul.f32 %v1129, 0.5
      %v1717 = vmul.f32 %v1134, 0.5
      %v1718 = vmul.f32 %v1139, 0.5
      %v1719 = vmul.f32 %v1144, 0.5
      %v1720 = vmul.f32 %v1149, 0.5
      %v1721 = vmul.f32 %v1154, 0.5
      %v1722 = vmul.f32 %v1159, 0.5
      %v1723 = vmul.f32 %v1164, 0.5
      %v1724 = vmul.f32 %v1169, 0.5
      %v1725 = vmul.f32 %v1174, 0.5
      %v1726 = vmul.f32 %v1179, 0.5
      %v1727 = vmul.f32 %v1184, 0.5
      %v1728 = vmul.f32 %v1189, 0.5
      %v1729 = vmul.f32 %v1194, 0.5
      %v1730 = vmul.f32 %v1199, 0.5
      %v1731 = vmul.f32 %v1204, 0.5
      %v1732 = vmul.f32 %v1209, 0.5
      %v1733 = vmul.f32 %v1214, 0.5
      %v1734 = vmul.f32 %v1219, 0.5
      %v1735 = vmul.f32 %v1224, 0.5
      %v1736 = vmul.f32 %v1229, 0.5
      %v1737 = vmul.f32 %v1234, 0.5
      %v1738 = vmul.f32 %v1239, 0.5
      %v1739 = vmul.f32 %v1244, 0.5
      %v1740 = vmul.f32 %v1249, 0.5
      %v1741 = vmul.f32 %v1254, 0.5
      %v1742 = vmul.f32 %v1259, 0.5
      %v1743 = vmul.f32 %v1264, 0.5
      %v1744 = vmul.f32 %v1269, 0.5
      %v1745 = vmul.f32 %v1274, 0.5
      %v1746 = vmul.f32 %v1279, 0.5
      %v1747 = vmul.f32 %v1284, 0.5
      %v1748 = vmul.f32 %v1289, 0.5
      %v1749 = vmul.f32 %v1294, 0.5
      %v1750 = vmul.f32 %v1299, 0.5
      %v1751 = vmul.f32 %v1304, 0.5
      %v1752 = vmul.f32 %v1309, 0.5
      %v1753 = vmul.f32 %v1314, 0.5
      %v1754 = vmul.f32 %v1319, 0.5
      %v1755 = vmul.f32 %v1324, 0.5
      %v1756 = vmul.f32 %v1329, 0.5
      %v1757 = vmul.f32 %v1334, 0.5
      %v1758 = vmul.f32 %v1339, 0.5
      %v1759 = vmul.f32 %v1344, 0.5
      %v1760 = vmul.f32 %v1349, 0.5
      %v1761 = vmul.f32 %v1354, 0.5
      %v1762 = vmul.f32 %v1359, 0.5
      %v1763 = vmul.f32 %v1364, 0.5
      %v1764 = vmul.f32 %v1369, 0.5
      %v1765 = vmul.f32 %v1374, 0.5
      %v1766 = vmul.f32 %v1379, 0.5
      %v1767 = vmul.f32 %v1384, 0.5
      %v1768 = vmul.f32 %v1389, 0.5
      %v1769 = vmul.f32 %v1394, 0.5
      %v1770 = vmul.f32 %v1399, 0.5
      %v1771 = vmul.f32 %v1404, 0.5
      %v1772 = vmul.f32 %v1409, 0.5
      %v1773 = vmul.f32 %v1414, 0.5
      %v1774 = vmul.f32 %v1419, 0.5
      %v1775 = vmul.f32 %v1424, 0.5
      %v1776 = vmul.f32 %v1429, 0.5
      %v1777 = vmul.f32 %v1434, 0.5
      %v1778 = vmul.f32 %v1439, 0.5
      %v1779 = vmul.f32 %v1444, 0.5
      %v1780 = vmul.f32 %v1449, 0.5
      %v1781 = vmul.f32 %v1454, 0.5
      %v1782 = vmul.f32 %v1459, 0.5
      %v1783 = vmul.f32 %v1464, 0.5
      %v1784 = vmul.f32 %v1469, 0.5
      %v1785 = vmul.f32 %v1474, 0.5
      %v1786 = vmul.f32 %v1479, 0.5
      %v1787 = vmul.f32 %v1484, 0.5
      %v1788 = vmul.f32 %v1489, 0.5
      %v1789 = vmul.f32 %v1494, 0.5
      %v1790 = vmul.f32 %v1499, 0.5
      %v1791 = vmul.f32 %v1504, 0.5
      %v1792 = vmul.f32 %v1509, 0.5
      %v1793 = vmul.f32 %v1514, 0.5
      %v1794 = vmul.f32 %v1519, 0.5
      %v1795 = vmul.f32 %v1524, 0.5
      %v1796 = vmul.f32 %v1529, 0.5
      %v1797 = vmul.f32 %v1534, 0.5
      %v1798 = vmul.f32 %v1539, 0.5
      %v1799 = vmul.f32 %v1544, 0.5
      %v1800 = vmul.f32 %v1549, 0.5
      %v1801 = vmul.f32 %v1554, 0.5
      %v1802 = vmul.f32 %v1559, 0.5
      %v1803 = vmul.f32 %v1564, 0.5
      %v1804 = vmul.f32 %v1569, 0.5
      %v1805 = vmul.f32 %v1574, 0.5
      %v1806 = vmul.f32 %v1579, 0.5
      %v1807 = vmul.f32 %v1584, 0.5
      %v1808 = vmul.f32 %v1589, 0.5
      %v1809 = vmul.f32 %v1594, 0.5
      %v1810 = vmul.f32 %v1599, 0.5
      %v1811 = vmul.f32 %v1604, 0.5
      %v1812 = vmul.f32 %v1609, 0.5
      %v1813 = vmul.f32 %v1614, 0.5
      %v1814 = vmul.f32 %v1619, 0.5
      %v1815 = vmul.f32 %v1624, 0.5
      %v1816 = vmul.f32 %v1629, 0.5
      %v1817 = vmul.f32 %v1634, 0.5
      %v1818 = vmul.f32 %v1639, 0.5
      %v1819 = vmul.f32 %v1644, 0.5
      %v1820 = vmul.f32 %v1649, 0.5
      %v1821 = vmul.f32 %v1654, 0.5
      %v1822 = vmul.f32 %v1659, 0.5
      %v1823 = vmul.f32 %v1664, 0.5
      %v1824 = vmul.f32 %v884, 0.70710677
      %v1825 = vmul.f32 %v889, 0.70710677
      %v1826 = vmul.f32 %v894, 0.70710677
      %v1827 = vmul.f32 %v899, 0.70710677
      %v1828 = vmul.f32 %v904, 0.70710677
      %v1829 = vmul.f32 %v909, 0.70710677
      %v1830 = vmul.f32 %v914, 0.70710677
      %v1831 = vmul.f32 %v919, 0.70710677
      %v1832 = vmul.f32 %v924, 0.70710677
      %v1833 = vmul.f32 %v929, 0.70710677
      %v1834 = vmul.f32 %v934, 0.70710677
      %v1835 = vmul.f32 %v939, 0.70710677
      %v1836 = vmul.f32 %v944, 0.70710677
      %v1837 = vmul.f32 %v949, 0.70710677
      %v1838 = vmul.f32 %v954, 0.70710677
      %v1839 = vmul.f32 %v959, 0.70710677
      %v1840 = vmul.f32 %v964, 0.70710677
      %v1841 = vmul.f32 %v969, 0.70710677
      %v1842 = vmul.f32 %v974, 0.70710677
      %v1843 = vmul.f32 %v979, 0.70710677
      %v1844 = vmul.f32 %v984, 0.70710677
      %v1845 = vmul.f32 %v989, 0.70710677
      %v1846 = vmul.f32 %v994, 0.70710677
      %v1847 = vmul.f32 %v999, 0.70710677
      %v1848 = vmul.f32 %v1004, 0.70710677
      %v1849 = vmul.f32 %v1009, 0.70710677
      %v1850 = vmul.f32 %v1014, 0.70710677
      %v1851 = vmul.f32 %v1019, 0.70710677
      %v1852 = vmul.f32 %v1024, 0.70710677
      %v1853 = vmul.f32 %v1029, 0.70710677
      %v1854 = vmul.f32 %v1034, 0.70710677
      %v1855 = vmul.f32 %v1039, 0.70710677
      %v1856 = vmul.f32 %v1044, 0.70710677
      %v1857 = vmul.f32 %v1049, 0.70710677
      %v1858 = vmul.f32 %v1054, 0.70710677
      %v1859 = vmul.f32 %v1059, 0.70710677
      %v1860 = vmul.f32 %v1064, 0.70710677
      %v1861 = vmul.f32 %v1069, 0.70710677
      %v1862 = vmul.f32 %v1074, 0.70710677
      %v1863 = vmul.f32 %v1079, 0.70710677
      %v1864 = vmul.f32 %v1084, 0.70710677
      %v1865 = vmul.f32 %v1089, 0.70710677
      %v1866 = vmul.f32 %v1094, 0.70710677
      %v1867 = vmul.f32 %v1099, 0.70710677
      %v1868 = vmul.f32 %v1104, 0.70710677
      %v1869 = vmul.f32 %v1109, 0.70710677
      %v1870 = vmul.f32 %v1114, 0.70710677
      %v1871 = vmul.f32 %v1119, 0.70710677
      %v1872 = vmul.f32 %v1124, 0.70710677
      %v1873 = vmul.f32 %v1129, 0.70710677
      %v1874 = vmul.f32 %v1134, 0.70710677
      %v1875 = vmul.f32 %v1139, 0.70710677
      %v1876 = vmul.f32 %v1144, 0.70710677
      %v1877 = vmul.f32 %v1149, 0.70710677
      %v1878 = vmul.f32 %v1154, 0.70710677
      %v1879 = vmul.f32 %v1159, 0.70710677
      %v1880 = vmul.f32 %v1164, 0.70710677
      %v1881 = vmul.f32 %v1169, 0.70710677
      %v1882 = vmul.f32 %v1174, 0.70710677
      %v1883 = vmul.f32 %v1179, 0.70710677
      %v1884 = vmul.f32 %v1184, 0.70710677
      %v1885 = vmul.f32 %v1189, 0.70710677
      %v1886 = vmul.f32 %v1194, 0.70710677
      %v1887 = vmul.f32 %v1199, 0.70710677
      %v1888 = vmul.f32 %v1204, 0.70710677
      %v1889 = vmul.f32 %v1209, 0.70710677
      %v1890 = vmul.f32 %v1214, 0.70710677
      %v1891 = vmul.f32 %v1219, 0.70710677
      %v1892 = vmul.f32 %v1224, 0.70710677
      %v1893 = vmul.f32 %v1229, 0.70710677
      %v1894 = vmul.f32 %v1234, 0.70710677
      %v1895 = vmul.f32 %v1239, 0.70710677
      %v1896 = vmul.f32 %v1244, 0.70710677
      %v1897 = vmul.f32 %v1249, 0.70710677
      %v1898 = vmul.f32 %v1254, 0.70710677
      %v1899 = vmul.f32 %v1259, 0.70710677
      %v1900 = vmul.f32 %v1264, 0.70710677
      %v1901 = vmul.f32 %v1269, 0.70710677
      %v1902 = vmul.f32 %v1274, 0.70710677
      %v1903 = vmul.f32 %v1279, 0.70710677
      %v1904 = vmul.f32 %v1284, 0.70710677
      %v1905 = vmul.f32 %v1289, 0.70710677
      %v1906 = vmul.f32 %v1294, 0.70710677
      %v1907 = vmul.f32 %v1299, 0.70710677
      %v1908 = vmul.f32 %v1304, 0.70710677
      %v1909 = vmul.f32 %v1309, 0.70710677
      %v1910 = vmul.f32 %v1314, 0.70710677
      %v1911 = vmul.f32 %v1319, 0.70710677
      %v1912 = vmul.f32 %v1324, 0.70710677
      %v1913 = vmul.f32 %v1329, 0.70710677
      %v1914 = vmul.f32 %v1334, 0.70710677
      %v1915 = vmul.f32 %v1339, 0.70710677
      %v1916 = vmul.f32 %v1344, 0.70710677
      %v1917 = vmul.f32 %v1349, 0.70710677
      %v1918 = vmul.f32 %v1354, 0.70710677
      %v1919 = vmul.f32 %v1359, 0.70710677
      %v1920 = vmul.f32 %v1364, 0.70710677
      %v1921 = vmul.f32 %v1369, 0.70710677
      %v1922 = vmul.f32 %v1374, 0.70710677
      %v1923 = vmul.f32 %v1379, 0.70710677
      %v1924 = vmul.f32 %v1384, 0.70710677
      %v1925 = vmul.f32 %v1389, 0.70710677
      %v1926 = vmul.f32 %v1394, 0.70710677
      %v1927 = vmul.f32 %v1399, 0.70710677
      %v1928 = vmul.f32 %v1404, 0.70710677
      %v1929 = vmul.f32 %v1409, 0.70710677
      %v1930 = vmul.f32 %v1414, 0.70710677
      %v1931 = vmul.f32 %v1419, 0.70710677
      %v1932 = vmul.f32 %v1424, 0.70710677
      %v1933 = vmul.f32 %v1429, 0.70710677
      %v1934 = vmul.f32 %v1434, 0.70710677
      %v1935 = vmul.f32 %v1439, 0.70710677
      %v1936 = vmul.f32 %v1444, 0.70710677
      %v1937 = vmul.f32 %v1449, 0.70710677
      %v1938 = vmul.f32 %v1454, 0.70710677
      %v1939 = vmul.f32 %v1459, 0.70710677
      %v1940 = vmul.f32 %v1464, 0.70710677
      %v1941 = vmul.f32 %v1469, 0.70710677
      %v1942 = vmul.f32 %v1474, 0.70710677
      %v1943 = vmul.f32 %v1479, 0.70710677
      %v1944 = vmul.f32 %v1484, 0.70710677
      %v1945 = vmul.f32 %v1489, 0.70710677
      %v1946 = vmul.f32 %v1494, 0.70710677
      %v1947 = vmul.f32 %v1499, 0.70710677
      %v1948 = vmul.f32 %v1504, 0.70710677
      %v1949 = vmul.f32 %v1509, 0.70710677
      %v1950 = vmul.f32 %v1514, 0.70710677
      %v1951 = vmul.f32 %v1519, 0.70710677
      %v1952 = vmul.f32 %v1524, 0.70710677
      %v1953 = vmul.f32 %v1529, 0.70710677
      %v1954 = vmul.f32 %v1534, 0.70710677
      %v1955 = vmul.f32 %v1539, 0.70710677
      %v1956 = vmul.f32 %v1544, 0.70710677
      %v1957 = vmul.f32 %v1549, 0.70710677
      %v1958 = vmul.f32 %v1554, 0.70710677
      %v1959 = vmul.f32 %v1559, 0.70710677
      %v1960 = vmul.f32 %v1564, 0.70710677
      %v1961 = vmul.f32 %v1569, 0.70710677
      %v1962 = vmul.f32 %v1574, 0.70710677
      %v1963 = vmul.f32 %v1579, 0.70710677
      %v1964 = vmul.f32 %v1584, 0.70710677
      %v1965 = vmul.f32 %v1589, 0.70710677
      %v1966 = vmul.f32 %v1594, 0.70710677
      %v1967 = vmul.f32 %v1599, 0.70710677
      %v1968 = vmul.f32 %v1604, 0.70710677
      %v1969 = vmul.f32 %v1609, 0.70710677
      %v1970 = vmul.f32 %v1614, 0.70710677
      %v1971 = vmul.f32 %v1619, 0.70710677
      %v1972 = vmul.f32 %v1624, 0.70710677
      %v1973 = vmul.f32 %v1629, 0.70710677
      %v1974 = vmul.f32 %v1634, 0.70710677
      %v1975 = vmul.f32 %v1639, 0.70710677
      %v1976 = vmul.f32 %v1644, 0.70710677
      %v1977 = vmul.f32 %v1649, 0.70710677
      %v1978 = vmul.f32 %v1654, 0.70710677
      %v1979 = vmul.f32 %v1659, 0.70710677
      %v1980 = vmul.f32 %v1664, 0.70710677
      %v1981 = verf.f32.pop %v1824
      %v1982 = verf.f32.pop %v1825
      %v1983 = verf.f32.pop %v1826
      %v1984 = verf.f32.pop %v1827
      %v1985 = verf.f32.pop %v1828
      %v1986 = verf.f32.pop %v1829
      %v1987 = verf.f32.pop %v1830
      %v1988 = verf.f32.pop %v1831
      %v1989 = verf.f32.pop %v1832
      %v1990 = verf.f32.pop %v1833
      %v1991 = verf.f32.pop %v1834
      %v1992 = verf.f32.pop %v1835
      %v1993 = verf.f32.pop %v1836
      %v1994 = verf.f32.pop %v1837
      %v1995 = verf.f32.pop %v1838
      %v1996 = verf.f32.pop %v1839
      %v1997 = verf.f32.pop %v1840
      %v1998 = verf.f32.pop %v1841
      %v1999 = verf.f32.pop %v1842
      %v2000 = verf.f32.pop %v1843
      %v2001 = verf.f32.pop %v1844
      %v2002 = verf.f32.pop %v1845
      %v2003 = verf.f32.pop %v1846
      %v2004 = verf.f32.pop %v1847
      %v2005 = verf.f32.pop %v1848
      %v2006 = verf.f32.pop %v1849
      %v2007 = verf.f32.pop %v1850
      %v2008 = verf.f32.pop %v1851
      %v2009 = verf.f32.pop %v1852
      %v2010 = verf.f32.pop %v1853
      %v2011 = verf.f32.pop %v1854
      %v2012 = verf.f32.pop %v1855
      %v2013 = verf.f32.pop %v1856
      %v2014 = verf.f32.pop %v1857
      %v2015 = verf.f32.pop %v1858
      %v2016 = verf.f32.pop %v1859
      %v2017 = verf.f32.pop %v1860
      %v2018 = verf.f32.pop %v1861
      %v2019 = verf.f32.pop %v1862
      %v2020 = verf.f32.pop %v1863
      %v2021 = verf.f32.pop %v1864
      %v2022 = verf.f32.pop %v1865
      %v2023 = verf.f32.pop %v1866
      %v2024 = verf.f32.pop %v1867
      %v2025 = verf.f32.pop %v1868
      %v2026 = verf.f32.pop %v1869
      %v2027 = verf.f32.pop %v1870
      %v2028 = verf.f32.pop %v1871
      %v2029 = verf.f32.pop %v1872
      %v2030 = verf.f32.pop %v1873
      %v2031 = verf.f32.pop %v1874
      %v2032 = verf.f32.pop %v1875
      %v2033 = verf.f32.pop %v1876
      %v2034 = verf.f32.pop %v1877
      %v2035 = verf.f32.pop %v1878
      %v2036 = verf.f32.pop %v1879
      %v2037 = verf.f32.pop %v1880
      %v2038 = verf.f32.pop %v1881
      %v2039 = verf.f32.pop %v1882
      %v2040 = verf.f32.pop %v1883
      %v2041 = verf.f32.pop %v1884
      %v2042 = verf.f32.pop %v1885
      %v2043 = verf.f32.pop %v1886
      %v2044 = verf.f32.pop %v1887
      %v2045 = verf.f32.pop %v1888
      %v2046 = verf.f32.pop %v1889
      %v2047 = verf.f32.pop %v1890
      %v2048 = verf.f32.pop %v1891
      %v2049 = verf.f32.pop %v1892
      %v2050 = verf.f32.pop %v1893
      %v2051 = verf.f32.pop %v1894
      %v2052 = verf.f32.pop %v1895
      %v2053 = verf.f32.pop %v1896
      %v2054 = verf.f32.pop %v1897
      %v2055 = verf.f32.pop %v1898
      %v2056 = verf.f32.pop %v1899
      %v2057 = verf.f32.pop %v1900
      %v2058 = verf.f32.pop %v1901
      %v2059 = verf.f32.pop %v1902
      %v2060 = verf.f32.pop %v1903
      %v2061 = verf.f32.pop %v1904
      %v2062 = verf.f32.pop %v1905
      %v2063 = verf.f32.pop %v1906
      %v2064 = verf.f32.pop %v1907
      %v2065 = verf.f32.pop %v1908
      %v2066 = verf.f32.pop %v1909
      %v2067 = verf.f32.pop %v1910
      %v2068 = verf.f32.pop %v1911
      %v2069 = verf.f32.pop %v1912
      %v2070 = verf.f32.pop %v1913
      %v2071 = verf.f32.pop %v1914
      %v2072 = verf.f32.pop %v1915
      %v2073 = verf.f32.pop %v1916
      %v2074 = verf.f32.pop %v1917
      %v2075 = verf.f32.pop %v1918
      %v2076 = verf.f32.pop %v1919
      %v2077 = verf.f32.pop %v1920
      %v2078 = verf.f32.pop %v1921
      %v2079 = verf.f32.pop %v1922
      %v2080 = verf.f32.pop %v1923
      %v2081 = verf.f32.pop %v1924
      %v2082 = verf.f32.pop %v1925
      %v2083 = verf.f32.pop %v1926
      %v2084 = verf.f32.pop %v1927
      %v2085 = verf.f32.pop %v1928
      %v2086 = verf.f32.pop %v1929
      %v2087 = verf.f32.pop %v1930
      %v2088 = verf.f32.pop %v1931
      %v2089 = verf.f32.pop %v1932
      %v2090 = verf.f32.pop %v1933
      %v2091 = verf.f32.pop %v1934
      %v2092 = verf.f32.pop %v1935
      %v2093 = verf.f32.pop %v1936
      %v2094 = verf.f32.pop %v1937
      %v2095 = verf.f32.pop %v1938
      %v2096 = verf.f32.pop %v1939
      %v2097 = verf.f32.pop %v1940
      %v2098 = verf.f32.pop %v1941
      %v2099 = verf.f32.pop %v1942
      %v2100 = verf.f32.pop %v1943
      %v2101 = verf.f32.pop %v1944
      %v2102 = verf.f32.pop %v1945
      %v2103 = verf.f32.pop %v1946
      %v2104 = verf.f32.pop %v1947
      %v2105 = verf.f32.pop %v1948
      %v2106 = verf.f32.pop %v1949
      %v2107 = verf.f32.pop %v1950
      %v2108 = verf.f32.pop %v1951
      %v2109 = verf.f32.pop %v1952
      %v2110 = verf.f32.pop %v1953
      %v2111 = verf.f32.pop %v1954
      %v2112 = verf.f32.pop %v1955
      %v2113 = verf.f32.pop %v1956
      %v2114 = verf.f32.pop %v1957
      %v2115 = verf.f32.pop %v1958
      %v2116 = verf.f32.pop %v1959
      %v2117 = verf.f32.pop %v1960
      %v2118 = verf.f32.pop %v1961
      %v2119 = verf.f32.pop %v1962
      %v2120 = verf.f32.pop %v1963
      %v2121 = verf.f32.pop %v1964
      %v2122 = verf.f32.pop %v1965
      %v2123 = verf.f32.pop %v1966
      %v2124 = verf.f32.pop %v1967
      %v2125 = verf.f32.pop %v1968
      %v2126 = verf.f32.pop %v1969
      %v2127 = verf.f32.pop %v1970
      %v2128 = verf.f32.pop %v1971
      %v2129 = verf.f32.pop %v1972
      %v2130 = verf.f32.pop %v1973
      %v2131 = verf.f32.pop %v1974
      %v2132 = verf.f32.pop %v1975
      %v2133 = verf.f32.pop %v1976
      %v2134 = verf.f32.pop %v1977
      %v2135 = verf.f32.pop %v1978
      %v2136 = verf.f32.pop %v1979
      %v2137 = verf.f32.pop %v1980
      %v2138 = vadd.f32 %v1981, 1.0
      %v2139 = vadd.f32 %v1982, 1.0
      %v2140 = vadd.f32 %v1983, 1.0
      %v2141 = vadd.f32 %v1984, 1.0
      %v2142 = vadd.f32 %v1985, 1.0
      %v2143 = vadd.f32 %v1986, 1.0
      %v2144 = vadd.f32 %v1987, 1.0
      %v2145 = vadd.f32 %v1988, 1.0
      %v2146 = vadd.f32 %v1989, 1.0
      %v2147 = vadd.f32 %v1990, 1.0
      %v2148 = vadd.f32 %v1991, 1.0
      %v2149 = vadd.f32 %v1992, 1.0
      %v2150 = vadd.f32 %v1993, 1.0
      %v2151 = vadd.f32 %v1994, 1.0
      %v2152 = vadd.f32 %v1995, 1.0
      %v2153 = vadd.f32 %v1996, 1.0
      %v2154 = vadd.f32 %v1997, 1.0
      %v2155 = vadd.f32 %v1998, 1.0
      %v2156 = vadd.f32 %v1999, 1.0
      %v2157 = vadd.f32 %v2000, 1.0
      %v2158 = vadd.f32 %v2001, 1.0
      %v2159 = vadd.f32 %v2002, 1.0
      %v2160 = vadd.f32 %v2003, 1.0
      %v2161 = vadd.f32 %v2004, 1.0
      %v2162 = vadd.f32 %v2005, 1.0
      %v2163 = vadd.f32 %v2006, 1.0
      %v2164 = vadd.f32 %v2007, 1.0
      %v2165 = vadd.f32 %v2008, 1.0
      %v2166 = vadd.f32 %v2009, 1.0
      %v2167 = vadd.f32 %v2010, 1.0
      %v2168 = vadd.f32 %v2011, 1.0
      %v2169 = vadd.f32 %v2012, 1.0
      %v2170 = vadd.f32 %v2013, 1.0
      %v2171 = vadd.f32 %v2014, 1.0
      %v2172 = vadd.f32 %v2015, 1.0
      %v2173 = vadd.f32 %v2016, 1.0
      %v2174 = vadd.f32 %v2017, 1.0
      %v2175 = vadd.f32 %v2018, 1.0
      %v2176 = vadd.f32 %v2019, 1.0
      %v2177 = vadd.f32 %v2020, 1.0
      %v2178 = vadd.f32 %v2021, 1.0
      %v2179 = vadd.f32 %v2022, 1.0
      %v2180 = vadd.f32 %v2023, 1.0
      %v2181 = vadd.f32 %v2024, 1.0
      %v2182 = vadd.f32 %v2025, 1.0
      %v2183 = vadd.f32 %v2026, 1.0
      %v2184 = vadd.f32 %v2027, 1.0
      %v2185 = vadd.f32 %v2028, 1.0
      %v2186 = vadd.f32 %v2029, 1.0
      %v2187 = vadd.f32 %v2030, 1.0
      %v2188 = vadd.f32 %v2031, 1.0
      %v2189 = vadd.f32 %v2032, 1.0
      %v2190 = vadd.f32 %v2033, 1.0
      %v2191 = vadd.f32 %v2034, 1.0
      %v2192 = vadd.f32 %v2035, 1.0
      %v2193 = vadd.f32 %v2036, 1.0
      %v2194 = vadd.f32 %v2037, 1.0
      %v2195 = vadd.f32 %v2038, 1.0
      %v2196 = vadd.f32 %v2039, 1.0
      %v2197 = vadd.f32 %v2040, 1.0
      %v2198 = vadd.f32 %v2041, 1.0
      %v2199 = vadd.f32 %v2042, 1.0
      %v2200 = vadd.f32 %v2043, 1.0
      %v2201 = vadd.f32 %v2044, 1.0
      %v2202 = vadd.f32 %v2045, 1.0
      %v2203 = vadd.f32 %v2046, 1.0
      %v2204 = vadd.f32 %v2047, 1.0
      %v2205 = vadd.f32 %v2048, 1.0
      %v2206 = vadd.f32 %v2049, 1.0
      %v2207 = vadd.f32 %v2050, 1.0
      %v2208 = vadd.f32 %v2051, 1.0
      %v2209 = vadd.f32 %v2052, 1.0
      %v2210 = vadd.f32 %v2053, 1.0
      %v2211 = vadd.f32 %v2054, 1.0
      %v2212 = vadd.f32 %v2055, 1.0
      %v2213 = vadd.f32 %v2056, 1.0
      %v2214 = vadd.f32 %v2057, 1.0
      %v2215 = vadd.f32 %v2058, 1.0
      %v2216 = vadd.f32 %v2059, 1.0
      %v2217 = vadd.f32 %v2060, 1.0
      %v2218 = vadd.f32 %v2061, 1.0
      %v2219 = vadd.f32 %v2062, 1.0
      %v2220 = vadd.f32 %v2063, 1.0
      %v2221 = vadd.f32 %v2064, 1.0
      %v2222 = vadd.f32 %v2065, 1.0
      %v2223 = vadd.f32 %v2066, 1.0
      %v2224 = vadd.f32 %v2067, 1.0
      %v2225 = vadd.f32 %v2068, 1.0
      %v2226 = vadd.f32 %v2069, 1.0
      %v2227 = vadd.f32 %v2070, 1.0
      %v2228 = vadd.f32 %v2071, 1.0
      %v2229 = vadd.f32 %v2072, 1.0
      %v2230 = vadd.f32 %v2073, 1.0
      %v2231 = vadd.f32 %v2074, 1.0
      %v2232 = vadd.f32 %v2075, 1.0
      %v2233 = vadd.f32 %v2076, 1.0
      %v2234 = vadd.f32 %v2077, 1.0
      %v2235 = vadd.f32 %v2078, 1.0
      %v2236 = vadd.f32 %v2079, 1.0
      %v2237 = vadd.f32 %v2080, 1.0
      %v2238 = vadd.f32 %v2081, 1.0
      %v2239 = vadd.f32 %v2082, 1.0
      %v2240 = vadd.f32 %v2083, 1.0
      %v2241 = vadd.f32 %v2084, 1.0
      %v2242 = vadd.f32 %v2085, 1.0
      %v2243 = vadd.f32 %v2086, 1.0
      %v2244 = vadd.f32 %v2087, 1.0
      %v2245 = vadd.f32 %v2088, 1.0
      %v2246 = vadd.f32 %v2089, 1.0
      %v2247 = vadd.f32 %v2090, 1.0
      %v2248 = vadd.f32 %v2091, 1.0
      %v2249 = vadd.f32 %v2092, 1.0
      %v2250 = vadd.f32 %v2093, 1.0
      %v2251 = vadd.f32 %v2094, 1.0
      %v2252 = vadd.f32 %v2095, 1.0
      %v2253 = vadd.f32 %v2096, 1.0
      %v2254 = vadd.f32 %v2097, 1.0
      %v2255 = vadd.f32 %v2098, 1.0
      %v2256 = vadd.f32 %v2099, 1.0
      %v2257 = vadd.f32 %v2100, 1.0
      %v2258 = vadd.f32 %v2101, 1.0
      %v2259 = vadd.f32 %v2102, 1.0
      %v2260 = vadd.f32 %v2103, 1.0
      %v2261 = vadd.f32 %v2104, 1.0
      %v2262 = vadd.f32 %v2105, 1.0
      %v2263 = vadd.f32 %v2106, 1.0
      %v2264 = vadd.f32 %v2107, 1.0
      %v2265 = vadd.f32 %v2108, 1.0
      %v2266 = vadd.f32 %v2109, 1.0
      %v2267 = vadd.f32 %v2110, 1.0
      %v2268 = vadd.f32 %v2111, 1.0
      %v2269 = vadd.f32 %v2112, 1.0
      %v2270 = vadd.f32 %v2113, 1.0
      %v2271 = vadd.f32 %v2114, 1.0
      %v2272 = vadd.f32 %v2115, 1.0
      %v2273 = vadd.f32 %v2116, 1.0
      %v2274 = vadd.f32 %v2117, 1.0
      %v2275 = vadd.f32 %v2118, 1.0
      %v2276 = vadd.f32 %v2119, 1.0
      %v2277 = vadd.f32 %v2120, 1.0
      %v2278 = vadd.f32 %v2121, 1.0
      %v2279 = vadd.f32 %v2122, 1.0
      %v2280 = vadd.f32 %v2123, 1.0
      %v2281 = vadd.f32 %v2124, 1.0
      %v2282 = vadd.f32 %v2125, 1.0
      %v2283 = vadd.f32 %v2126, 1.0
      %v2284 = vadd.f32 %v2127, 1.0
      %v2285 = vadd.f32 %v2128, 1.0
      %v2286 = vadd.f32 %v2129, 1.0
      %v2287 = vadd.f32 %v2130, 1.0
      %v2288 = vadd.f32 %v2131, 1.0
      %v2289 = vadd.f32 %v2132, 1.0
      %v2290 = vadd.f32 %v2133, 1.0
      %v2291 = vadd.f32 %v2134, 1.0
      %v2292 = vadd.f32 %v2135, 1.0
      %v2293 = vadd.f32 %v2136, 1.0
      %v2294 = vadd.f32 %v2137, 1.0
      %v2295 = vmul.f32 %v1667, %v2138
      %v2296 = vmul.f32 %v1668, %v2139
      %v2297 = vmul.f32 %v1669, %v2140
      %v2298 = vmul.f32 %v1670, %v2141
      %v2299 = vmul.f32 %v1671, %v2142
      %v2300 = vmul.f32 %v1672, %v2143
      %v2301 = vmul.f32 %v1673, %v2144
      %v2302 = vmul.f32 %v1674, %v2145
      %v2303 = vmul.f32 %v1675, %v2146
      %v2304 = vmul.f32 %v1676, %v2147
      %v2305 = vmul.f32 %v1677, %v2148
      %v2306 = vmul.f32 %v1678, %v2149
      %v2307 = vmul.f32 %v1679, %v2150
      %v2308 = vmul.f32 %v1680, %v2151
      %v2309 = vmul.f32 %v1681, %v2152
      %v2310 = vmul.f32 %v1682, %v2153
      %v2311 = vmul.f32 %v1683, %v2154
      %v2312 = vmul.f32 %v1684, %v2155
      %v2313 = vmul.f32 %v1685, %v2156
      %v2314 = vmul.f32 %v1686, %v2157
      %v2315 = vmul.f32 %v1687, %v2158
      %v2316 = vmul.f32 %v1688, %v2159
      %v2317 = vmul.f32 %v1689, %v2160
      %v2318 = vmul.f32 %v1690, %v2161
      %v2319 = vmul.f32 %v1691, %v2162
      %v2320 = vmul.f32 %v1692, %v2163
      %v2321 = vmul.f32 %v1693, %v2164
      %v2322 = vmul.f32 %v1694, %v2165
      %v2323 = vmul.f32 %v1695, %v2166
      %v2324 = vmul.f32 %v1696, %v2167
      %v2325 = vmul.f32 %v1697, %v2168
      %v2326 = vmul.f32 %v1698, %v2169
      %v2327 = vmul.f32 %v1699, %v2170
      %v2328 = vmul.f32 %v1700, %v2171
      %v2329 = vmul.f32 %v1701, %v2172
      %v2330 = vmul.f32 %v1702, %v2173
      %v2331 = vmul.f32 %v1703, %v2174
      %v2332 = vmul.f32 %v1704, %v2175
      %v2333 = vmul.f32 %v1705, %v2176
      %v2334 = vmul.f32 %v1706, %v2177
      %v2335 = vmul.f32 %v1707, %v2178
      %v2336 = vmul.f32 %v1708, %v2179
      %v2337 = vmul.f32 %v1709, %v2180
      %v2338 = vmul.f32 %v1710, %v2181
      %v2339 = vmul.f32 %v1711, %v2182
      %v2340 = vmul.f32 %v1712, %v2183
      %v2341 = vmul.f32 %v1713, %v2184
      %v2342 = vmul.f32 %v1714, %v2185
      %v2343 = vmul.f32 %v1715, %v2186
      %v2344 = vmul.f32 %v1716, %v2187
      %v2345 = vmul.f32 %v1717, %v2188
      %v2346 = vmul.f32 %v1718, %v2189
      %v2347 = vmul.f32 %v1719, %v2190
      %v2348 = vmul.f32 %v1720, %v2191
      %v2349 = vmul.f32 %v1721, %v2192
      %v2350 = vmul.f32 %v1722, %v2193
      %v2351 = vmul.f32 %v1723, %v2194
      %v2352 = vmul.f32 %v1724, %v2195
      %v2353 = vmul.f32 %v1725, %v2196
      %v2354 = vmul.f32 %v1726, %v2197
      %v2355 = vmul.f32 %v1727, %v2198
      %v2356 = vmul.f32 %v1728, %v2199
      %v2357 = vmul.f32 %v1729, %v2200
      %v2358 = vmul.f32 %v1730, %v2201
      %v2359 = vmul.f32 %v1731, %v2202
      %v2360 = vmul.f32 %v1732, %v2203
      %v2361 = vmul.f32 %v1733, %v2204
      %v2362 = vmul.f32 %v1734, %v2205
      %v2363 = vmul.f32 %v1735, %v2206
      %v2364 = vmul.f32 %v1736, %v2207
      %v2365 = vmul.f32 %v1737, %v2208
      %v2366 = vmul.f32 %v1738, %v2209
      %v2367 = vmul.f32 %v1739, %v2210
      %v2368 = vmul.f32 %v1740, %v2211
      %v2369 = vmul.f32 %v1741, %v2212
      %v2370 = vmul.f32 %v1742, %v2213
      %v2371 = vmul.f32 %v1743, %v2214
      %v2372 = vmul.f32 %v1744, %v2215
      %v2373 = vmul.f32 %v1745, %v2216
      %v2374 = vmul.f32 %v1746, %v2217
      %v2375 = vmul.f32 %v1747, %v2218
      %v2376 = vmul.f32 %v1748, %v2219
      %v2377 = vmul.f32 %v1749, %v2220
      %v2378 = vmul.f32 %v1750, %v2221
      %v2379 = vmul.f32 %v1751, %v2222
      %v2380 = vmul.f32 %v1752, %v2223
      %v2381 = vmul.f32 %v1753, %v2224
      %v2382 = vmul.f32 %v1754, %v2225
      %v2383 = vmul.f32 %v1755, %v2226
      %v2384 = vmul.f32 %v1756, %v2227
      %v2385 = vmul.f32 %v1757, %v2228
      %v2386 = vmul.f32 %v1758, %v2229
      %v2387 = vmul.f32 %v1759, %v2230
      %v2388 = vmul.f32 %v1760, %v2231
      %v2389 = vmul.f32 %v1761, %v2232
      %v2390 = vmul.f32 %v1762, %v2233
      %v2391 = vmul.f32 %v1763, %v2234
      %v2392 = vmul.f32 %v1764, %v2235
      %v2393 = vmul.f32 %v1765, %v2236
      %v2394 = vmul.f32 %v1766, %v2237
      %v2395 = vmul.f32 %v1767, %v2238
      %v2396 = vmul.f32 %v1768, %v2239
      %v2397 = vmul.f32 %v1769, %v2240
      %v2398 = vmul.f32 %v1770, %v2241
      %v2399 = vmul.f32 %v1771, %v2242
      %v2400 = vmul.f32 %v1772, %v2243
      %v2401 = vmul.f32 %v1773, %v2244
      %v2402 = vmul.f32 %v1774, %v2245
      %v2403 = vmul.f32 %v1775, %v2246
      %v2404 = vmul.f32 %v1776, %v2247
      %v2405 = vmul.f32 %v1777, %v2248
      %v2406 = vmul.f32 %v1778, %v2249
      %v2407 = vmul.f32 %v1779, %v2250
      %v2408 = vmul.f32 %v1780, %v2251
      %v2409 = vmul.f32 %v1781, %v2252
      %v2410 = vmul.f32 %v1782, %v2253
      %v2411 = vmul.f32 %v1783, %v2254
      %v2412 = vmul.f32 %v1784, %v2255
      %v2413 = vmul.f32 %v1785, %v2256
      %v2414 = vmul.f32 %v1786, %v2257
      %v2415 = vmul.f32 %v1787, %v2258
      %v2416 = vmul.f32 %v1788, %v2259
      %v2417 = vmul.f32 %v1789, %v2260
      %v2418 = vmul.f32 %v1790, %v2261
      %v2419 = vmul.f32 %v1791, %v2262
      %v2420 = vmul.f32 %v1792, %v2263
      %v2421 = vmul.f32 %v1793, %v2264
      %v2422 = vmul.f32 %v1794, %v2265
      %v2423 = vmul.f32 %v1795, %v2266
      %v2424 = vmul.f32 %v1796, %v2267
      %v2425 = vmul.f32 %v1797, %v2268
      %v2426 = vmul.f32 %v1798, %v2269
      %v2427 = vmul.f32 %v1799, %v2270
      %v2428 = vmul.f32 %v1800, %v2271
      %v2429 = vmul.f32 %v1801, %v2272
      %v2430 = vmul.f32 %v1802, %v2273
      %v2431 = vmul.f32 %v1803, %v2274
      %v2432 = vmul.f32 %v1804, %v2275
      %v2433 = vmul.f32 %v1805, %v2276
      %v2434 = vmul.f32 %v1806, %v2277
      %v2435 = vmul.f32 %v1807, %v2278
      %v2436 = vmul.f32 %v1808, %v2279
      %v2437 = vmul.f32 %v1809, %v2280
      %v2438 = vmul.f32 %v1810, %v2281
      %v2439 = vmul.f32 %v1811, %v2282
      %v2440 = vmul.f32 %v1812, %v2283
      %v2441 = vmul.f32 %v1813, %v2284
      %v2442 = vmul.f32 %v1814, %v2285
      %v2443 = vmul.f32 %v1815, %v2286
      %v2444 = vmul.f32 %v1816, %v2287
      %v2445 = vmul.f32 %v1817, %v2288
      %v2446 = vmul.f32 %v1818, %v2289
      %v2447 = vmul.f32 %v1819, %v2290
      %v2448 = vmul.f32 %v1820, %v2291
      %v2449 = vmul.f32 %v1821, %v2292
      %v2450 = vmul.f32 %v1822, %v2293
      %v2451 = vmul.f32 %v1823, %v2294
      %vm2452 = vcmask 261120
      %2453 = vst.msk [vmem:[%s172] sm:$0xff] %vm2452, %v2295
      %2454 = vst.msk [vmem:[%s172 + $0x8] sm:$0xff] %vm2452, %v2296
      %2455 = vst.msk [vmem:[%s172 + $0x10] sm:$0xff] %vm2452, %v2297
      %2456 = vst.msk [vmem:[%s172 + $0x18] sm:$0xff] %vm2452, %v2298
      %2457 = vst.msk [vmem:[%s172 + $0x20] sm:$0xff] %vm2452, %v2299
      %2458 = vst.msk [vmem:[%s172 + $0x28] sm:$0xff] %vm2452, %v2300
      %2459 = vst.msk [vmem:[%s172 + $0x30] sm:$0xff] %vm2452, %v2301
      %2460 = vst.msk [vmem:[%s172 + $0x38] sm:$0xff] %vm2452, %v2302
      %2461 = vst.msk [vmem:[%s172 + $0x40] sm:$0xff] %vm2452, %v2303
      %2462 = vst.msk [vmem:[%s172 + $0x48] sm:$0xff] %vm2452, %v2304
      %2463 = vst.msk [vmem:[%s172 + $0x50] sm:$0xff] %vm2452, %v2305
      %2464 = vst.msk [vmem:[%s172 + $0x58] sm:$0xff] %vm2452, %v2306
      %2465 = vst.msk [vmem:[%s172 + $0x60] sm:$0xff] %vm2452, %v2307
      %2466 = vst.msk [vmem:[%s172 + $0x68] sm:$0xff] %vm2452, %v2308
      %2467 = vst.msk [vmem:[%s172 + $0x70] sm:$0xff] %vm2452, %v2309
      %2468 = vst.msk [vmem:[%s172 + $0x78] sm:$0xff] %vm2452, %v2310
      %2469 = vst.msk [vmem:[%s172 + $0x80] sm:$0xff] %vm2452, %v2311
      %2470 = vst.msk [vmem:[%s172 + $0x88] sm:$0xff] %vm2452, %v2312
      %2471 = vst.msk [vmem:[%s172 + $0x90] sm:$0xff] %vm2452, %v2313
      %2472 = vst.msk [vmem:[%s172 + $0x98] sm:$0xff] %vm2452, %v2314
      %2473 = vst.msk [vmem:[%s172 + $0xa0] sm:$0xff] %vm2452, %v2315
      %2474 = vst.msk [vmem:[%s172 + $0xa8] sm:$0xff] %vm2452, %v2316
      %2475 = vst.msk [vmem:[%s172 + $0xb0] sm:$0xff] %vm2452, %v2317
      %2476 = vst.msk [vmem:[%s172 + $0xb8] sm:$0xff] %vm2452, %v2318
      %2477 = vst.msk [vmem:[%s172 + $0xc0] sm:$0xff] %vm2452, %v2319
      %2478 = vst.msk [vmem:[%s172 + $0xc8] sm:$0xff] %vm2452, %v2320
      %2479 = vst.msk [vmem:[%s172 + $0xd0] sm:$0xff] %vm2452, %v2321
      %2480 = vst.msk [vmem:[%s172 + $0xd8] sm:$0xff] %vm2452, %v2322
      %2481 = vst.msk [vmem:[%s172 + $0xe0] sm:$0xff] %vm2452, %v2323
      %2482 = vst.msk [vmem:[%s172 + $0xe8] sm:$0xff] %vm2452, %v2324
      %2483 = vst.msk [vmem:[%s172 + $0xf0] sm:$0xff] %vm2452, %v2325
      %2484 = vst.msk [vmem:[%s172 + $0xf8] sm:$0xff] %vm2452, %v2326
      %2485 = vst.msk [vmem:[%s172 + $0x100] sm:$0xff] %vm2452, %v2327
      %2486 = vst.msk [vmem:[%s172 + $0x108] sm:$0xff] %vm2452, %v2328
      %2487 = vst.msk [vmem:[%s172 + $0x110] sm:$0xff] %vm2452, %v2329
      %2488 = vst.msk [vmem:[%s172 + $0x118] sm:$0xff] %vm2452, %v2330
      %2489 = vst.msk [vmem:[%s172 + $0x120] sm:$0xff] %vm2452, %v2331
      %2490 = vst.msk [vmem:[%s172 + $0x128] sm:$0xff] %vm2452, %v2332
      %2491 = vst.msk [vmem:[%s172 + $0x130] sm:$0xff] %vm2452, %v2333
      %2492 = vst.msk [vmem:[%s172 + $0x138] sm:$0xff] %vm2452, %v2334
      %2493 = vst.msk [vmem:[%s172 + $0x140] sm:$0xff] %vm2452, %v2335
      %2494 = vst.msk [vmem:[%s172 + $0x148] sm:$0xff] %vm2452, %v2336
      %2495 = vst.msk [vmem:[%s172 + $0x150] sm:$0xff] %vm2452, %v2337
      %2496 = vst.msk [vmem:[%s172 + $0x158] sm:$0xff] %vm2452, %v2338
      %2497 = vst.msk [vmem:[%s172 + $0x160] sm:$0xff] %vm2452, %v2339
      %2498 = vst.msk [vmem:[%s172 + $0x168] sm:$0xff] %vm2452, %v2340
      %2499 = vst.msk [vmem:[%s172 + $0x170] sm:$0xff] %vm2452, %v2341
      %2500 = vst.msk [vmem:[%s172 + $0x178] sm:$0xff] %vm2452, %v2342
      %2501 = vst.msk [vmem:[%s172 + $0x180] sm:$0xff] %vm2452, %v2343
      %2502 = vst.msk [vmem:[%s172 + $0x188] sm:$0xff] %vm2452, %v2344
      %2503 = vst.msk [vmem:[%s172 + $0x190] sm:$0xff] %vm2452, %v2345
      %2504 = vst.msk [vmem:[%s172 + $0x198] sm:$0xff] %vm2452, %v2346
      %2505 = vst.msk [vmem:[%s172 + $0x1a0] sm:$0xff] %vm2452, %v2347
      %2506 = vst.msk [vmem:[%s172 + $0x1a8] sm:$0xff] %vm2452, %v2348
      %2507 = vst.msk [vmem:[%s172 + $0x1b0] sm:$0xff] %vm2452, %v2349
      %2508 = vst.msk [vmem:[%s172 + $0x1b8] sm:$0xff] %vm2452, %v2350
      %2509 = vst.msk [vmem:[%s172 + $0x1c0] sm:$0xff] %vm2452, %v2351
      %2510 = vst.msk [vmem:[%s172 + $0x1c8] sm:$0xff] %vm2452, %v2352
      %2511 = vst.msk [vmem:[%s172 + $0x1d0] sm:$0xff] %vm2452, %v2353
      %2512 = vst.msk [vmem:[%s172 + $0x1d8] sm:$0xff] %vm2452, %v2354
      %2513 = vst.msk [vmem:[%s172 + $0x1e0] sm:$0xff] %vm2452, %v2355
      %2514 = vst.msk [vmem:[%s172 + $0x1e8] sm:$0xff] %vm2452, %v2356
      %2515 = vst.msk [vmem:[%s172 + $0x1f0] sm:$0xff] %vm2452, %v2357
      %2516 = vst.msk [vmem:[%s172 + $0x1f8] sm:$0xff] %vm2452, %v2358
      %2517 = vst.msk [vmem:[%s172 + $0x200] sm:$0xff] %vm2452, %v2359
      %2518 = vst.msk [vmem:[%s172 + $0x208] sm:$0xff] %vm2452, %v2360
      %2519 = vst.msk [vmem:[%s172 + $0x210] sm:$0xff] %vm2452, %v2361
      %2520 = vst.msk [vmem:[%s172 + $0x218] sm:$0xff] %vm2452, %v2362
      %2521 = vst.msk [vmem:[%s172 + $0x220] sm:$0xff] %vm2452, %v2363
      %2522 = vst.msk [vmem:[%s172 + $0x228] sm:$0xff] %vm2452, %v2364
      %2523 = vst.msk [vmem:[%s172 + $0x230] sm:$0xff] %vm2452, %v2365
      %2524 = vst.msk [vmem:[%s172 + $0x238] sm:$0xff] %vm2452, %v2366
      %2525 = vst.msk [vmem:[%s172 + $0x240] sm:$0xff] %vm2452, %v2367
      %2526 = vst.msk [vmem:[%s172 + $0x248] sm:$0xff] %vm2452, %v2368
      %2527 = vst.msk [vmem:[%s172 + $0x250] sm:$0xff] %vm2452, %v2369
      %2528 = vst.msk [vmem:[%s172 + $0x258] sm:$0xff] %vm2452, %v2370
      %2529 = vst.msk [vmem:[%s172 + $0x260] sm:$0xff] %vm2452, %v2371
      %2530 = vst.msk [vmem:[%s172 + $0x268] sm:$0xff] %vm2452, %v2372
      %2531 = vst.msk [vmem:[%s172 + $0x270] sm:$0xff] %vm2452, %v2373
      %2532 = vst.msk [vmem:[%s172 + $0x278] sm:$0xff] %vm2452, %v2374
      %2533 = vst.msk [vmem:[%s172 + $0x280] sm:$0xff] %vm2452, %v2375
      %2534 = vst.msk [vmem:[%s172 + $0x288] sm:$0xff] %vm2452, %v2376
      %2535 = vst.msk [vmem:[%s172 + $0x290] sm:$0xff] %vm2452, %v2377
      %2536 = vst.msk [vmem:[%s172 + $0x298] sm:$0xff] %vm2452, %v2378
      %2537 = vst.msk [vmem:[%s172 + $0x2a0] sm:$0xff] %vm2452, %v2379
      %2538 = vst.msk [vmem:[%s172 + $0x2a8] sm:$0xff] %vm2452, %v2380
      %2539 = vst.msk [vmem:[%s172 + $0x2b0] sm:$0xff] %vm2452, %v2381
      %2540 = vst.msk [vmem:[%s172 + $0x2b8] sm:$0xff] %vm2452, %v2382
      %2541 = vst.msk [vmem:[%s172 + $0x2c0] sm:$0xff] %vm2452, %v2383
      %2542 = vst.msk [vmem:[%s172 + $0x2c8] sm:$0xff] %vm2452, %v2384
      %2543 = vst.msk [vmem:[%s172 + $0x2d0] sm:$0xff] %vm2452, %v2385
      %2544 = vst.msk [vmem:[%s172 + $0x2d8] sm:$0xff] %vm2452, %v2386
      %2545 = vst.msk [vmem:[%s172 + $0x2e0] sm:$0xff] %vm2452, %v2387
      %2546 = vst.msk [vmem:[%s172 + $0x2e8] sm:$0xff] %vm2452, %v2388
      %2547 = vst.msk [vmem:[%s172 + $0x2f0] sm:$0xff] %vm2452, %v2389
      %2548 = vst.msk [vmem:[%s172 + $0x2f8] sm:$0xff] %vm2452, %v2390
      %2549 = vst.msk [vmem:[%s172 + $0x300] sm:$0xff] %vm2452, %v2391
      %2550 = vst.msk [vmem:[%s172 + $0x308] sm:$0xff] %vm2452, %v2392
      %2551 = vst.msk [vmem:[%s172 + $0x310] sm:$0xff] %vm2452, %v2393
      %2552 = vst.msk [vmem:[%s172 + $0x318] sm:$0xff] %vm2452, %v2394
      %2553 = vst.msk [vmem:[%s172 + $0x320] sm:$0xff] %vm2452, %v2395
      %2554 = vst.msk [vmem:[%s172 + $0x328] sm:$0xff] %vm2452, %v2396
      %2555 = vst.msk [vmem:[%s172 + $0x330] sm:$0xff] %vm2452, %v2397
      %2556 = vst.msk [vmem:[%s172 + $0x338] sm:$0xff] %vm2452, %v2398
      %2557 = vst.msk [vmem:[%s172 + $0x340] sm:$0xff] %vm2452, %v2399
      %2558 = vst.msk [vmem:[%s172 + $0x348] sm:$0xff] %vm2452, %v2400
      %2559 = vst.msk [vmem:[%s172 + $0x350] sm:$0xff] %vm2452, %v2401
      %2560 = vst.msk [vmem:[%s172 + $0x358] sm:$0xff] %vm2452, %v2402
      %2561 = vst.msk [vmem:[%s172 + $0x360] sm:$0xff] %vm2452, %v2403
      %2562 = vst.msk [vmem:[%s172 + $0x368] sm:$0xff] %vm2452, %v2404
      %2563 = vst.msk [vmem:[%s172 + $0x370] sm:$0xff] %vm2452, %v2405
      %2564 = vst.msk [vmem:[%s172 + $0x378] sm:$0xff] %vm2452, %v2406
      %2565 = vst.msk [vmem:[%s172 + $0x380] sm:$0xff] %vm2452, %v2407
      %2566 = vst.msk [vmem:[%s172 + $0x388] sm:$0xff] %vm2452, %v2408
      %2567 = vst.msk [vmem:[%s172 + $0x390] sm:$0xff] %vm2452, %v2409
      %2568 = vst.msk [vmem:[%s172 + $0x398] sm:$0xff] %vm2452, %v2410
      %2569 = vst.msk [vmem:[%s172 + $0x3a0] sm:$0xff] %vm2452, %v2411
      %2570 = vst.msk [vmem:[%s172 + $0x3a8] sm:$0xff] %vm2452, %v2412
      %2571 = vst.msk [vmem:[%s172 + $0x3b0] sm:$0xff] %vm2452, %v2413
      %2572 = vst.msk [vmem:[%s172 + $0x3b8] sm:$0xff] %vm2452, %v2414
      %2573 = vst.msk [vmem:[%s172 + $0x3c0] sm:$0xff] %vm2452, %v2415
      %2574 = vst.msk [vmem:[%s172 + $0x3c8] sm:$0xff] %vm2452, %v2416
      %2575 = vst.msk [vmem:[%s172 + $0x3d0] sm:$0xff] %vm2452, %v2417
      %2576 = vst.msk [vmem:[%s172 + $0x3d8] sm:$0xff] %vm2452, %v2418
      %2577 = vst.msk [vmem:[%s172 + $0x3e0] sm:$0xff] %vm2452, %v2419
      %2578 = vst.msk [vmem:[%s172 + $0x3e8] sm:$0xff] %vm2452, %v2420
      %2579 = vst.msk [vmem:[%s172 + $0x3f0] sm:$0xff] %vm2452, %v2421
      %2580 = vst.msk [vmem:[%s172 + $0x3f8] sm:$0xff] %vm2452, %v2422
      %2581 = vst.msk [vmem:[%s172 + $0x400] sm:$0xff] %vm2452, %v2423
      %2582 = vst.msk [vmem:[%s172 + $0x408] sm:$0xff] %vm2452, %v2424
      %2583 = vst.msk [vmem:[%s172 + $0x410] sm:$0xff] %vm2452, %v2425
      %2584 = vst.msk [vmem:[%s172 + $0x418] sm:$0xff] %vm2452, %v2426
      %2585 = vst.msk [vmem:[%s172 + $0x420] sm:$0xff] %vm2452, %v2427
      %2586 = vst.msk [vmem:[%s172 + $0x428] sm:$0xff] %vm2452, %v2428
      %2587 = vst.msk [vmem:[%s172 + $0x430] sm:$0xff] %vm2452, %v2429
      %2588 = vst.msk [vmem:[%s172 + $0x438] sm:$0xff] %vm2452, %v2430
      %2589 = vst.msk [vmem:[%s172 + $0x440] sm:$0xff] %vm2452, %v2431
      %2590 = vst.msk [vmem:[%s172 + $0x448] sm:$0xff] %vm2452, %v2432
      %2591 = vst.msk [vmem:[%s172 + $0x450] sm:$0xff] %vm2452, %v2433
      %2592 = vst.msk [vmem:[%s172 + $0x458] sm:$0xff] %vm2452, %v2434
      %2593 = vst.msk [vmem:[%s172 + $0x460] sm:$0xff] %vm2452, %v2435
      %2594 = vst.msk [vmem:[%s172 + $0x468] sm:$0xff] %vm2452, %v2436
      %2595 = vst.msk [vmem:[%s172 + $0x470] sm:$0xff] %vm2452, %v2437
      %2596 = vst.msk [vmem:[%s172 + $0x478] sm:$0xff] %vm2452, %v2438
      %2597 = vst.msk [vmem:[%s172 + $0x480] sm:$0xff] %vm2452, %v2439
      %2598 = vst.msk [vmem:[%s172 + $0x488] sm:$0xff] %vm2452, %v2440
      %2599 = vst.msk [vmem:[%s172 + $0x490] sm:$0xff] %vm2452, %v2441
      %2600 = vst.msk [vmem:[%s172 + $0x498] sm:$0xff] %vm2452, %v2442
      %2601 = vst.msk [vmem:[%s172 + $0x4a0] sm:$0xff] %vm2452, %v2443
      %2602 = vst.msk [vmem:[%s172 + $0x4a8] sm:$0xff] %vm2452, %v2444
      %2603 = vst.msk [vmem:[%s172 + $0x4b0] sm:$0xff] %vm2452, %v2445
      %2604 = vst.msk [vmem:[%s172 + $0x4b8] sm:$0xff] %vm2452, %v2446
      %2605 = vst.msk [vmem:[%s172 + $0x4c0] sm:$0xff] %vm2452, %v2447
      %2606 = vst.msk [vmem:[%s172 + $0x4c8] sm:$0xff] %vm2452, %v2448
      %2607 = vst.msk [vmem:[%s172 + $0x4d0] sm:$0xff] %vm2452, %v2449
      %2608 = vst.msk [vmem:[%s172 + $0x4d8] sm:$0xff] %vm2452, %v2450
      %2609 = vst.msk [vmem:[%s172 + $0x4e0] sm:$0xff] %vm2452, %v2451
      %s2610 = smul.u32 157, %s14
      %p2611 = scmp.lt.s32.totalorder %s2610, 627
      %s2612 = scalar_select %p2611, %s2610, 627
      %s2613 = smul.addr %s2612, 8
      %s2614 = scalar_lea.vmem %s3, %s2613
      // Predicated region
      $region33: #{cnn_block_encoder.4} parent=31 // pred_check
        %p2615 = pneg %p100
      $region34: #{cnn_block_encoder.4} parent=31 // pred_check_branch
        %2617 = sbr.rel (%p2615) target = $region36
      $region35: #{cnn_block_encoder.4} parent=31 // pred_region
        %s2618 = smul.u32 157, %s14
      $region36: #{cnn_block_encoder.4} parent=31 // pred_fallthru
        _
    $region32: #{cnn_block_encoder.4} parent=5 // pred_fallthru
      _
    %p2619 = scmp.le.s32.totalorder 2, %s9
    // Predicated region
    $region37: #{cnn_block_encoder.4} parent=5 // pred_check
      %p2620 = pneg %p2619
    $region38: #{cnn_block_encoder.4} parent=5 // pred_check_branch
      %2622 = sbr.rel (%p2620) target = $region40
    $region39: #{cnn_block_encoder.4} parent=5 // pred_region
      %s2623 = ssub.s32 %s9, 2
      // Predicated region
      $region41: #{cnn_block_encoder.4} parent=39 // pred_check
        %p2624 = pneg %p106
      $region42: #{cnn_block_encoder.4} parent=39 // pred_check_branch
        %2626 = sbr.rel (%p2624) target = $region44
      $region43: #{cnn_block_encoder.4} parent=39 // pred_region
        %s2627 = smul.u32 157, %s15
        %p2628 = scmp.lt.s32.totalorder %s2627, 627
        %s2629 = scalar_select %p2628, %s2627, 627
        %s2630 = smul.addr %s2629, 8
        %s2631 = scalar_lea.vmem %s3, %s2630
      $region44: #{cnn_block_encoder.4} parent=39 // pred_fallthru
        _
    $region40: #{cnn_block_encoder.4} parent=5 // pred_fallthru
      _
  $region6: #{cnn_block_encoder.4} parent=0 // loop_footer
    %s13 = sadd.s32 1, %s9
  $region7: #{cnn_block_encoder.4} parent=0 // loop_footer_branch
    %8 = sbr.rel target = $region3
  $region8: #{cnn_block_encoder.4} parent=0 // loop_exit
    _

// kernel: cnn_block_encoder.5
$region0: #{cnn_block_encoder.5}
  #allocation0 [shape = 'u32[]', space=smem, size = 0x4, offset = 0x4, fixed_abs, tag = 'smem constant byte address 0x4 - core index']
  #allocation1 [shape = 'u32[144,128]{1,0:T(1,128)}', space=vmem, size = 0x12000, scoped, tag = 'internal scratch']
  %s0 = inlined_call_operand.vmem [shape: f32[1280,288], index: 0, kind: input, shape index: {}]
  %s1 = inlined_call_operand.vmem [shape: f32[288,64], index: 1, kind: input, shape index: {}]
  %s2 = inlined_call_operand.vmem [shape: f32[1,64], index: 2, kind: input, shape index: {}]
  %s3 = inlined_call_operand.vmem [shape: f32[1280,64], index: 3, kind: output, shape index: {}]
  %s4 = sld [smem:[#allocation0]]
  $region45: #{cnn_block_encoder.5} parent=0
    _
  %s6 = ssub.s32 1, %s4
  %s7 = scalar_select 0, %s6, %s4
  loop: start=0, step=1, limit=6
  $region2: #{cnn_block_encoder.5} parent=0 // loop_pre_header
    _
  $region3: #{cnn_block_encoder.5} parent=0 // loop_header
    %s9 = sphi 0, %s13
    %p10 = scmp.ge.s32.totalorder %s9, 6
    %s19 = sphi 0, %s21
    %s22 = sphi 0, %s19
    %s23 = sphi 0, %s22
    %s39 = sphi 0, %s23
    %s43 = sphi 0, %s43
    %s45 = sphi 0, %s43
    %s46 = sphi 0, %s45
    %s60 = sphi 0, %s46
    %s64 = sphi 0, %s64
    %s66 = sphi 0, %s64
    %s67 = sphi 0, %s66
    %s81 = sphi 0, %s67
    %s87 = sphi 0, %s89
    %s90 = sphi 0, %s87
    %s91 = sphi 0, %s90
    %s107 = sphi 0, %s91
  $region4: #{cnn_block_encoder.5} parent=0 // loop_header_branch
    %12 = sbr.rel (%p10) target = $region8
  $region5: #{cnn_block_encoder.5} parent=0 // loop_body
    %s14 = ssub.s32 %s9, 1
    %s15 = ssub.s32 %s9, 2
    %s16 = sadd.s32 %s9, 1
    %s17 = ssub.s32 %s9, %s16
    %p18 = scmp.eq.s32.totalorder %s17, 0
    %s20 = sadd.s32 %s19, 1
    %s21 = scalar_select %p18, %s19, %s20
    %p24 = pneg %p18
    %p25 = scmp.eq.s32.totalorder %s9, 3
    %p26 = por %p24, %p25
    %p27 = scmp.ne.s32.totalorder %s19, %s22
    %p28 = scmp.eq.s32.totalorder %s9, 0
    %p29 = por %p27, %p28
    %p30 = scmp.ne.s32.totalorder %s19, %s22
    %p31 = scmp.eq.s32.totalorder %s14, 3
    %p32 = por %p30, %p31
    %p33 = scmp.ne.s32.totalorder %s22, %s23
    %p34 = scmp.eq.s32.totalorder %s14, 0
    %p35 = por %p33, %p34
    %p36 = scmp.ne.s32.totalorder %s22, %s23
    %p37 = scmp.eq.s32.totalorder %s15, 3
    %p38 = por %p36, %p37
    %p40 = scmp.ne.s32.totalorder %s23, %s39
    %p41 = scmp.eq.s32.totalorder %s15, 0
    %p42 = por %p40, %p41
    %s44 = sadd.s32 %s43, 1
    %p47 = scmp.eq.s32.totalorder %s9, 3
    %p48 = scmp.ne.s32.totalorder %s43, %s45
    %p49 = scmp.eq.s32.totalorder %s9, 0
    %p50 = por %p48, %p49
    %p51 = scmp.ne.s32.totalorder %s43, %s45
    %p52 = scmp.eq.s32.totalorder %s14, 3
    %p53 = por %p51, %p52
    %p54 = scmp.ne.s32.totalorder %s45, %s46
    %p55 = scmp.eq.s32.totalorder %s14, 0
    %p56 = por %p54, %p55
    %p57 = scmp.ne.s32.totalorder %s45, %s46
    %p58 = scmp.eq.s32.totalorder %s15, 3
    %p59 = por %p57, %p58
    %p61 = scmp.ne.s32.totalorder %s46, %s60
    %p62 = scmp.eq.s32.totalorder %s15, 0
    %p63 = por %p61, %p62
    %s65 = sadd.s32 %s64, 1
    %p68 = scmp.eq.s32.totalorder %s9, 3
    %p69 = scmp.ne.s32.totalorder %s64, %s66
    %p70 = scmp.eq.s32.totalorder %s9, 0
    %p71 = por %p69, %p70
    %p72 = scmp.ne.s32.totalorder %s64, %s66
    %p73 = scmp.eq.s32.totalorder %s14, 3
    %p74 = por %p72, %p73
    %p75 = scmp.ne.s32.totalorder %s66, %s67
    %p76 = scmp.eq.s32.totalorder %s14, 0
    %p77 = por %p75, %p76
    %p78 = scmp.ne.s32.totalorder %s66, %s67
    %p79 = scmp.eq.s32.totalorder %s15, 3
    %p80 = por %p78, %p79
    %p82 = scmp.ne.s32.totalorder %s67, %s81
    %p83 = scmp.eq.s32.totalorder %s15, 0
    %p84 = por %p82, %p83
    %s85 = ssub.s32 %s9, %s16
    %p86 = scmp.eq.s32.totalorder %s85, 0
    %s88 = sadd.s32 %s87, 1
    %s89 = scalar_select %p86, %s87, %s88
    %p92 = pneg %p86
    %p93 = scmp.eq.s32.totalorder %s9, 3
    %p94 = por %p92, %p93
    %p95 = scmp.ne.s32.totalorder %s87, %s90
    %p96 = scmp.eq.s32.totalorder %s9, 0
    %p97 = por %p95, %p96
    %p98 = scmp.ne.s32.totalorder %s87, %s90
    %p99 = scmp.eq.s32.totalorder %s14, 3
    %p100 = por %p98, %p99
    %p101 = scmp.ne.s32.totalorder %s90, %s91
    %p102 = scmp.eq.s32.totalorder %s14, 0
    %p103 = por %p101, %p102
    %p104 = scmp.ne.s32.totalorder %s90, %s91
    %p105 = scmp.eq.s32.totalorder %s15, 3
    %p106 = por %p104, %p105
    %p108 = scmp.ne.s32.totalorder %s91, %s107
    %p109 = scmp.eq.s32.totalorder %s15, 0
    %p110 = por %p108, %p109
    %p111 = scmp.le.s32.totalorder 1, %s9
    %p112 = scmp.lt.s32.totalorder %s9, 5
    %p113 = pnand %p111, %p112
    %p114 = pneg %p113
    // Predicated region
    $region9: #{cnn_block_encoder.5} parent=5 // pred_check
      _
    $region10: #{cnn_block_encoder.5} parent=5 // pred_check_branch
      %116 = sbr.rel (%p113) target = $region12
    $region11: #{cnn_block_encoder.5} parent=5 // pred_region
      %s117 = ssub.s32 %s9, 1
      // Predicated region
      $region13: #{cnn_block_encoder.5} parent=11 // pred_check
        %p118 = pneg %p56
      $region14: #{cnn_block_encoder.5} parent=11 // pred_check_branch
        %120 = sbr.rel (%p118) target = $region16
      $region15: #{cnn_block_encoder.5} parent=11 // pred_region
        _
      $region16: #{cnn_block_encoder.5} parent=11 // pred_fallthru
        _
      // Predicated region
      $region17: #{cnn_block_encoder.5} parent=11 // pred_check
        %p121 = pneg %p77
      $region18: #{cnn_block_encoder.5} parent=11 // pred_check_branch
        %123 = sbr.rel (%p121) target = $region20
      $region19: #{cnn_block_encoder.5} parent=11 // pred_region
        _
      $region20: #{cnn_block_encoder.5} parent=11 // pred_fallthru
        _
    $region12: #{cnn_block_encoder.5} parent=5 // pred_fallthru
      _
    %p124 = scmp.lt.s32.totalorder %s9, 4
    // Predicated region
    $region21: #{cnn_block_encoder.5} parent=5 // pred_check
      %p125 = pneg %p124
    $region22: #{cnn_block_encoder.5} parent=5 // pred_check_branch
      %127 = sbr.rel (%p125) target = $region24
    $region23: #{cnn_block_encoder.5} parent=5 // pred_region
      // Predicated region
      $region25: #{cnn_block_encoder.5} parent=23 // pred_check
        %p128 = pneg %p29
      $region26: #{cnn_block_encoder.5} parent=23 // pred_check_branch
        %130 = sbr.rel (%p128) target = $region28
      $region27: #{cnn_block_encoder.5} parent=23 // pred_region
        %s131 = smul.u32 40, %s9
        %p132 = scmp.lt.s32.totalorder %s131, 159
        %s133 = scalar_select %p132, %s131, 159
        %s134 = smul.addr %s133, 3
        %s135 = smul.addr %s134, 8
        %s136 = scalar_lea.vmem %s0, %s135
        %s137 = smul.u32 40, %s9
      $region28: #{cnn_block_encoder.5} parent=23 // pred_fallthru
        _
    $region24: #{cnn_block_encoder.5} parent=5 // pred_fallthru
      _
    %p138 = scmp.le.s32.totalorder 1, %s9
    %p139 = scmp.lt.s32.totalorder %s9, 5
    %p140 = pnand %p138, %p139
    %p141 = pneg %p140
    // Predicated region
    $region29: #{cnn_block_encoder.5} parent=5 // pred_check
      _
    $region30: #{cnn_block_encoder.5} parent=5 // pred_check_branch
      %143 = sbr.rel (%p140) target = $region32
    $region31: #{cnn_block_encoder.5} parent=5 // pred_region
      %s144 = ssub.s32 %s9, 1
      %s145 = smul.u32 40, %s14
      %p146 = scmp.lt.s32.totalorder %s145, 159
      %s147 = scalar_select %p146, %s145, 159
      %s148 = smul.addr %s147, 3
      %s149 = smul.addr %s148, 8
      %s150 = scalar_lea.vmem %s0, %s149
      %p151 = pneg %p35
      %p152 = pneg %p32
      %p153 = pneg %p56
      %p154 = pneg %p53
      %p155 = pneg %p77
      %p156 = pneg %p74
      %p157 = pneg %p103
      %p158 = pneg %p100
      %s159 = smul.u32 40, %s14
      %p160 = scmp.lt.s32.totalorder %s159, 159
      %s161 = scalar_select %p160, %s159, 159
      %s162 = smul.addr %s161, 8
      %s163 = scalar_lea.vmem %s3, %s162
      %s164 = smul.u32 40, %s14
      %p165 = scmp.lt.s32.totalorder %s164, 159
      %s166 = scalar_select %p165, %s164, 159
      %s167 = smul.addr %s166, 3
      %s168 = smul.addr %s167, 8
      %s169 = scalar_lea.vmem %s0, %s168
      %s170 = smul.u32 40, %s14
      %s171 = smul.u32 40, %s14
      %p172 = scmp.lt.s32.totalorder %s171, 159
      %s173 = scalar_select %p172, %s171, 159
      %s174 = smul.addr %s173, 8
      %s175 = scalar_lea.vmem %s3, %s174
      %s176 = smul.u32 40, %s14
      %v177 = vld [vmem:[%s169] sm:$0xff]
      %v178 = vld [vmem:[%s169 + $0x8] sm:$0xff]
      %v179 = vld [vmem:[%s169 + $0x10] sm:$0xff]
      %v180 = vld [vmem:[%s169 + $0x18] sm:$0xff]
      %v181 = vld [vmem:[%s169 + $0x20] sm:$0xff]
      %v182 = vld [vmem:[%s169 + $0x28] sm:$0xff]
      %v183 = vld [vmem:[%s169 + $0x30] sm:$0xff]
      %v184 = vld [vmem:[%s169 + $0x38] sm:$0xff]
      %v185 = vld [vmem:[%s169 + $0x40] sm:$0xff]
      %v186 = vld [vmem:[%s169 + $0x48] sm:$0xff]
      %v187 = vld [vmem:[%s169 + $0x50] sm:$0xff]
      %v188 = vld [vmem:[%s169 + $0x58] sm:$0xff]
      %v189 = vld [vmem:[%s169 + $0x60] sm:$0xff]
      %v190 = vld [vmem:[%s169 + $0x68] sm:$0xff]
      %v191 = vld [vmem:[%s169 + $0x70] sm:$0xff]
      %v192 = vld [vmem:[%s169 + $0x78] sm:$0xff]
      %v193 = vld [vmem:[%s169 + $0x80] sm:$0xff]
      %v194 = vld [vmem:[%s169 + $0x88] sm:$0xff]
      %v195 = vld [vmem:[%s169 + $0x90] sm:$0xff]
      %v196 = vld [vmem:[%s169 + $0x98] sm:$0xff]
      %v197 = vld [vmem:[%s169 + $0xa0] sm:$0xff]
      %v198 = vld [vmem:[%s169 + $0xa8] sm:$0xff]
      %v199 = vld [vmem:[%s169 + $0xb0] sm:$0xff]
      %v200 = vld [vmem:[%s169 + $0xb8] sm:$0xff]
      %v201 = vld [vmem:[%s169 + $0xc0] sm:$0xff]
      %v202 = vld [vmem:[%s169 + $0xc8] sm:$0xff]
      %v203 = vld [vmem:[%s169 + $0xd0] sm:$0xff]
      %v204 = vld [vmem:[%s169 + $0xd8] sm:$0xff]
      %v205 = vld [vmem:[%s169 + $0xe0] sm:$0xff]
      %v206 = vld [vmem:[%s169 + $0xe8] sm:$0xff]
      %v207 = vld [vmem:[%s169 + $0xf0] sm:$0xff]
      %v208 = vld [vmem:[%s169 + $0xf8] sm:$0xff]
      %v209 = vld [vmem:[%s169 + $0x100] sm:$0xff]
      %v210 = vld [vmem:[%s169 + $0x108] sm:$0xff]
      %v211 = vld [vmem:[%s169 + $0x110] sm:$0xff]
      %v212 = vld [vmem:[%s169 + $0x118] sm:$0xff]
      %v213 = vld [vmem:[%s169 + $0x120] sm:$0xff]
      %v214 = vld [vmem:[%s169 + $0x128] sm:$0xff]
      %v215 = vld [vmem:[%s169 + $0x130] sm:$0xff]
      %v216 = vld [vmem:[%s169 + $0x138] sm:$0xff]
      %v217 = vld [vmem:[%s169 + $0x140] sm:$0xff]
      %v218 = vld [vmem:[%s169 + $0x148] sm:$0xff]
      %v219 = vld [vmem:[%s169 + $0x150] sm:$0xff]
      %v220 = vld [vmem:[%s169 + $0x158] sm:$0xff]
      %v221 = vld [vmem:[%s169 + $0x160] sm:$0xff]
      %v222 = vld [vmem:[%s169 + $0x168] sm:$0xff]
      %v223 = vld [vmem:[%s169 + $0x170] sm:$0xff]
      %v224 = vld [vmem:[%s169 + $0x178] sm:$0xff]
      %v225 = vld [vmem:[%s169 + $0x180] sm:$0xff]
      %v226 = vld [vmem:[%s169 + $0x188] sm:$0xff]
      %v227 = vld [vmem:[%s169 + $0x190] sm:$0xff]
      %v228 = vld [vmem:[%s169 + $0x198] sm:$0xff]
      %v229 = vld [vmem:[%s169 + $0x1a0] sm:$0xff]
      %v230 = vld [vmem:[%s169 + $0x1a8] sm:$0xff]
      %v231 = vld [vmem:[%s169 + $0x1b0] sm:$0xff]
      %v232 = vld [vmem:[%s169 + $0x1b8] sm:$0xff]
      %v233 = vld [vmem:[%s169 + $0x1c0] sm:$0xff]
      %v234 = vld [vmem:[%s169 + $0x1c8] sm:$0xff]
      %v235 = vld [vmem:[%s169 + $0x1d0] sm:$0xff]
      %v236 = vld [vmem:[%s169 + $0x1d8] sm:$0xff]
      %v237 = vld [vmem:[%s169 + $0x1e0] sm:$0xff]
      %v238 = vld [vmem:[%s169 + $0x1e8] sm:$0xff]
      %v239 = vld [vmem:[%s169 + $0x1f0] sm:$0xff]
      %v240 = vld [vmem:[%s169 + $0x1f8] sm:$0xff]
      %v241 = vld [vmem:[%s169 + $0x200] sm:$0xff]
      %v242 = vld [vmem:[%s169 + $0x208] sm:$0xff]
      %v243 = vld [vmem:[%s169 + $0x210] sm:$0xff]
      %v244 = vld [vmem:[%s169 + $0x218] sm:$0xff]
      %v245 = vld [vmem:[%s169 + $0x220] sm:$0xff]
      %v246 = vld [vmem:[%s169 + $0x228] sm:$0xff]
      %v247 = vld [vmem:[%s169 + $0x230] sm:$0xff]
      %v248 = vld [vmem:[%s169 + $0x238] sm:$0xff]
      %v249 = vld [vmem:[%s169 + $0x240] sm:$0xff]
      %v250 = vld [vmem:[%s169 + $0x248] sm:$0xff]
      %v251 = vld [vmem:[%s169 + $0x250] sm:$0xff]
      %v252 = vld [vmem:[%s169 + $0x258] sm:$0xff]
      %v253 = vld [vmem:[%s169 + $0x260] sm:$0xff]
      %v254 = vld [vmem:[%s169 + $0x268] sm:$0xff]
      %v255 = vld [vmem:[%s169 + $0x270] sm:$0xff]
      %v256 = vld [vmem:[%s169 + $0x278] sm:$0xff]
      %v257 = vld [vmem:[%s169 + $0x280] sm:$0xff]
      %v258 = vld [vmem:[%s169 + $0x288] sm:$0xff]
      %v259 = vld [vmem:[%s169 + $0x290] sm:$0xff]
      %v260 = vld [vmem:[%s169 + $0x298] sm:$0xff]
      %v261 = vld [vmem:[%s169 + $0x2a0] sm:$0xff]
      %v262 = vld [vmem:[%s169 + $0x2a8] sm:$0xff]
      %v263 = vld [vmem:[%s169 + $0x2b0] sm:$0xff]
      %v264 = vld [vmem:[%s169 + $0x2b8] sm:$0xff]
      %v265 = vld [vmem:[%s169 + $0x2c0] sm:$0xff]
      %v266 = vld [vmem:[%s169 + $0x2c8] sm:$0xff]
      %v267 = vld [vmem:[%s169 + $0x2d0] sm:$0xff]
      %v268 = vld [vmem:[%s169 + $0x2d8] sm:$0xff]
      %v269 = vld [vmem:[%s169 + $0x2e0] sm:$0xff]
      %v270 = vld [vmem:[%s169 + $0x2e8] sm:$0xff]
      %v271 = vld [vmem:[%s169 + $0x2f0] sm:$0xff]
      %v272 = vld [vmem:[%s169 + $0x2f8] sm:$0xff]
      %v273 = vld [vmem:[%s169 + $0x300] sm:$0xff]
      %v274 = vld [vmem:[%s169 + $0x308] sm:$0xff]
      %v275 = vld [vmem:[%s169 + $0x310] sm:$0xff]
      %v276 = vld [vmem:[%s169 + $0x318] sm:$0xff]
      %v277 = vld [vmem:[%s169 + $0x320] sm:$0xff]
      %v278 = vld [vmem:[%s169 + $0x328] sm:$0xff]
      %v279 = vld [vmem:[%s169 + $0x330] sm:$0xff]
      %v280 = vld [vmem:[%s169 + $0x338] sm:$0xff]
      %v281 = vld [vmem:[%s169 + $0x340] sm:$0xff]
      %v282 = vld [vmem:[%s169 + $0x348] sm:$0xff]
      %v283 = vld [vmem:[%s169 + $0x350] sm:$0xff]
      %v284 = vld [vmem:[%s169 + $0x358] sm:$0xff]
      %v285 = vld [vmem:[%s169 + $0x360] sm:$0xff]
      %v286 = vld [vmem:[%s169 + $0x368] sm:$0xff]
      %v287 = vld [vmem:[%s169 + $0x370] sm:$0xff]
      %v288 = vld [vmem:[%s169 + $0x378] sm:$0xff]
      %v289 = vld [vmem:[%s169 + $0x380] sm:$0xff]
      %v290 = vld [vmem:[%s169 + $0x388] sm:$0xff]
      %v291 = vld [vmem:[%s169 + $0x390] sm:$0xff]
      %v292 = vld [vmem:[%s169 + $0x398] sm:$0xff]
      %v293 = vld [vmem:[%s169 + $0x3a0] sm:$0xff]
      %v294 = vld [vmem:[%s169 + $0x3a8] sm:$0xff]
      %v295 = vld [vmem:[%s169 + $0x3b0] sm:$0xff]
      %v296 = vld [vmem:[%s169 + $0x3b8] sm:$0xff]
      %v297 = vld [vmem:[%s1] sm:$0xff]
      %v298 = vld [vmem:[%s1 + $0x8] sm:$0xff]
      %v299 = vld [vmem:[%s1 + $0x10] sm:$0xff]
      %v300 = vld [vmem:[%s1 + $0x18] sm:$0xff]
      %v301 = vld [vmem:[%s1 + $0x20] sm:$0xff]
      %v302 = vld [vmem:[%s1 + $0x28] sm:$0xff]
      %v303 = vld [vmem:[%s1 + $0x30] sm:$0xff]
      %v304 = vld [vmem:[%s1 + $0x38] sm:$0xff]
      %v305 = vld [vmem:[%s1 + $0x40] sm:$0xff]
      %v306 = vld [vmem:[%s1 + $0x48] sm:$0xff]
      %v307 = vld [vmem:[%s1 + $0x50] sm:$0xff]
      %v308 = vld [vmem:[%s1 + $0x58] sm:$0xff]
      %v309 = vld [vmem:[%s1 + $0x60] sm:$0xff]
      %v310 = vld [vmem:[%s1 + $0x68] sm:$0xff]
      %v311 = vld [vmem:[%s1 + $0x70] sm:$0xff]
      %v312 = vld [vmem:[%s1 + $0x78] sm:$0xff]
      %v313 = vld [vmem:[%s1 + $0x80] sm:$0xff]
      %v314 = vld [vmem:[%s1 + $0x88] sm:$0xff]
      %v315 = vld [vmem:[%s1 + $0x90] sm:$0xff]
      %v316 = vld [vmem:[%s1 + $0x98] sm:$0xff]
      %v317 = vld [vmem:[%s1 + $0xa0] sm:$0xff]
      %v318 = vld [vmem:[%s1 + $0xa8] sm:$0xff]
      %v319 = vld [vmem:[%s1 + $0xb0] sm:$0xff]
      %v320 = vld [vmem:[%s1 + $0xb8] sm:$0xff]
      %v321 = vld [vmem:[%s1 + $0xc0] sm:$0xff]
      %v322 = vld [vmem:[%s1 + $0xc8] sm:$0xff]
      %v323 = vld [vmem:[%s1 + $0xd0] sm:$0xff]
      %v324 = vld [vmem:[%s1 + $0xd8] sm:$0xff]
      %v325 = vld [vmem:[%s1 + $0xe0] sm:$0xff]
      %v326 = vld [vmem:[%s1 + $0xe8] sm:$0xff]
      %v327 = vld [vmem:[%s1 + $0xf0] sm:$0xff]
      %v328 = vld [vmem:[%s1 + $0xf8] sm:$0xff]
      %v329 = vld [vmem:[%s1 + $0x100] sm:$0xff]
      %v330 = vld [vmem:[%s1 + $0x108] sm:$0xff]
      %v331 = vld [vmem:[%s1 + $0x110] sm:$0xff]
      %v332 = vld [vmem:[%s1 + $0x118] sm:$0xff]
      %v333 = vld [vmem:[%s2] sm:$0x1]
      %v335 = vlaneseq
      %v336 = vshrl.u32 %v335, 7
      %v337 = vsub.s32 0, %v336
      %v338 = vrot.slane %v333, %v337
      %vm340 = vcmask 261120
      %v342 = vsel %vm340, %v179, 0
      %v345 = vsel %vm340, %v182, 0
      %v348 = vsel %vm340, %v185, 0
      %v351 = vsel %vm340, %v188, 0
      %v354 = vsel %vm340, %v191, 0
      %v357 = vsel %vm340, %v194, 0
      %v360 = vsel %vm340, %v197, 0
      %v363 = vsel %vm340, %v200, 0
      %v366 = vsel %vm340, %v203, 0
      %v369 = vsel %vm340, %v206, 0
      %v372 = vsel %vm340, %v209, 0
      %v375 = vsel %vm340, %v212, 0
      %v378 = vsel %vm340, %v215, 0
      %v381 = vsel %vm340, %v218, 0
      %v384 = vsel %vm340, %v221, 0
      %v387 = vsel %vm340, %v224, 0
      %v390 = vsel %vm340, %v227, 0
      %v393 = vsel %vm340, %v230, 0
      %v396 = vsel %vm340, %v233, 0
      %v399 = vsel %vm340, %v236, 0
      %v402 = vsel %vm340, %v239, 0
      %v405 = vsel %vm340, %v242, 0
      %v408 = vsel %vm340, %v245, 0
      %v411 = vsel %vm340, %v248, 0
      %v414 = vsel %vm340, %v251, 0
      %v417 = vsel %vm340, %v254, 0
      %v420 = vsel %vm340, %v257, 0
      %v423 = vsel %vm340, %v260, 0
      %v426 = vsel %vm340, %v263, 0
      %v429 = vsel %vm340, %v266, 0
      %v432 = vsel %vm340, %v269, 0
      %v435 = vsel %vm340, %v272, 0
      %v438 = vsel %vm340, %v275, 0
      %v441 = vsel %vm340, %v278, 0
      %v444 = vsel %vm340, %v281, 0
      %v447 = vsel %vm340, %v284, 0
      %v450 = vsel %vm340, %v287, 0
      %v453 = vsel %vm340, %v290, 0
      %v456 = vsel %vm340, %v293, 0
      %v459 = vsel %vm340, %v296, 0
      %461 = vmatprep.subr.mxu0 0.0
      %462 = vmatpush1.msra.mxu0 %v312
      %463 = vmatprep.subr.mxu0 0.0
      %464 = vmatpush1.msra.mxu0 %v311
      %465 = vmatprep.subr.mxu0 0.0
      %466 = vmatpush1.msra.mxu0 %v310
      %467 = vmatprep.subr.mxu0 0.0
      %468 = vmatpush1.msra.mxu0 %v309
      %469 = vmatprep.subr.mxu0 0.0
      %470 = vmatpush1.msra.mxu0 %v308
      %471 = vmatprep.subr.mxu0 0.0
      %472 = vmatpush1.msra.mxu0 %v307
      %473 = vmatprep.subr.mxu0 0.0
      %474 = vmatpush1.msra.mxu0 %v306
      %475 = vmatprep.subr.mxu0 0.0
      %476 = vmatpush1.msra.mxu0 %v305
      %477 = vmatprep.subr.mxu0 0.0
      %478 = vmatpush1.msra.mxu0 %v304
      %479 = vmatprep.subr.mxu0 0.0
      %480 = vmatpush1.msra.mxu0 %v303
      %481 = vmatprep.subr.mxu0 0.0
      %482 = vmatpush1.msra.mxu0 %v302
      %483 = vmatprep.subr.mxu0 0.0
      %484 = vmatpush1.msra.mxu0 %v301
      %485 = vmatprep.subr.mxu0 0.0
      %486 = vmatpush1.msra.mxu0 %v300
      %487 = vmatprep.subr.mxu0 0.0
      %488 = vmatpush1.msra.mxu0 %v299
      %489 = vmatprep.subr.mxu0 0.0
      %490 = vmatpush1.msra.mxu0 %v298
      %491 = vmatprep.subr.mxu0 0.0
      %492 = vmatpush1.msra.mxu0 %v297
      %493 = vmatprep.subr.mxu0 0.0
      %494 = vmatpush2.msra.mxu0 %v328
      %495 = vmatprep.subr.mxu0 0.0
      %496 = vmatpush2.msra.mxu0 %v327
      %497 = vmatprep.subr.mxu0 0.0
      %498 = vmatpush2.msra.mxu0 %v326
      %499 = vmatprep.subr.mxu0 0.0
      %500 = vmatpush2.msra.mxu0 %v325
      %501 = vmatprep.subr.mxu0 0.0
      %502 = vmatpush2.msra.mxu0 %v324
      %503 = vmatprep.subr.mxu0 0.0
      %504 = vmatpush2.msra.mxu0 %v323
      %505 = vmatprep.subr.mxu0 0.0
      %506 = vmatpush2.msra.mxu0 %v322
      %507 = vmatprep.subr.mxu0 0.0
      %508 = vmatpush2.msra.mxu0 %v321
      %509 = vmatprep.subr.mxu0 0.0
      %510 = vmatpush2.msra.mxu0 %v320
      %511 = vmatprep.subr.mxu0 0.0
      %512 = vmatpush2.msra.mxu0 %v319
      %513 = vmatprep.subr.mxu0 0.0
      %514 = vmatpush2.msra.mxu0 %v318
      %515 = vmatprep.subr.mxu0 0.0
      %516 = vmatpush2.msra.mxu0 %v317
      %517 = vmatprep.subr.mxu0 0.0
      %518 = vmatpush2.msra.mxu0 %v316
      %519 = vmatprep.subr.mxu0 0.0
      %520 = vmatpush2.msra.mxu0 %v315
      %521 = vmatprep.subr.mxu0 0.0
      %522 = vmatpush2.msra.mxu0 %v314
      %523 = vmatprep.subr.mxu0 0.0
      %524 = vmatpush2.msra.mxu0 %v313
      %525 = vmatprep.mubr.f32.mxu0 %v178
      %526 = vmatmul.mubr.f32.gmra.mxu0 %v177
      %v527 = vpop.f32.mrf.mxu0
      %v528 = vadd.f32 %v338, %v527
      %v529 = vpop.f32.mrf.mxu0
      %530 = vmatprep.mubr.f32.mxu0 %v181
      %531 = vmatmul.mubr.f32.gmra.mxu0 %v180
      %v532 = vpop.f32.mrf.mxu0
      %v533 = vadd.f32 %v338, %v532
      %v534 = vpop.f32.mrf.mxu0
      %535 = vmatprep.mubr.f32.mxu0 %v184
      %536 = vmatmul.mubr.f32.gmra.mxu0 %v183
      %v537 = vpop.f32.mrf.mxu0
      %v538 = vadd.f32 %v338, %v537
      %v539 = vpop.f32.mrf.mxu0
      %540 = vmatprep.mubr.f32.mxu0 %v187
      %541 = vmatmul.mubr.f32.gmra.mxu0 %v186
      %v542 = vpop.f32.mrf.mxu0
      %v543 = vadd.f32 %v338, %v542
      %v544 = vpop.f32.mrf.mxu0
      %545 = vmatprep.mubr.f32.mxu0 %v190
      %546 = vmatmul.mubr.f32.gmra.mxu0 %v189
      %v547 = vpop.f32.mrf.mxu0
      %v548 = vadd.f32 %v338, %v547
      %v549 = vpop.f32.mrf.mxu0
      %550 = vmatprep.mubr.f32.mxu0 %v193
      %551 = vmatmul.mubr.f32.gmra.mxu0 %v192
      %v552 = vpop.f32.mrf.mxu0
      %v553 = vadd.f32 %v338, %v552
      %v554 = vpop.f32.mrf.mxu0
      %555 = vmatprep.mubr.f32.mxu0 %v196
      %556 = vmatmul.mubr.f32.gmra.mxu0 %v195
      %v557 = vpop.f32.mrf.mxu0
      %v558 = vadd.f32 %v338, %v557
      %v559 = vpop.f32.mrf.mxu0
      %560 = vmatprep.mubr.f32.mxu0 %v199
      %561 = vmatmul.mubr.f32.gmra.mxu0 %v198
      %v562 = vpop.f32.mrf.mxu0
      %v563 = vadd.f32 %v338, %v562
      %v564 = vpop.f32.mrf.mxu0
      %565 = vmatprep.mubr.f32.mxu0 %v202
      %566 = vmatmul.mubr.f32.gmra.mxu0 %v201
      %v567 = vpop.f32.mrf.mxu0
      %v568 = vadd.f32 %v338, %v567
      %v569 = vpop.f32.mrf.mxu0
      %570 = vmatprep.mubr.f32.mxu0 %v205
      %571 = vmatmul.mubr.f32.gmra.mxu0 %v204
      %v572 = vpop.f32.mrf.mxu0
      %v573 = vadd.f32 %v338, %v572
      %v574 = vpop.f32.mrf.mxu0
      %575 = vmatprep.mubr.f32.mxu0 %v208
      %576 = vmatmul.mubr.f32.gmra.mxu0 %v207
      %v577 = vpop.f32.mrf.mxu0
      %v578 = vadd.f32 %v338, %v577
      %v579 = vpop.f32.mrf.mxu0
      %580 = vmatprep.mubr.f32.mxu0 %v211
      %581 = vmatmul.mubr.f32.gmra.mxu0 %v210
      %v582 = vpop.f32.mrf.mxu0
      %v583 = vadd.f32 %v338, %v582
      %v584 = vpop.f32.mrf.mxu0
      %585 = vmatprep.mubr.f32.mxu0 %v214
      %586 = vmatmul.mubr.f32.gmra.mxu0 %v213
      %v587 = vpop.f32.mrf.mxu0
      %v588 = vadd.f32 %v338, %v587
      %v589 = vpop.f32.mrf.mxu0
      %590 = vmatprep.mubr.f32.mxu0 %v217
      %591 = vmatmul.mubr.f32.gmra.mxu0 %v216
      %v592 = vpop.f32.mrf.mxu0
      %v593 = vadd.f32 %v338, %v592
      %v594 = vpop.f32.mrf.mxu0
      %595 = vmatprep.mubr.f32.mxu0 %v220
      %596 = vmatmul.mubr.f32.gmra.mxu0 %v219
      %v597 = vpop.f32.mrf.mxu0
      %v598 = vadd.f32 %v338, %v597
      %v599 = vpop.f32.mrf.mxu0
      %600 = vmatprep.mubr.f32.mxu0 %v223
      %601 = vmatmul.mubr.f32.gmra.mxu0 %v222
      %v602 = vpop.f32.mrf.mxu0
      %v603 = vadd.f32 %v338, %v602
      %v604 = vpop.f32.mrf.mxu0
      %605 = vmatprep.mubr.f32.mxu0 %v226
      %606 = vmatmul.mubr.f32.gmra.mxu0 %v225
      %v607 = vpop.f32.mrf.mxu0
      %v608 = vadd.f32 %v338, %v607
      %v609 = vpop.f32.mrf.mxu0
      %610 = vmatprep.mubr.f32.mxu0 %v229
      %611 = vmatmul.mubr.f32.gmra.mxu0 %v228
      %v612 = vpop.f32.mrf.mxu0
      %v613 = vadd.f32 %v338, %v612
      %v614 = vpop.f32.mrf.mxu0
      %615 = vmatprep.mubr.f32.mxu0 %v232
      %616 = vmatmul.mubr.f32.gmra.mxu0 %v231
      %v617 = vpop.f32.mrf.mxu0
      %v618 = vadd.f32 %v338, %v617
      %v619 = vpop.f32.mrf.mxu0
      %620 = vmatprep.mubr.f32.mxu0 %v235
      %621 = vmatmul.mubr.f32.gmra.mxu0 %v234
      %v622 = vpop.f32.mrf.mxu0
      %v623 = vadd.f32 %v338, %v622
      %v624 = vpop.f32.mrf.mxu0
      %625 = vmatprep.mubr.f32.mxu0 %v238
      %626 = vmatmul.mubr.f32.gmra.mxu0 %v237
      %v627 = vpop.f32.mrf.mxu0
      %v628 = vadd.f32 %v338, %v627
      %v629 = vpop.f32.mrf.mxu0
      %630 = vmatprep.mubr.f32.mxu0 %v241
      %631 = vmatmul.mubr.f32.gmra.mxu0 %v240
      %v632 = vpop.f32.mrf.mxu0
      %v633 = vadd.f32 %v338, %v632
      %v634 = vpop.f32.mrf.mxu0
      %635 = vmatprep.mubr.f32.mxu0 %v244
      %636 = vmatmul.mubr.f32.gmra.mxu0 %v243
      %v637 = vpop.f32.mrf.mxu0
      %v638 = vadd.f32 %v338, %v637
      %v639 = vpop.f32.mrf.mxu0
      %640 = vmatprep.mubr.f32.mxu0 %v247
      %641 = vmatmul.mubr.f32.gmra.mxu0 %v246
      %v642 = vpop.f32.mrf.mxu0
      %v643 = vadd.f32 %v338, %v642
      %v644 = vpop.f32.mrf.mxu0
      %645 = vmatprep.mubr.f32.mxu0 %v250
      %646 = vmatmul.mubr.f32.gmra.mxu0 %v249
      %v647 = vpop.f32.mrf.mxu0
      %v648 = vadd.f32 %v338, %v647
      %v649 = vpop.f32.mrf.mxu0
      %650 = vmatprep.mubr.f32.mxu0 %v253
      %651 = vmatmul.mubr.f32.gmra.mxu0 %v252
      %v652 = vpop.f32.mrf.mxu0
      %v653 = vadd.f32 %v338, %v652
      %v654 = vpop.f32.mrf.mxu0
      %655 = vmatprep.mubr.f32.mxu0 %v256
      %656 = vmatmul.mubr.f32.gmra.mxu0 %v255
      %v657 = vpop.f32.mrf.mxu0
      %v658 = vadd.f32 %v338, %v657
      %v659 = vpop.f32.mrf.mxu0
      %660 = vmatprep.mubr.f32.mxu0 %v259
      %661 = vmatmul.mubr.f32.gmra.mxu0 %v258
      %v662 = vpop.f32.mrf.mxu0
      %v663 = vadd.f32 %v338, %v662
      %v664 = vpop.f32.mrf.mxu0
      %665 = vmatprep.mubr.f32.mxu0 %v262
      %666 = vmatmul.mubr.f32.gmra.mxu0 %v261
      %v667 = vpop.f32.mrf.mxu0
      %v668 = vadd.f32 %v338, %v667
      %v669 = vpop.f32.mrf.mxu0
      %670 = vmatprep.mubr.f32.mxu0 %v265
      %671 = vmatmul.mubr.f32.gmra.mxu0 %v264
      %v672 = vpop.f32.mrf.mxu0
      %v673 = vadd.f32 %v338, %v672
      %v674 = vpop.f32.mrf.mxu0
      %675 = vmatprep.mubr.f32.mxu0 %v268
      %676 = vmatmul.mubr.f32.gmra.mxu0 %v267
      %v677 = vpop.f32.mrf.mxu0
      %v678 = vadd.f32 %v338, %v677
      %v679 = vpop.f32.mrf.mxu0
      %680 = vmatprep.mubr.f32.mxu0 %v271
      %681 = vmatmul.mubr.f32.gmra.mxu0 %v270
      %v682 = vpop.f32.mrf.mxu0
      %v683 = vadd.f32 %v338, %v682
      %v684 = vpop.f32.mrf.mxu0
      %685 = vmatprep.mubr.f32.mxu0 %v274
      %686 = vmatmul.mubr.f32.gmra.mxu0 %v273
      %v687 = vpop.f32.mrf.mxu0
      %v688 = vadd.f32 %v338, %v687
      %v689 = vpop.f32.mrf.mxu0
      %690 = vmatprep.mubr.f32.mxu0 %v277
      %691 = vmatmul.mubr.f32.gmra.mxu0 %v276
      %v692 = vpop.f32.mrf.mxu0
      %v693 = vadd.f32 %v338, %v692
      %v694 = vpop.f32.mrf.mxu0
      %695 = vmatprep.mubr.f32.mxu0 %v280
      %696 = vmatmul.mubr.f32.gmra.mxu0 %v279
      %v697 = vpop.f32.mrf.mxu0
      %v698 = vadd.f32 %v338, %v697
      %v699 = vpop.f32.mrf.mxu0
      %700 = vmatprep.mubr.f32.mxu0 %v283
      %701 = vmatmul.mubr.f32.gmra.mxu0 %v282
      %v702 = vpop.f32.mrf.mxu0
      %v703 = vadd.f32 %v338, %v702
      %v704 = vpop.f32.mrf.mxu0
      %705 = vmatprep.mubr.f32.mxu0 %v286
      %706 = vmatmul.mubr.f32.gmra.mxu0 %v285
      %v707 = vpop.f32.mrf.mxu0
      %v708 = vadd.f32 %v338, %v707
      %v709 = vpop.f32.mrf.mxu0
      %710 = vmatprep.mubr.f32.mxu0 %v289
      %711 = vmatmul.mubr.f32.gmra.mxu0 %v288
      %v712 = vpop.f32.mrf.mxu0
      %v713 = vadd.f32 %v338, %v712
      %v714 = vpop.f32.mrf.mxu0
      %715 = vmatprep.mubr.f32.mxu0 %v292
      %716 = vmatmul.mubr.f32.gmra.mxu0 %v291
      %v717 = vpop.f32.mrf.mxu0
      %v718 = vadd.f32 %v338, %v717
      %v719 = vpop.f32.mrf.mxu0
      %720 = vmatprep.mubr.f32.mxu0 %v295
      %721 = vmatmul.mubr.f32.gmra.mxu0 %v294
      %v722 = vpop.f32.mrf.mxu0
      %v723 = vadd.f32 %v338, %v722
      %v724 = vpop.f32.mrf.mxu0
      %725 = vdwg.mxu0
      %726 = vmatprep.subr.mxu0 0.0
      %727 = vmatpush1.msra.mxu0 0.0
      %728 = vmatprep.subr.mxu0 0.0
      %729 = vmatpush1.msra.mxu0 0.0
      %730 = vmatprep.subr.mxu0 0.0
      %731 = vmatpush1.msra.mxu0 0.0
      %732 = vmatprep.subr.mxu0 0.0
      %733 = vmatpush1.msra.mxu0 0.0
      %734 = vmatprep.subr.mxu0 0.0
      %735 = vmatpush1.msra.mxu0 0.0
      %736 = vmatprep.subr.mxu0 0.0
      %737 = vmatpush1.msra.mxu0 0.0
      %738 = vmatprep.subr.mxu0 0.0
      %739 = vmatpush1.msra.mxu0 0.0
      %740 = vmatprep.subr.mxu0 0.0
      %741 = vmatpush1.msra.mxu0 0.0
      %742 = vmatprep.subr.mxu0 0.0
      %743 = vmatpush1.msra.mxu0 0.0
      %744 = vmatprep.subr.mxu0 0.0
      %745 = vmatpush1.msra.mxu0 0.0
      %746 = vmatprep.subr.mxu0 0.0
      %747 = vmatpush1.msra.mxu0 0.0
      %748 = vmatprep.subr.mxu0 0.0
      %749 = vmatpush1.msra.mxu0 0.0
      %750 = vmatprep.subr.mxu0 0.0
      %751 = vmatpush1.msra.mxu0 %v332
      %752 = vmatprep.subr.mxu0 0.0
      %753 = vmatpush1.msra.mxu0 %v331
      %754 = vmatprep.subr.mxu0 0.0
      %755 = vmatpush1.msra.mxu0 %v330
      %756 = vmatprep.subr.mxu0 0.0
      %757 = vmatpush1.msra.mxu0 %v329
      %758 = vmatprep.subr.mxu0 0.0
      %759 = vmatpush2.msra.mxu0 0.0
      %760 = vmatprep.subr.mxu0 0.0
      %761 = vmatpush2.msra.mxu0 0.0
      %762 = vmatprep.subr.mxu0 0.0
      %763 = vmatpush2.msra.mxu0 0.0
      %764 = vmatprep.subr.mxu0 0.0
      %765 = vmatpush2.msra.mxu0 0.0
      %766 = vmatprep.subr.mxu0 0.0
      %767 = vmatpush2.msra.mxu0 0.0
      %768 = vmatprep.subr.mxu0 0.0
      %769 = vmatpush2.msra.mxu0 0.0
      %770 = vmatprep.subr.mxu0 0.0
      %771 = vmatpush2.msra.mxu0 0.0
      %772 = vmatprep.subr.mxu0 0.0
      %773 = vmatpush2.msra.mxu0 0.0
      %774 = vmatprep.subr.mxu0 0.0
      %775 = vmatpush2.msra.mxu0 0.0
      %776 = vmatprep.subr.mxu0 0.0
      %777 = vmatpush2.msra.mxu0 0.0
      %778 = vmatprep.subr.mxu0 0.0
      %779 = vmatpush2.msra.mxu0 0.0
      %780 = vmatprep.subr.mxu0 0.0
      %781 = vmatpush2.msra.mxu0 0.0
      %782 = vmatprep.subr.mxu0 0.0
      %783 = vmatpush2.msra.mxu0 0.0
      %784 = vmatprep.subr.mxu0 0.0
      %785 = vmatpush2.msra.mxu0 0.0
      %786 = vmatprep.subr.mxu0 0.0
      %787 = vmatpush2.msra.mxu0 0.0
      %788 = vmatprep.subr.mxu0 0.0
      %789 = vmatpush2.msra.mxu0 0.0
      %790 = vmatprep.mubr.f32.mxu0 0.0
      %791 = vmatmul.mubr.f32.gmra.mxu0 %v342
      %v792 = vpop.f32.mrf.mxu0
      %v793 = vadd.f32 %v528, %v792
      %v794 = vpop.f32.mrf.mxu0
      %795 = vmatprep.mubr.f32.mxu0 0.0
      %796 = vmatmul.mubr.f32.gmra.mxu0 %v345
      %v797 = vpop.f32.mrf.mxu0
      %v798 = vadd.f32 %v533, %v797
      %v799 = vpop.f32.mrf.mxu0
      %800 = vmatprep.mubr.f32.mxu0 0.0
      %801 = vmatmul.mubr.f32.gmra.mxu0 %v348
      %v802 = vpop.f32.mrf.mxu0
      %v803 = vadd.f32 %v538, %v802
      %v804 = vpop.f32.mrf.mxu0
      %805 = vmatprep.mubr.f32.mxu0 0.0
      %806 = vmatmul.mubr.f32.gmra.mxu0 %v351
      %v807 = vpop.f32.mrf.mxu0
      %v808 = vadd.f32 %v543, %v807
      %v809 = vpop.f32.mrf.mxu0
      %810 = vmatprep.mubr.f32.mxu0 0.0
      %811 = vmatmul.mubr.f32.gmra.mxu0 %v354
      %v812 = vpop.f32.mrf.mxu0
      %v813 = vadd.f32 %v548, %v812
      %v814 = vpop.f32.mrf.mxu0
      %815 = vmatprep.mubr.f32.mxu0 0.0
      %816 = vmatmul.mubr.f32.gmra.mxu0 %v357
      %v817 = vpop.f32.mrf.mxu0
      %v818 = vadd.f32 %v553, %v817
      %v819 = vpop.f32.mrf.mxu0
      %820 = vmatprep.mubr.f32.mxu0 0.0
      %821 = vmatmul.mubr.f32.gmra.mxu0 %v360
      %v822 = vpop.f32.mrf.mxu0
      %v823 = vadd.f32 %v558, %v822
      %v824 = vpop.f32.mrf.mxu0
      %825 = vmatprep.mubr.f32.mxu0 0.0
      %826 = vmatmul.mubr.f32.gmra.mxu0 %v363
      %v827 = vpop.f32.mrf.mxu0
      %v828 = vadd.f32 %v563, %v827
      %v829 = vpop.f32.mrf.mxu0
      %830 = vmatprep.mubr.f32.mxu0 0.0
      %831 = vmatmul.mubr.f32.gmra.mxu0 %v366
      %v832 = vpop.f32.mrf.mxu0
      %v833 = vadd.f32 %v568, %v832
      %v834 = vpop.f32.mrf.mxu0
      %835 = vmatprep.mubr.f32.mxu0 0.0
      %836 = vmatmul.mubr.f32.gmra.mxu0 %v369
      %v837 = vpop.f32.mrf.mxu0
      %v838 = vadd.f32 %v573, %v837
      %v839 = vpop.f32.mrf.mxu0
      %840 = vmatprep.mubr.f32.mxu0 0.0
      %841 = vmatmul.mubr.f32.gmra.mxu0 %v372
      %v842 = vpop.f32.mrf.mxu0
      %v843 = vadd.f32 %v578, %v842
      %v844 = vpop.f32.mrf.mxu0
      %845 = vmatprep.mubr.f32.mxu0 0.0
      %846 = vmatmul.mubr.f32.gmra.mxu0 %v375
      %v847 = vpop.f32.mrf.mxu0
      %v848 = vadd.f32 %v583, %v847
      %v849 = vpop.f32.mrf.mxu0
      %850 = vmatprep.mubr.f32.mxu0 0.0
      %851 = vmatmul.mubr.f32.gmra.mxu0 %v378
      %v852 = vpop.f32.mrf.mxu0
      %v853 = vadd.f32 %v588, %v852
      %v854 = vpop.f32.mrf.mxu0
      %855 = vmatprep.mubr.f32.mxu0 0.0
      %856 = vmatmul.mubr.f32.gmra.mxu0 %v381
      %v857 = vpop.f32.mrf.mxu0
      %v858 = vadd.f32 %v593, %v857
      %v859 = vpop.f32.mrf.mxu0
      %860 = vmatprep.mubr.f32.mxu0 0.0
      %861 = vmatmul.mubr.f32.gmra.mxu0 %v384
      %v862 = vpop.f32.mrf.mxu0
      %v863 = vadd.f32 %v598, %v862
      %v864 = vpop.f32.mrf.mxu0
      %865 = vmatprep.mubr.f32.mxu0 0.0
      %866 = vmatmul.mubr.f32.gmra.mxu0 %v387
      %v867 = vpop.f32.mrf.mxu0
      %v868 = vadd.f32 %v603, %v867
      %v869 = vpop.f32.mrf.mxu0
      %870 = vmatprep.mubr.f32.mxu0 0.0
      %871 = vmatmul.mubr.f32.gmra.mxu0 %v390
      %v872 = vpop.f32.mrf.mxu0
      %v873 = vadd.f32 %v608, %v872
      %v874 = vpop.f32.mrf.mxu0
      %875 = vmatprep.mubr.f32.mxu0 0.0
      %876 = vmatmul.mubr.f32.gmra.mxu0 %v393
      %v877 = vpop.f32.mrf.mxu0
      %v878 = vadd.f32 %v613, %v877
      %v879 = vpop.f32.mrf.mxu0
      %880 = vmatprep.mubr.f32.mxu0 0.0
      %881 = vmatmul.mubr.f32.gmra.mxu0 %v396
      %v882 = vpop.f32.mrf.mxu0
      %v883 = vadd.f32 %v618, %v882
      %v884 = vpop.f32.mrf.mxu0
      %885 = vmatprep.mubr.f32.mxu0 0.0
      %886 = vmatmul.mubr.f32.gmra.mxu0 %v399
      %v887 = vpop.f32.mrf.mxu0
      %v888 = vadd.f32 %v623, %v887
      %v889 = vpop.f32.mrf.mxu0
      %890 = vmatprep.mubr.f32.mxu0 0.0
      %891 = vmatmul.mubr.f32.gmra.mxu0 %v402
      %v892 = vpop.f32.mrf.mxu0
      %v893 = vadd.f32 %v628, %v892
      %v894 = vpop.f32.mrf.mxu0
      %895 = vmatprep.mubr.f32.mxu0 0.0
      %896 = vmatmul.mubr.f32.gmra.mxu0 %v405
      %v897 = vpop.f32.mrf.mxu0
      %v898 = vadd.f32 %v633, %v897
      %v899 = vpop.f32.mrf.mxu0
      %900 = vmatprep.mubr.f32.mxu0 0.0
      %901 = vmatmul.mubr.f32.gmra.mxu0 %v408
      %v902 = vpop.f32.mrf.mxu0
      %v903 = vadd.f32 %v638, %v902
      %v904 = vpop.f32.mrf.mxu0
      %905 = vmatprep.mubr.f32.mxu0 0.0
      %906 = vmatmul.mubr.f32.gmra.mxu0 %v411
      %v907 = vpop.f32.mrf.mxu0
      %v908 = vadd.f32 %v643, %v907
      %v909 = vpop.f32.mrf.mxu0
      %910 = vmatprep.mubr.f32.mxu0 0.0
      %911 = vmatmul.mubr.f32.gmra.mxu0 %v414
      %v912 = vpop.f32.mrf.mxu0
      %v913 = vadd.f32 %v648, %v912
      %v914 = vpop.f32.mrf.mxu0
      %915 = vmatprep.mubr.f32.mxu0 0.0
      %916 = vmatmul.mubr.f32.gmra.mxu0 %v417
      %v917 = vpop.f32.mrf.mxu0
      %v918 = vadd.f32 %v653, %v917
      %v919 = vpop.f32.mrf.mxu0
      %920 = vmatprep.mubr.f32.mxu0 0.0
      %921 = vmatmul.mubr.f32.gmra.mxu0 %v420
      %v922 = vpop.f32.mrf.mxu0
      %v923 = vadd.f32 %v658, %v922
      %v924 = vpop.f32.mrf.mxu0
      %925 = vmatprep.mubr.f32.mxu0 0.0
      %926 = vmatmul.mubr.f32.gmra.mxu0 %v423
      %v927 = vpop.f32.mrf.mxu0
      %v928 = vadd.f32 %v663, %v927
      %v929 = vpop.f32.mrf.mxu0
      %930 = vmatprep.mubr.f32.mxu0 0.0
      %931 = vmatmul.mubr.f32.gmra.mxu0 %v426
      %v932 = vpop.f32.mrf.mxu0
      %v933 = vadd.f32 %v668, %v932
      %v934 = vpop.f32.mrf.mxu0
      %935 = vmatprep.mubr.f32.mxu0 0.0
      %936 = vmatmul.mubr.f32.gmra.mxu0 %v429
      %v937 = vpop.f32.mrf.mxu0
      %v938 = vadd.f32 %v673, %v937
      %v939 = vpop.f32.mrf.mxu0
      %940 = vmatprep.mubr.f32.mxu0 0.0
      %941 = vmatmul.mubr.f32.gmra.mxu0 %v432
      %v942 = vpop.f32.mrf.mxu0
      %v943 = vadd.f32 %v678, %v942
      %v944 = vpop.f32.mrf.mxu0
      %945 = vmatprep.mubr.f32.mxu0 0.0
      %946 = vmatmul.mubr.f32.gmra.mxu0 %v435
      %v947 = vpop.f32.mrf.mxu0
      %v948 = vadd.f32 %v683, %v947
      %v949 = vpop.f32.mrf.mxu0
      %950 = vmatprep.mubr.f32.mxu0 0.0
      %951 = vmatmul.mubr.f32.gmra.mxu0 %v438
      %v952 = vpop.f32.mrf.mxu0
      %v953 = vadd.f32 %v688, %v952
      %v954 = vpop.f32.mrf.mxu0
      %955 = vmatprep.mubr.f32.mxu0 0.0
      %956 = vmatmul.mubr.f32.gmra.mxu0 %v441
      %v957 = vpop.f32.mrf.mxu0
      %v958 = vadd.f32 %v693, %v957
      %v959 = vpop.f32.mrf.mxu0
      %960 = vmatprep.mubr.f32.mxu0 0.0
      %961 = vmatmul.mubr.f32.gmra.mxu0 %v444
      %v962 = vpop.f32.mrf.mxu0
      %v963 = vadd.f32 %v698, %v962
      %v964 = vpop.f32.mrf.mxu0
      %965 = vmatprep.mubr.f32.mxu0 0.0
      %966 = vmatmul.mubr.f32.gmra.mxu0 %v447
      %v967 = vpop.f32.mrf.mxu0
      %v968 = vadd.f32 %v703, %v967
      %v969 = vpop.f32.mrf.mxu0
      %970 = vmatprep.mubr.f32.mxu0 0.0
      %971 = vmatmul.mubr.f32.gmra.mxu0 %v450
      %v972 = vpop.f32.mrf.mxu0
      %v973 = vadd.f32 %v708, %v972
      %v974 = vpop.f32.mrf.mxu0
      %975 = vmatprep.mubr.f32.mxu0 0.0
      %976 = vmatmul.mubr.f32.gmra.mxu0 %v453
      %v977 = vpop.f32.mrf.mxu0
      %v978 = vadd.f32 %v713, %v977
      %v979 = vpop.f32.mrf.mxu0
      %980 = vmatprep.mubr.f32.mxu0 0.0
      %981 = vmatmul.mubr.f32.gmra.mxu0 %v456
      %v982 = vpop.f32.mrf.mxu0
      %v983 = vadd.f32 %v718, %v982
      %v984 = vpop.f32.mrf.mxu0
      %985 = vmatprep.mubr.f32.mxu0 0.0
      %986 = vmatmul.mubr.f32.gmra.mxu0 %v459
      %v987 = vpop.f32.mrf.mxu0
      %v988 = vadd.f32 %v723, %v987
      %v989 = vpop.f32.mrf.mxu0
      %990 = vdwg.mxu0
      %v991 = vmul.f32 %v793, 0.5
      %v992 = vmul.f32 %v798, 0.5
      %v993 = vmul.f32 %v803, 0.5
      %v994 = vmul.f32 %v808, 0.5
      %v995 = vmul.f32 %v813, 0.5
      %v996 = vmul.f32 %v818, 0.5
      %v997 = vmul.f32 %v823, 0.5
      %v998 = vmul.f32 %v828, 0.5
      %v999 = vmul.f32 %v833, 0.5
      %v1000 = vmul.f32 %v838, 0.5
      %v1001 = vmul.f32 %v843, 0.5
      %v1002 = vmul.f32 %v848, 0.5
      %v1003 = vmul.f32 %v853, 0.5
      %v1004 = vmul.f32 %v858, 0.5
      %v1005 = vmul.f32 %v863, 0.5
      %v1006 = vmul.f32 %v868, 0.5
      %v1007 = vmul.f32 %v873, 0.5
      %v1008 = vmul.f32 %v878, 0.5
      %v1009 = vmul.f32 %v883, 0.5
      %v1010 = vmul.f32 %v888, 0.5
      %v1011 = vmul.f32 %v893, 0.5
      %v1012 = vmul.f32 %v898, 0.5
      %v1013 = vmul.f32 %v903, 0.5
      %v1014 = vmul.f32 %v908, 0.5
      %v1015 = vmul.f32 %v913, 0.5
      %v1016 = vmul.f32 %v918, 0.5
      %v1017 = vmul.f32 %v923, 0.5
      %v1018 = vmul.f32 %v928, 0.5
      %v1019 = vmul.f32 %v933, 0.5
      %v1020 = vmul.f32 %v938, 0.5
      %v1021 = vmul.f32 %v943, 0.5
      %v1022 = vmul.f32 %v948, 0.5
      %v1023 = vmul.f32 %v953, 0.5
      %v1024 = vmul.f32 %v958, 0.5
      %v1025 = vmul.f32 %v963, 0.5
      %v1026 = vmul.f32 %v968, 0.5
      %v1027 = vmul.f32 %v973, 0.5
      %v1028 = vmul.f32 %v978, 0.5
      %v1029 = vmul.f32 %v983, 0.5
      %v1030 = vmul.f32 %v988, 0.5
      %v1031 = vmul.f32 %v793, 0.70710677
      %v1032 = vmul.f32 %v798, 0.70710677
      %v1033 = vmul.f32 %v803, 0.70710677
      %v1034 = vmul.f32 %v808, 0.70710677
      %v1035 = vmul.f32 %v813, 0.70710677
      %v1036 = vmul.f32 %v818, 0.70710677
      %v1037 = vmul.f32 %v823, 0.70710677
      %v1038 = vmul.f32 %v828, 0.70710677
      %v1039 = vmul.f32 %v833, 0.70710677
      %v1040 = vmul.f32 %v838, 0.70710677
      %v1041 = vmul.f32 %v843, 0.70710677
      %v1042 = vmul.f32 %v848, 0.70710677
      %v1043 = vmul.f32 %v853, 0.70710677
      %v1044 = vmul.f32 %v858, 0.70710677
      %v1045 = vmul.f32 %v863, 0.70710677
      %v1046 = vmul.f32 %v868, 0.70710677
      %v1047 = vmul.f32 %v873, 0.70710677
      %v1048 = vmul.f32 %v878, 0.70710677
      %v1049 = vmul.f32 %v883, 0.70710677
      %v1050 = vmul.f32 %v888, 0.70710677
      %v1051 = vmul.f32 %v893, 0.70710677
      %v1052 = vmul.f32 %v898, 0.70710677
      %v1053 = vmul.f32 %v903, 0.70710677
      %v1054 = vmul.f32 %v908, 0.70710677
      %v1055 = vmul.f32 %v913, 0.70710677
      %v1056 = vmul.f32 %v918, 0.70710677
      %v1057 = vmul.f32 %v923, 0.70710677
      %v1058 = vmul.f32 %v928, 0.70710677
      %v1059 = vmul.f32 %v933, 0.70710677
      %v1060 = vmul.f32 %v938, 0.70710677
      %v1061 = vmul.f32 %v943, 0.70710677
      %v1062 = vmul.f32 %v948, 0.70710677
      %v1063 = vmul.f32 %v953, 0.70710677
      %v1064 = vmul.f32 %v958, 0.70710677
      %v1065 = vmul.f32 %v963, 0.70710677
      %v1066 = vmul.f32 %v968, 0.70710677
      %v1067 = vmul.f32 %v973, 0.70710677
      %v1068 = vmul.f32 %v978, 0.70710677
      %v1069 = vmul.f32 %v983, 0.70710677
      %v1070 = vmul.f32 %v988, 0.70710677
      %v1071 = verf.f32.pop %v1031
      %v1072 = verf.f32.pop %v1032
      %v1073 = verf.f32.pop %v1033
      %v1074 = verf.f32.pop %v1034
      %v1075 = verf.f32.pop %v1035
      %v1076 = verf.f32.pop %v1036
      %v1077 = verf.f32.pop %v1037
      %v1078 = verf.f32.pop %v1038
      %v1079 = verf.f32.pop %v1039
      %v1080 = verf.f32.pop %v1040
      %v1081 = verf.f32.pop %v1041
      %v1082 = verf.f32.pop %v1042
      %v1083 = verf.f32.pop %v1043
      %v1084 = verf.f32.pop %v1044
      %v1085 = verf.f32.pop %v1045
      %v1086 = verf.f32.pop %v1046
      %v1087 = verf.f32.pop %v1047
      %v1088 = verf.f32.pop %v1048
      %v1089 = verf.f32.pop %v1049
      %v1090 = verf.f32.pop %v1050
      %v1091 = verf.f32.pop %v1051
      %v1092 = verf.f32.pop %v1052
      %v1093 = verf.f32.pop %v1053
      %v1094 = verf.f32.pop %v1054
      %v1095 = verf.f32.pop %v1055
      %v1096 = verf.f32.pop %v1056
      %v1097 = verf.f32.pop %v1057
      %v1098 = verf.f32.pop %v1058
      %v1099 = verf.f32.pop %v1059
      %v1100 = verf.f32.pop %v1060
      %v1101 = verf.f32.pop %v1061
      %v1102 = verf.f32.pop %v1062
      %v1103 = verf.f32.pop %v1063
      %v1104 = verf.f32.pop %v1064
      %v1105 = verf.f32.pop %v1065
      %v1106 = verf.f32.pop %v1066
      %v1107 = verf.f32.pop %v1067
      %v1108 = verf.f32.pop %v1068
      %v1109 = verf.f32.pop %v1069
      %v1110 = verf.f32.pop %v1070
      %v1111 = vadd.f32 %v1071, 1.0
      %v1112 = vadd.f32 %v1072, 1.0
      %v1113 = vadd.f32 %v1073, 1.0
      %v1114 = vadd.f32 %v1074, 1.0
      %v1115 = vadd.f32 %v1075, 1.0
      %v1116 = vadd.f32 %v1076, 1.0
      %v1117 = vadd.f32 %v1077, 1.0
      %v1118 = vadd.f32 %v1078, 1.0
      %v1119 = vadd.f32 %v1079, 1.0
      %v1120 = vadd.f32 %v1080, 1.0
      %v1121 = vadd.f32 %v1081, 1.0
      %v1122 = vadd.f32 %v1082, 1.0
      %v1123 = vadd.f32 %v1083, 1.0
      %v1124 = vadd.f32 %v1084, 1.0
      %v1125 = vadd.f32 %v1085, 1.0
      %v1126 = vadd.f32 %v1086, 1.0
      %v1127 = vadd.f32 %v1087, 1.0
      %v1128 = vadd.f32 %v1088, 1.0
      %v1129 = vadd.f32 %v1089, 1.0
      %v1130 = vadd.f32 %v1090, 1.0
      %v1131 = vadd.f32 %v1091, 1.0
      %v1132 = vadd.f32 %v1092, 1.0
      %v1133 = vadd.f32 %v1093, 1.0
      %v1134 = vadd.f32 %v1094, 1.0
      %v1135 = vadd.f32 %v1095, 1.0
      %v1136 = vadd.f32 %v1096, 1.0
      %v1137 = vadd.f32 %v1097, 1.0
      %v1138 = vadd.f32 %v1098, 1.0
      %v1139 = vadd.f32 %v1099, 1.0
      %v1140 = vadd.f32 %v1100, 1.0
      %v1141 = vadd.f32 %v1101, 1.0
      %v1142 = vadd.f32 %v1102, 1.0
      %v1143 = vadd.f32 %v1103, 1.0
      %v1144 = vadd.f32 %v1104, 1.0
      %v1145 = vadd.f32 %v1105, 1.0
      %v1146 = vadd.f32 %v1106, 1.0
      %v1147 = vadd.f32 %v1107, 1.0
      %v1148 = vadd.f32 %v1108, 1.0
      %v1149 = vadd.f32 %v1109, 1.0
      %v1150 = vadd.f32 %v1110, 1.0
      %v1151 = vmul.f32 %v991, %v1111
      %v1152 = vmul.f32 %v992, %v1112
      %v1153 = vmul.f32 %v993, %v1113
      %v1154 = vmul.f32 %v994, %v1114
      %v1155 = vmul.f32 %v995, %v1115
      %v1156 = vmul.f32 %v996, %v1116
      %v1157 = vmul.f32 %v997, %v1117
      %v1158 = vmul.f32 %v998, %v1118
      %v1159 = vmul.f32 %v999, %v1119
      %v1160 = vmul.f32 %v1000, %v1120
      %v1161 = vmul.f32 %v1001, %v1121
      %v1162 = vmul.f32 %v1002, %v1122
      %v1163 = vmul.f32 %v1003, %v1123
      %v1164 = vmul.f32 %v1004, %v1124
      %v1165 = vmul.f32 %v1005, %v1125
      %v1166 = vmul.f32 %v1006, %v1126
      %v1167 = vmul.f32 %v1007, %v1127
      %v1168 = vmul.f32 %v1008, %v1128
      %v1169 = vmul.f32 %v1009, %v1129
      %v1170 = vmul.f32 %v1010, %v1130
      %v1171 = vmul.f32 %v1011, %v1131
      %v1172 = vmul.f32 %v1012, %v1132
      %v1173 = vmul.f32 %v1013, %v1133
      %v1174 = vmul.f32 %v1014, %v1134
      %v1175 = vmul.f32 %v1015, %v1135
      %v1176 = vmul.f32 %v1016, %v1136
      %v1177 = vmul.f32 %v1017, %v1137
      %v1178 = vmul.f32 %v1018, %v1138
      %v1179 = vmul.f32 %v1019, %v1139
      %v1180 = vmul.f32 %v1020, %v1140
      %v1181 = vmul.f32 %v1021, %v1141
      %v1182 = vmul.f32 %v1022, %v1142
      %v1183 = vmul.f32 %v1023, %v1143
      %v1184 = vmul.f32 %v1024, %v1144
      %v1185 = vmul.f32 %v1025, %v1145
      %v1186 = vmul.f32 %v1026, %v1146
      %v1187 = vmul.f32 %v1027, %v1147
      %v1188 = vmul.f32 %v1028, %v1148
      %v1189 = vmul.f32 %v1029, %v1149
      %v1190 = vmul.f32 %v1030, %v1150
      %vm1191 = vcmask 523264
      %1192 = vst.msk [vmem:[%s175] sm:$0xff] %vm1191, %v1151
      %1193 = vst.msk [vmem:[%s175 + $0x8] sm:$0xff] %vm1191, %v1152
      %1194 = vst.msk [vmem:[%s175 + $0x10] sm:$0xff] %vm1191, %v1153
      %1195 = vst.msk [vmem:[%s175 + $0x18] sm:$0xff] %vm1191, %v1154
      %1196 = vst.msk [vmem:[%s175 + $0x20] sm:$0xff] %vm1191, %v1155
      %1197 = vst.msk [vmem:[%s175 + $0x28] sm:$0xff] %vm1191, %v1156
      %1198 = vst.msk [vmem:[%s175 + $0x30] sm:$0xff] %vm1191, %v1157
      %1199 = vst.msk [vmem:[%s175 + $0x38] sm:$0xff] %vm1191, %v1158
      %1200 = vst.msk [vmem:[%s175 + $0x40] sm:$0xff] %vm1191, %v1159
      %1201 = vst.msk [vmem:[%s175 + $0x48] sm:$0xff] %vm1191, %v1160
      %1202 = vst.msk [vmem:[%s175 + $0x50] sm:$0xff] %vm1191, %v1161
      %1203 = vst.msk [vmem:[%s175 + $0x58] sm:$0xff] %vm1191, %v1162
      %1204 = vst.msk [vmem:[%s175 + $0x60] sm:$0xff] %vm1191, %v1163
      %1205 = vst.msk [vmem:[%s175 + $0x68] sm:$0xff] %vm1191, %v1164
      %1206 = vst.msk [vmem:[%s175 + $0x70] sm:$0xff] %vm1191, %v1165
      %1207 = vst.msk [vmem:[%s175 + $0x78] sm:$0xff] %vm1191, %v1166
      %1208 = vst.msk [vmem:[%s175 + $0x80] sm:$0xff] %vm1191, %v1167
      %1209 = vst.msk [vmem:[%s175 + $0x88] sm:$0xff] %vm1191, %v1168
      %1210 = vst.msk [vmem:[%s175 + $0x90] sm:$0xff] %vm1191, %v1169
      %1211 = vst.msk [vmem:[%s175 + $0x98] sm:$0xff] %vm1191, %v1170
      %1212 = vst.msk [vmem:[%s175 + $0xa0] sm:$0xff] %vm1191, %v1171
      %1213 = vst.msk [vmem:[%s175 + $0xa8] sm:$0xff] %vm1191, %v1172
      %1214 = vst.msk [vmem:[%s175 + $0xb0] sm:$0xff] %vm1191, %v1173
      %1215 = vst.msk [vmem:[%s175 + $0xb8] sm:$0xff] %vm1191, %v1174
      %1216 = vst.msk [vmem:[%s175 + $0xc0] sm:$0xff] %vm1191, %v1175
      %1217 = vst.msk [vmem:[%s175 + $0xc8] sm:$0xff] %vm1191, %v1176
      %1218 = vst.msk [vmem:[%s175 + $0xd0] sm:$0xff] %vm1191, %v1177
      %1219 = vst.msk [vmem:[%s175 + $0xd8] sm:$0xff] %vm1191, %v1178
      %1220 = vst.msk [vmem:[%s175 + $0xe0] sm:$0xff] %vm1191, %v1179
      %1221 = vst.msk [vmem:[%s175 + $0xe8] sm:$0xff] %vm1191, %v1180
      %1222 = vst.msk [vmem:[%s175 + $0xf0] sm:$0xff] %vm1191, %v1181
      %1223 = vst.msk [vmem:[%s175 + $0xf8] sm:$0xff] %vm1191, %v1182
      %1224 = vst.msk [vmem:[%s175 + $0x100] sm:$0xff] %vm1191, %v1183
      %1225 = vst.msk [vmem:[%s175 + $0x108] sm:$0xff] %vm1191, %v1184
      %1226 = vst.msk [vmem:[%s175 + $0x110] sm:$0xff] %vm1191, %v1185
      %1227 = vst.msk [vmem:[%s175 + $0x118] sm:$0xff] %vm1191, %v1186
      %1228 = vst.msk [vmem:[%s175 + $0x120] sm:$0xff] %vm1191, %v1187
      %1229 = vst.msk [vmem:[%s175 + $0x128] sm:$0xff] %vm1191, %v1188
      %1230 = vst.msk [vmem:[%s175 + $0x130] sm:$0xff] %vm1191, %v1189
      %1231 = vst.msk [vmem:[%s175 + $0x138] sm:$0xff] %vm1191, %v1190
      %s1232 = smul.u32 40, %s14
      %p1233 = scmp.lt.s32.totalorder %s1232, 159
      %s1234 = scalar_select %p1233, %s1232, 159
      %s1235 = smul.addr %s1234, 8
      %s1236 = scalar_lea.vmem %s3, %s1235
      // Predicated region
      $region33: #{cnn_block_encoder.5} parent=31 // pred_check
        %p1237 = pneg %p100
      $region34: #{cnn_block_encoder.5} parent=31 // pred_check_branch
        %1239 = sbr.rel (%p1237) target = $region36
      $region35: #{cnn_block_encoder.5} parent=31 // pred_region
        %s1240 = smul.u32 40, %s14
      $region36: #{cnn_block_encoder.5} parent=31 // pred_fallthru
        _
    $region32: #{cnn_block_encoder.5} parent=5 // pred_fallthru
      _
    %p1241 = scmp.le.s32.totalorder 2, %s9
    // Predicated region
    $region37: #{cnn_block_encoder.5} parent=5 // pred_check
      %p1242 = pneg %p1241
    $region38: #{cnn_block_encoder.5} parent=5 // pred_check_branch
      %1244 = sbr.rel (%p1242) target = $region40
    $region39: #{cnn_block_encoder.5} parent=5 // pred_region
      %s1245 = ssub.s32 %s9, 2
      // Predicated region
      $region41: #{cnn_block_encoder.5} parent=39 // pred_check
        %p1246 = pneg %p106
      $region42: #{cnn_block_encoder.5} parent=39 // pred_check_branch
        %1248 = sbr.rel (%p1246) target = $region44
      $region43: #{cnn_block_encoder.5} parent=39 // pred_region
        %s1249 = smul.u32 40, %s15
        %p1250 = scmp.lt.s32.totalorder %s1249, 159
        %s1251 = scalar_select %p1250, %s1249, 159
        %s1252 = smul.addr %s1251, 8
        %s1253 = scalar_lea.vmem %s3, %s1252
      $region44: #{cnn_block_encoder.5} parent=39 // pred_fallthru
        _
    $region40: #{cnn_block_encoder.5} parent=5 // pred_fallthru
      _
  $region6: #{cnn_block_encoder.5} parent=0 // loop_footer
    %s13 = sadd.s32 1, %s9
  $region7: #{cnn_block_encoder.5} parent=0 // loop_footer_branch
    %8 = sbr.rel target = $region3
  $region8: #{cnn_block_encoder.5} parent=0 // loop_exit
    _

// kernel: cnn_block_encoder.6
$region0: #{cnn_block_encoder.6}
  #allocation0 [shape = 'u32[]', space=smem, size = 0x4, offset = 0x4, fixed_abs, tag = 'smem constant byte address 0x4 - core index']
  #allocation1 [shape = 'u32[144,128]{1,0:T(1,128)}', space=vmem, size = 0x12000, scoped, tag = 'internal scratch']
  %s0 = inlined_call_operand.vmem [shape: f32[352,576], index: 0, kind: input, shape index: {}]
  %s1 = inlined_call_operand.vmem [shape: f32[576,64], index: 1, kind: input, shape index: {}]
  %s2 = inlined_call_operand.vmem [shape: f32[1,64], index: 2, kind: input, shape index: {}]
  %s3 = inlined_call_operand.vmem [shape: f32[352,64], index: 3, kind: output, shape index: {}]
  %s4 = sld [smem:[#allocation0]]
  $region45: #{cnn_block_encoder.6} parent=0
    _
  %s6 = ssub.s32 1, %s4
  %s7 = scalar_select 0, %s6, %s4
  loop: start=0, step=1, limit=4
  $region2: #{cnn_block_encoder.6} parent=0 // loop_pre_header
    _
  $region3: #{cnn_block_encoder.6} parent=0 // loop_header
    %s9 = sphi 0, %s13
    %p10 = scmp.ge.s32.totalorder %s9, 4
    %s19 = sphi 0, %s21
    %s22 = sphi 0, %s19
    %s23 = sphi 0, %s22
    %s39 = sphi 0, %s23
    %s43 = sphi 0, %s43
    %s45 = sphi 0, %s43
    %s46 = sphi 0, %s45
    %s60 = sphi 0, %s46
    %s64 = sphi 0, %s64
    %s66 = sphi 0, %s64
    %s67 = sphi 0, %s66
    %s81 = sphi 0, %s67
    %s87 = sphi 0, %s89
    %s90 = sphi 0, %s87
    %s91 = sphi 0, %s90
    %s107 = sphi 0, %s91
  $region4: #{cnn_block_encoder.6} parent=0 // loop_header_branch
    %12 = sbr.rel (%p10) target = $region8
  $region5: #{cnn_block_encoder.6} parent=0 // loop_body
    %s14 = ssub.s32 %s9, 1
    %s15 = ssub.s32 %s9, 2
    %s16 = sadd.s32 %s9, 1
    %s17 = ssub.s32 %s9, %s16
    %p18 = scmp.eq.s32.totalorder %s17, 0
    %s20 = sadd.s32 %s19, 1
    %s21 = scalar_select %p18, %s19, %s20
    %p24 = pneg %p18
    %p25 = scmp.eq.s32.totalorder %s9, 1
    %p26 = por %p24, %p25
    %p27 = scmp.ne.s32.totalorder %s19, %s22
    %p28 = scmp.eq.s32.totalorder %s9, 0
    %p29 = por %p27, %p28
    %p30 = scmp.ne.s32.totalorder %s19, %s22
    %p31 = scmp.eq.s32.totalorder %s14, 1
    %p32 = por %p30, %p31
    %p33 = scmp.ne.s32.totalorder %s22, %s23
    %p34 = scmp.eq.s32.totalorder %s14, 0
    %p35 = por %p33, %p34
    %p36 = scmp.ne.s32.totalorder %s22, %s23
    %p37 = scmp.eq.s32.totalorder %s15, 1
    %p38 = por %p36, %p37
    %p40 = scmp.ne.s32.totalorder %s23, %s39
    %p41 = scmp.eq.s32.totalorder %s15, 0
    %p42 = por %p40, %p41
    %s44 = sadd.s32 %s43, 1
    %p47 = scmp.eq.s32.totalorder %s9, 1
    %p48 = scmp.ne.s32.totalorder %s43, %s45
    %p49 = scmp.eq.s32.totalorder %s9, 0
    %p50 = por %p48, %p49
    %p51 = scmp.ne.s32.totalorder %s43, %s45
    %p52 = scmp.eq.s32.totalorder %s14, 1
    %p53 = por %p51, %p52
    %p54 = scmp.ne.s32.totalorder %s45, %s46
    %p55 = scmp.eq.s32.totalorder %s14, 0
    %p56 = por %p54, %p55
    %p57 = scmp.ne.s32.totalorder %s45, %s46
    %p58 = scmp.eq.s32.totalorder %s15, 1
    %p59 = por %p57, %p58
    %p61 = scmp.ne.s32.totalorder %s46, %s60
    %p62 = scmp.eq.s32.totalorder %s15, 0
    %p63 = por %p61, %p62
    %s65 = sadd.s32 %s64, 1
    %p68 = scmp.eq.s32.totalorder %s9, 1
    %p69 = scmp.ne.s32.totalorder %s64, %s66
    %p70 = scmp.eq.s32.totalorder %s9, 0
    %p71 = por %p69, %p70
    %p72 = scmp.ne.s32.totalorder %s64, %s66
    %p73 = scmp.eq.s32.totalorder %s14, 1
    %p74 = por %p72, %p73
    %p75 = scmp.ne.s32.totalorder %s66, %s67
    %p76 = scmp.eq.s32.totalorder %s14, 0
    %p77 = por %p75, %p76
    %p78 = scmp.ne.s32.totalorder %s66, %s67
    %p79 = scmp.eq.s32.totalorder %s15, 1
    %p80 = por %p78, %p79
    %p82 = scmp.ne.s32.totalorder %s67, %s81
    %p83 = scmp.eq.s32.totalorder %s15, 0
    %p84 = por %p82, %p83
    %s85 = ssub.s32 %s9, %s16
    %p86 = scmp.eq.s32.totalorder %s85, 0
    %s88 = sadd.s32 %s87, 1
    %s89 = scalar_select %p86, %s87, %s88
    %p92 = pneg %p86
    %p93 = scmp.eq.s32.totalorder %s9, 1
    %p94 = por %p92, %p93
    %p95 = scmp.ne.s32.totalorder %s87, %s90
    %p96 = scmp.eq.s32.totalorder %s9, 0
    %p97 = por %p95, %p96
    %p98 = scmp.ne.s32.totalorder %s87, %s90
    %p99 = scmp.eq.s32.totalorder %s14, 1
    %p100 = por %p98, %p99
    %p101 = scmp.ne.s32.totalorder %s90, %s91
    %p102 = scmp.eq.s32.totalorder %s14, 0
    %p103 = por %p101, %p102
    %p104 = scmp.ne.s32.totalorder %s90, %s91
    %p105 = scmp.eq.s32.totalorder %s15, 1
    %p106 = por %p104, %p105
    %p108 = scmp.ne.s32.totalorder %s91, %s107
    %p109 = scmp.eq.s32.totalorder %s15, 0
    %p110 = por %p108, %p109
    %p111 = scmp.le.s32.totalorder 1, %s9
    %p112 = scmp.lt.s32.totalorder %s9, 3
    %p113 = pnand %p111, %p112
    %p114 = pneg %p113
    // Predicated region
    $region9: #{cnn_block_encoder.6} parent=5 // pred_check
      _
    $region10: #{cnn_block_encoder.6} parent=5 // pred_check_branch
      %116 = sbr.rel (%p113) target = $region12
    $region11: #{cnn_block_encoder.6} parent=5 // pred_region
      %s117 = ssub.s32 %s9, 1
      // Predicated region
      $region13: #{cnn_block_encoder.6} parent=11 // pred_check
        %p118 = pneg %p56
      $region14: #{cnn_block_encoder.6} parent=11 // pred_check_branch
        %120 = sbr.rel (%p118) target = $region16
      $region15: #{cnn_block_encoder.6} parent=11 // pred_region
        _
      $region16: #{cnn_block_encoder.6} parent=11 // pred_fallthru
        _
      // Predicated region
      $region17: #{cnn_block_encoder.6} parent=11 // pred_check
        %p121 = pneg %p77
      $region18: #{cnn_block_encoder.6} parent=11 // pred_check_branch
        %123 = sbr.rel (%p121) target = $region20
      $region19: #{cnn_block_encoder.6} parent=11 // pred_region
        _
      $region20: #{cnn_block_encoder.6} parent=11 // pred_fallthru
        _
    $region12: #{cnn_block_encoder.6} parent=5 // pred_fallthru
      _
    %p124 = scmp.lt.s32.totalorder %s9, 2
    // Predicated region
    $region21: #{cnn_block_encoder.6} parent=5 // pred_check
      %p125 = pneg %p124
    $region22: #{cnn_block_encoder.6} parent=5 // pred_check_branch
      %127 = sbr.rel (%p125) target = $region24
    $region23: #{cnn_block_encoder.6} parent=5 // pred_region
      // Predicated region
      $region25: #{cnn_block_encoder.6} parent=23 // pred_check
        %p128 = pneg %p29
      $region26: #{cnn_block_encoder.6} parent=23 // pred_check_branch
        %130 = sbr.rel (%p128) target = $region28
      $region27: #{cnn_block_encoder.6} parent=23 // pred_region
        %s131 = smul.u32 22, %s9
        %p132 = scmp.lt.s32.totalorder %s131, 43
        %s133 = scalar_select %p132, %s131, 43
        %s134 = smul.addr %s133, 5
        %s135 = smul.addr %s134, 8
        %s136 = scalar_lea.vmem %s0, %s135
        %s137 = smul.u32 22, %s9
      $region28: #{cnn_block_encoder.6} parent=23 // pred_fallthru
        _
    $region24: #{cnn_block_encoder.6} parent=5 // pred_fallthru
      _
    %p138 = scmp.le.s32.totalorder 1, %s9
    %p139 = scmp.lt.s32.totalorder %s9, 3
    %p140 = pnand %p138, %p139
    %p141 = pneg %p140
    // Predicated region
    $region29: #{cnn_block_encoder.6} parent=5 // pred_check
      _
    $region30: #{cnn_block_encoder.6} parent=5 // pred_check_branch
      %143 = sbr.rel (%p140) target = $region32
    $region31: #{cnn_block_encoder.6} parent=5 // pred_region
      %s144 = ssub.s32 %s9, 1
      %s145 = smul.u32 22, %s14
      %p146 = scmp.lt.s32.totalorder %s145, 43
      %s147 = scalar_select %p146, %s145, 43
      %s148 = smul.addr %s147, 5
      %s149 = smul.addr %s148, 8
      %s150 = scalar_lea.vmem %s0, %s149
      %p151 = pneg %p35
      %p152 = pneg %p32
      %p153 = pneg %p56
      %p154 = pneg %p53
      %p155 = pneg %p77
      %p156 = pneg %p74
      %p157 = pneg %p103
      %p158 = pneg %p100
      %s159 = smul.u32 22, %s14
      %p160 = scmp.lt.s32.totalorder %s159, 43
      %s161 = scalar_select %p160, %s159, 43
      %s162 = smul.addr %s161, 8
      %s163 = scalar_lea.vmem %s3, %s162
      %s164 = smul.u32 22, %s14
      %p165 = scmp.lt.s32.totalorder %s164, 43
      %s166 = scalar_select %p165, %s164, 43
      %s167 = smul.addr %s166, 5
      %s168 = smul.addr %s167, 8
      %s169 = scalar_lea.vmem %s0, %s168
      %s170 = smul.u32 22, %s14
      %s171 = smul.u32 22, %s14
      %p172 = scmp.lt.s32.totalorder %s171, 43
      %s173 = scalar_select %p172, %s171, 43
      %s174 = smul.addr %s173, 8
      %s175 = scalar_lea.vmem %s3, %s174
      %s176 = smul.u32 22, %s14
      %v177 = vld [vmem:[%s169] sm:$0xff]
      %v178 = vld [vmem:[%s169 + $0x8] sm:$0xff]
      %v179 = vld [vmem:[%s169 + $0x10] sm:$0xff]
      %v180 = vld [vmem:[%s169 + $0x18] sm:$0xff]
      %v181 = vld [vmem:[%s169 + $0x20] sm:$0xff]
      %v182 = vld [vmem:[%s169 + $0x28] sm:$0xff]
      %v183 = vld [vmem:[%s169 + $0x30] sm:$0xff]
      %v184 = vld [vmem:[%s169 + $0x38] sm:$0xff]
      %v185 = vld [vmem:[%s169 + $0x40] sm:$0xff]
      %v186 = vld [vmem:[%s169 + $0x48] sm:$0xff]
      %v187 = vld [vmem:[%s169 + $0x50] sm:$0xff]
      %v188 = vld [vmem:[%s169 + $0x58] sm:$0xff]
      %v189 = vld [vmem:[%s169 + $0x60] sm:$0xff]
      %v190 = vld [vmem:[%s169 + $0x68] sm:$0xff]
      %v191 = vld [vmem:[%s169 + $0x70] sm:$0xff]
      %v192 = vld [vmem:[%s169 + $0x78] sm:$0xff]
      %v193 = vld [vmem:[%s169 + $0x80] sm:$0xff]
      %v194 = vld [vmem:[%s169 + $0x88] sm:$0xff]
      %v195 = vld [vmem:[%s169 + $0x90] sm:$0xff]
      %v196 = vld [vmem:[%s169 + $0x98] sm:$0xff]
      %v197 = vld [vmem:[%s169 + $0xa0] sm:$0xff]
      %v198 = vld [vmem:[%s169 + $0xa8] sm:$0xff]
      %v199 = vld [vmem:[%s169 + $0xb0] sm:$0xff]
      %v200 = vld [vmem:[%s169 + $0xb8] sm:$0xff]
      %v201 = vld [vmem:[%s169 + $0xc0] sm:$0xff]
      %v202 = vld [vmem:[%s169 + $0xc8] sm:$0xff]
      %v203 = vld [vmem:[%s169 + $0xd0] sm:$0xff]
      %v204 = vld [vmem:[%s169 + $0xd8] sm:$0xff]
      %v205 = vld [vmem:[%s169 + $0xe0] sm:$0xff]
      %v206 = vld [vmem:[%s169 + $0xe8] sm:$0xff]
      %v207 = vld [vmem:[%s169 + $0xf0] sm:$0xff]
      %v208 = vld [vmem:[%s169 + $0xf8] sm:$0xff]
      %v209 = vld [vmem:[%s169 + $0x100] sm:$0xff]
      %v210 = vld [vmem:[%s169 + $0x108] sm:$0xff]
      %v211 = vld [vmem:[%s169 + $0x110] sm:$0xff]
      %v212 = vld [vmem:[%s169 + $0x118] sm:$0xff]
      %v213 = vld [vmem:[%s169 + $0x120] sm:$0xff]
      %v214 = vld [vmem:[%s169 + $0x128] sm:$0xff]
      %v215 = vld [vmem:[%s169 + $0x130] sm:$0xff]
      %v216 = vld [vmem:[%s169 + $0x138] sm:$0xff]
      %v217 = vld [vmem:[%s169 + $0x140] sm:$0xff]
      %v218 = vld [vmem:[%s169 + $0x148] sm:$0xff]
      %v219 = vld [vmem:[%s169 + $0x150] sm:$0xff]
      %v220 = vld [vmem:[%s169 + $0x158] sm:$0xff]
      %v221 = vld [vmem:[%s169 + $0x160] sm:$0xff]
      %v222 = vld [vmem:[%s169 + $0x168] sm:$0xff]
      %v223 = vld [vmem:[%s169 + $0x170] sm:$0xff]
      %v224 = vld [vmem:[%s169 + $0x178] sm:$0xff]
      %v225 = vld [vmem:[%s169 + $0x180] sm:$0xff]
      %v226 = vld [vmem:[%s169 + $0x188] sm:$0xff]
      %v227 = vld [vmem:[%s169 + $0x190] sm:$0xff]
      %v228 = vld [vmem:[%s169 + $0x198] sm:$0xff]
      %v229 = vld [vmem:[%s169 + $0x1a0] sm:$0xff]
      %v230 = vld [vmem:[%s169 + $0x1a8] sm:$0xff]
      %v231 = vld [vmem:[%s169 + $0x1b0] sm:$0xff]
      %v232 = vld [vmem:[%s169 + $0x1b8] sm:$0xff]
      %v233 = vld [vmem:[%s169 + $0x1c0] sm:$0xff]
      %v234 = vld [vmem:[%s169 + $0x1c8] sm:$0xff]
      %v235 = vld [vmem:[%s169 + $0x1d0] sm:$0xff]
      %v236 = vld [vmem:[%s169 + $0x1d8] sm:$0xff]
      %v237 = vld [vmem:[%s169 + $0x1e0] sm:$0xff]
      %v238 = vld [vmem:[%s169 + $0x1e8] sm:$0xff]
      %v239 = vld [vmem:[%s169 + $0x1f0] sm:$0xff]
      %v240 = vld [vmem:[%s169 + $0x1f8] sm:$0xff]
      %v241 = vld [vmem:[%s169 + $0x200] sm:$0xff]
      %v242 = vld [vmem:[%s169 + $0x208] sm:$0xff]
      %v243 = vld [vmem:[%s169 + $0x210] sm:$0xff]
      %v244 = vld [vmem:[%s169 + $0x218] sm:$0xff]
      %v245 = vld [vmem:[%s169 + $0x220] sm:$0xff]
      %v246 = vld [vmem:[%s169 + $0x228] sm:$0xff]
      %v247 = vld [vmem:[%s169 + $0x230] sm:$0xff]
      %v248 = vld [vmem:[%s169 + $0x238] sm:$0xff]
      %v249 = vld [vmem:[%s169 + $0x240] sm:$0xff]
      %v250 = vld [vmem:[%s169 + $0x248] sm:$0xff]
      %v251 = vld [vmem:[%s169 + $0x250] sm:$0xff]
      %v252 = vld [vmem:[%s169 + $0x258] sm:$0xff]
      %v253 = vld [vmem:[%s169 + $0x260] sm:$0xff]
      %v254 = vld [vmem:[%s169 + $0x268] sm:$0xff]
      %v255 = vld [vmem:[%s169 + $0x270] sm:$0xff]
      %v256 = vld [vmem:[%s169 + $0x278] sm:$0xff]
      %v257 = vld [vmem:[%s169 + $0x280] sm:$0xff]
      %v258 = vld [vmem:[%s169 + $0x288] sm:$0xff]
      %v259 = vld [vmem:[%s169 + $0x290] sm:$0xff]
      %v260 = vld [vmem:[%s169 + $0x298] sm:$0xff]
      %v261 = vld [vmem:[%s169 + $0x2a0] sm:$0xff]
      %v262 = vld [vmem:[%s169 + $0x2a8] sm:$0xff]
      %v263 = vld [vmem:[%s169 + $0x2b0] sm:$0xff]
      %v264 = vld [vmem:[%s169 + $0x2b8] sm:$0xff]
      %v265 = vld [vmem:[%s169 + $0x2c0] sm:$0xff]
      %v266 = vld [vmem:[%s169 + $0x2c8] sm:$0xff]
      %v267 = vld [vmem:[%s169 + $0x2d0] sm:$0xff]
      %v268 = vld [vmem:[%s169 + $0x2d8] sm:$0xff]
      %v269 = vld [vmem:[%s169 + $0x2e0] sm:$0xff]
      %v270 = vld [vmem:[%s169 + $0x2e8] sm:$0xff]
      %v271 = vld [vmem:[%s169 + $0x2f0] sm:$0xff]
      %v272 = vld [vmem:[%s169 + $0x2f8] sm:$0xff]
      %v273 = vld [vmem:[%s169 + $0x300] sm:$0xff]
      %v274 = vld [vmem:[%s169 + $0x308] sm:$0xff]
      %v275 = vld [vmem:[%s169 + $0x310] sm:$0xff]
      %v276 = vld [vmem:[%s169 + $0x318] sm:$0xff]
      %v277 = vld [vmem:[%s169 + $0x320] sm:$0xff]
      %v278 = vld [vmem:[%s169 + $0x328] sm:$0xff]
      %v279 = vld [vmem:[%s169 + $0x330] sm:$0xff]
      %v280 = vld [vmem:[%s169 + $0x338] sm:$0xff]
      %v281 = vld [vmem:[%s169 + $0x340] sm:$0xff]
      %v282 = vld [vmem:[%s169 + $0x348] sm:$0xff]
      %v283 = vld [vmem:[%s169 + $0x350] sm:$0xff]
      %v284 = vld [vmem:[%s169 + $0x358] sm:$0xff]
      %v285 = vld [vmem:[%s169 + $0x360] sm:$0xff]
      %v286 = vld [vmem:[%s169 + $0x368] sm:$0xff]
      %v287 = vld [vmem:[%s1] sm:$0xff]
      %v288 = vld [vmem:[%s1 + $0x8] sm:$0xff]
      %v289 = vld [vmem:[%s1 + $0x10] sm:$0xff]
      %v290 = vld [vmem:[%s1 + $0x18] sm:$0xff]
      %v291 = vld [vmem:[%s1 + $0x20] sm:$0xff]
      %v292 = vld [vmem:[%s1 + $0x28] sm:$0xff]
      %v293 = vld [vmem:[%s1 + $0x30] sm:$0xff]
      %v294 = vld [vmem:[%s1 + $0x38] sm:$0xff]
      %v295 = vld [vmem:[%s1 + $0x40] sm:$0xff]
      %v296 = vld [vmem:[%s1 + $0x48] sm:$0xff]
      %v297 = vld [vmem:[%s1 + $0x50] sm:$0xff]
      %v298 = vld [vmem:[%s1 + $0x58] sm:$0xff]
      %v299 = vld [vmem:[%s1 + $0x60] sm:$0xff]
      %v300 = vld [vmem:[%s1 + $0x68] sm:$0xff]
      %v301 = vld [vmem:[%s1 + $0x70] sm:$0xff]
      %v302 = vld [vmem:[%s1 + $0x78] sm:$0xff]
      %v303 = vld [vmem:[%s1 + $0x80] sm:$0xff]
      %v304 = vld [vmem:[%s1 + $0x88] sm:$0xff]
      %v305 = vld [vmem:[%s1 + $0x90] sm:$0xff]
      %v306 = vld [vmem:[%s1 + $0x98] sm:$0xff]
      %v307 = vld [vmem:[%s1 + $0xa0] sm:$0xff]
      %v308 = vld [vmem:[%s1 + $0xa8] sm:$0xff]
      %v309 = vld [vmem:[%s1 + $0xb0] sm:$0xff]
      %v310 = vld [vmem:[%s1 + $0xb8] sm:$0xff]
      %v311 = vld [vmem:[%s1 + $0xc0] sm:$0xff]
      %v312 = vld [vmem:[%s1 + $0xc8] sm:$0xff]
      %v313 = vld [vmem:[%s1 + $0xd0] sm:$0xff]
      %v314 = vld [vmem:[%s1 + $0xd8] sm:$0xff]
      %v315 = vld [vmem:[%s1 + $0xe0] sm:$0xff]
      %v316 = vld [vmem:[%s1 + $0xe8] sm:$0xff]
      %v317 = vld [vmem:[%s1 + $0xf0] sm:$0xff]
      %v318 = vld [vmem:[%s1 + $0xf8] sm:$0xff]
      %v319 = vld [vmem:[%s1 + $0x100] sm:$0xff]
      %v320 = vld [vmem:[%s1 + $0x108] sm:$0xff]
      %v321 = vld [vmem:[%s1 + $0x110] sm:$0xff]
      %v322 = vld [vmem:[%s1 + $0x118] sm:$0xff]
      %v323 = vld [vmem:[%s1 + $0x120] sm:$0xff]
      %v324 = vld [vmem:[%s1 + $0x128] sm:$0xff]
      %v325 = vld [vmem:[%s1 + $0x130] sm:$0xff]
      %v326 = vld [vmem:[%s1 + $0x138] sm:$0xff]
      %v327 = vld [vmem:[%s1 + $0x140] sm:$0xff]
      %v328 = vld [vmem:[%s1 + $0x148] sm:$0xff]
      %v329 = vld [vmem:[%s1 + $0x150] sm:$0xff]
      %v330 = vld [vmem:[%s1 + $0x158] sm:$0xff]
      %v331 = vld [vmem:[%s1 + $0x160] sm:$0xff]
      %v332 = vld [vmem:[%s1 + $0x168] sm:$0xff]
      %v333 = vld [vmem:[%s1 + $0x170] sm:$0xff]
      %v334 = vld [vmem:[%s1 + $0x178] sm:$0xff]
      %v335 = vld [vmem:[%s1 + $0x180] sm:$0xff]
      %v336 = vld [vmem:[%s1 + $0x188] sm:$0xff]
      %v337 = vld [vmem:[%s1 + $0x190] sm:$0xff]
      %v338 = vld [vmem:[%s1 + $0x198] sm:$0xff]
      %v339 = vld [vmem:[%s1 + $0x1a0] sm:$0xff]
      %v340 = vld [vmem:[%s1 + $0x1a8] sm:$0xff]
      %v341 = vld [vmem:[%s1 + $0x1b0] sm:$0xff]
      %v342 = vld [vmem:[%s1 + $0x1b8] sm:$0xff]
      %v343 = vld [vmem:[%s1 + $0x1c0] sm:$0xff]
      %v344 = vld [vmem:[%s1 + $0x1c8] sm:$0xff]
      %v345 = vld [vmem:[%s1 + $0x1d0] sm:$0xff]
      %v346 = vld [vmem:[%s1 + $0x1d8] sm:$0xff]
      %v347 = vld [vmem:[%s1 + $0x1e0] sm:$0xff]
      %v348 = vld [vmem:[%s1 + $0x1e8] sm:$0xff]
      %v349 = vld [vmem:[%s1 + $0x1f0] sm:$0xff]
      %v350 = vld [vmem:[%s1 + $0x1f8] sm:$0xff]
      %v351 = vld [vmem:[%s1 + $0x200] sm:$0xff]
      %v352 = vld [vmem:[%s1 + $0x208] sm:$0xff]
      %v353 = vld [vmem:[%s1 + $0x210] sm:$0xff]
      %v354 = vld [vmem:[%s1 + $0x218] sm:$0xff]
      %v355 = vld [vmem:[%s1 + $0x220] sm:$0xff]
      %v356 = vld [vmem:[%s1 + $0x228] sm:$0xff]
      %v357 = vld [vmem:[%s1 + $0x230] sm:$0xff]
      %v358 = vld [vmem:[%s1 + $0x238] sm:$0xff]
      %v359 = vld [vmem:[%s2] sm:$0x1]
      %v361 = vlaneseq
      %v362 = vshrl.u32 %v361, 7
      %v363 = vsub.s32 0, %v362
      %v364 = vrot.slane %v359, %v363
      %vm366 = vcmask 523264
      %v368 = vsel %vm366, %v181, 0
      %v371 = vsel %vm366, %v186, 0
      %v374 = vsel %vm366, %v191, 0
      %v377 = vsel %vm366, %v196, 0
      %v380 = vsel %vm366, %v201, 0
      %v383 = vsel %vm366, %v206, 0
      %v386 = vsel %vm366, %v211, 0
      %v389 = vsel %vm366, %v216, 0
      %v392 = vsel %vm366, %v221, 0
      %v395 = vsel %vm366, %v226, 0
      %v398 = vsel %vm366, %v231, 0
      %v401 = vsel %vm366, %v236, 0
      %v404 = vsel %vm366, %v241, 0
      %v407 = vsel %vm366, %v246, 0
      %v410 = vsel %vm366, %v251, 0
      %v413 = vsel %vm366, %v256, 0
      %v416 = vsel %vm366, %v261, 0
      %v419 = vsel %vm366, %v266, 0
      %v422 = vsel %vm366, %v271, 0
      %v425 = vsel %vm366, %v276, 0
      %v428 = vsel %vm366, %v281, 0
      %v431 = vsel %vm366, %v286, 0
      %433 = vmatprep.subr.mxu0 0.0
      %434 = vmatpush1.msra.mxu0 %v302
      %435 = vmatprep.subr.mxu0 0.0
      %436 = vmatpush1.msra.mxu0 %v301
      %437 = vmatprep.subr.mxu0 0.0
      %438 = vmatpush1.msra.mxu0 %v300
      %439 = vmatprep.subr.mxu0 0.0
      %440 = vmatpush1.msra.mxu0 %v299
      %441 = vmatprep.subr.mxu0 0.0
      %442 = vmatpush1.msra.mxu0 %v298
      %443 = vmatprep.subr.mxu0 0.0
      %444 = vmatpush1.msra.mxu0 %v297
      %445 = vmatprep.subr.mxu0 0.0
      %446 = vmatpush1.msra.mxu0 %v296
      %447 = vmatprep.subr.mxu0 0.0
      %448 = vmatpush1.msra.mxu0 %v295
      %449 = vmatprep.subr.mxu0 0.0
      %450 = vmatpush1.msra.mxu0 %v294
      %451 = vmatprep.subr.mxu0 0.0
      %452 = vmatpush1.msra.mxu0 %v293
      %453 = vmatprep.subr.mxu0 0.0
      %454 = vmatpush1.msra.mxu0 %v292
      %455 = vmatprep.subr.mxu0 0.0
      %456 = vmatpush1.msra.mxu0 %v291
      %457 = vmatprep.subr.mxu0 0.0
      %458 = vmatpush1.msra.mxu0 %v290
      %459 = vmatprep.subr.mxu0 0.0
      %460 = vmatpush1.msra.mxu0 %v289
      %461 = vmatprep.subr.mxu0 0.0
      %462 = vmatpush1.msra.mxu0 %v288
      %463 = vmatprep.subr.mxu0 0.0
      %464 = vmatpush1.msra.mxu0 %v287
      %465 = vmatprep.subr.mxu0 0.0
      %466 = vmatpush2.msra.mxu0 %v318
      %467 = vmatprep.subr.mxu0 0.0
      %468 = vmatpush2.msra.mxu0 %v317
      %469 = vmatprep.subr.mxu0 0.0
      %470 = vmatpush2.msra.mxu0 %v316
      %471 = vmatprep.subr.mxu0 0.0
      %472 = vmatpush2.msra.mxu0 %v315
      %473 = vmatprep.subr.mxu0 0.0
      %474 = vmatpush2.msra.mxu0 %v314
      %475 = vmatprep.subr.mxu0 0.0
      %476 = vmatpush2.msra.mxu0 %v313
      %477 = vmatprep.subr.mxu0 0.0
      %478 = vmatpush2.msra.mxu0 %v312
      %479 = vmatprep.subr.mxu0 0.0
      %480 = vmatpush2.msra.mxu0 %v311
      %481 = vmatprep.subr.mxu0 0.0
      %482 = vmatpush2.msra.mxu0 %v310
      %483 = vmatprep.subr.mxu0 0.0
      %484 = vmatpush2.msra.mxu0 %v309
      %485 = vmatprep.subr.mxu0 0.0
      %486 = vmatpush2.msra.mxu0 %v308
      %487 = vmatprep.subr.mxu0 0.0
      %488 = vmatpush2.msra.mxu0 %v307
      %489 = vmatprep.subr.mxu0 0.0
      %490 = vmatpush2.msra.mxu0 %v306
      %491 = vmatprep.subr.mxu0 0.0
      %492 = vmatpush2.msra.mxu0 %v305
      %493 = vmatprep.subr.mxu0 0.0
      %494 = vmatpush2.msra.mxu0 %v304
      %495 = vmatprep.subr.mxu0 0.0
      %496 = vmatpush2.msra.mxu0 %v303
      %497 = vmatprep.mubr.f32.mxu0 %v178
      %498 = vmatmul.mubr.f32.gmra.mxu0 %v177
      %v499 = vpop.f32.mrf.mxu0
      %v500 = vadd.f32 %v364, %v499
      %v501 = vpop.f32.mrf.mxu0
      %502 = vmatprep.mubr.f32.mxu0 %v183
      %503 = vmatmul.mubr.f32.gmra.mxu0 %v182
      %v504 = vpop.f32.mrf.mxu0
      %v505 = vadd.f32 %v364, %v504
      %v506 = vpop.f32.mrf.mxu0
      %507 = vmatprep.mubr.f32.mxu0 %v188
      %508 = vmatmul.mubr.f32.gmra.mxu0 %v187
      %v509 = vpop.f32.mrf.mxu0
      %v510 = vadd.f32 %v364, %v509
      %v511 = vpop.f32.mrf.mxu0
      %512 = vmatprep.mubr.f32.mxu0 %v193
      %513 = vmatmul.mubr.f32.gmra.mxu0 %v192
      %v514 = vpop.f32.mrf.mxu0
      %v515 = vadd.f32 %v364, %v514
      %v516 = vpop.f32.mrf.mxu0
      %517 = vmatprep.mubr.f32.mxu0 %v198
      %518 = vmatmul.mubr.f32.gmra.mxu0 %v197
      %v519 = vpop.f32.mrf.mxu0
      %v520 = vadd.f32 %v364, %v519
      %v521 = vpop.f32.mrf.mxu0
      %522 = vmatprep.mubr.f32.mxu0 %v203
      %523 = vmatmul.mubr.f32.gmra.mxu0 %v202
      %v524 = vpop.f32.mrf.mxu0
      %v525 = vadd.f32 %v364, %v524
      %v526 = vpop.f32.mrf.mxu0
      %527 = vmatprep.mubr.f32.mxu0 %v208
      %528 = vmatmul.mubr.f32.gmra.mxu0 %v207
      %v529 = vpop.f32.mrf.mxu0
      %v530 = vadd.f32 %v364, %v529
      %v531 = vpop.f32.mrf.mxu0
      %532 = vmatprep.mubr.f32.mxu0 %v213
      %533 = vmatmul.mubr.f32.gmra.mxu0 %v212
      %v534 = vpop.f32.mrf.mxu0
      %v535 = vadd.f32 %v364, %v534
      %v536 = vpop.f32.mrf.mxu0
      %537 = vmatprep.mubr.f32.mxu0 %v218
      %538 = vmatmul.mubr.f32.gmra.mxu0 %v217
      %v539 = vpop.f32.mrf.mxu0
      %v540 = vadd.f32 %v364, %v539
      %v541 = vpop.f32.mrf.mxu0
      %542 = vmatprep.mubr.f32.mxu0 %v223
      %543 = vmatmul.mubr.f32.gmra.mxu0 %v222
      %v544 = vpop.f32.mrf.mxu0
      %v545 = vadd.f32 %v364, %v544
      %v546 = vpop.f32.mrf.mxu0
      %547 = vmatprep.mubr.f32.mxu0 %v228
      %548 = vmatmul.mubr.f32.gmra.mxu0 %v227
      %v549 = vpop.f32.mrf.mxu0
      %v550 = vadd.f32 %v364, %v549
      %v551 = vpop.f32.mrf.mxu0
      %552 = vmatprep.mubr.f32.mxu0 %v233
      %553 = vmatmul.mubr.f32.gmra.mxu0 %v232
      %v554 = vpop.f32.mrf.mxu0
      %v555 = vadd.f32 %v364, %v554
      %v556 = vpop.f32.mrf.mxu0
      %557 = vmatprep.mubr.f32.mxu0 %v238
      %558 = vmatmul.mubr.f32.gmra.mxu0 %v237
      %v559 = vpop.f32.mrf.mxu0
      %v560 = vadd.f32 %v364, %v559
      %v561 = vpop.f32.mrf.mxu0
      %562 = vmatprep.mubr.f32.mxu0 %v243
      %563 = vmatmul.mubr.f32.gmra.mxu0 %v242
      %v564 = vpop.f32.mrf.mxu0
      %v565 = vadd.f32 %v364, %v564
      %v566 = vpop.f32.mrf.mxu0
      %567 = vmatprep.mubr.f32.mxu0 %v248
      %568 = vmatmul.mubr.f32.gmra.mxu0 %v247
      %v569 = vpop.f32.mrf.mxu0
      %v570 = vadd.f32 %v364, %v569
      %v571 = vpop.f32.mrf.mxu0
      %572 = vmatprep.mubr.f32.mxu0 %v253
      %573 = vmatmul.mubr.f32.gmra.mxu0 %v252
      %v574 = vpop.f32.mrf.mxu0
      %v575 = vadd.f32 %v364, %v574
      %v576 = vpop.f32.mrf.mxu0
      %577 = vmatprep.mubr.f32.mxu0 %v258
      %578 = vmatmul.mubr.f32.gmra.mxu0 %v257
      %v579 = vpop.f32.mrf.mxu0
      %v580 = vadd.f32 %v364, %v579
      %v581 = vpop.f32.mrf.mxu0
      %582 = vmatprep.mubr.f32.mxu0 %v263
      %583 = vmatmul.mubr.f32.gmra.mxu0 %v262
      %v584 = vpop.f32.mrf.mxu0
      %v585 = vadd.f32 %v364, %v584
      %v586 = vpop.f32.mrf.mxu0
      %587 = vmatprep.mubr.f32.mxu0 %v268
      %588 = vmatmul.mubr.f32.gmra.mxu0 %v267
      %v589 = vpop.f32.mrf.mxu0
      %v590 = vadd.f32 %v364, %v589
      %v591 = vpop.f32.mrf.mxu0
      %592 = vmatprep.mubr.f32.mxu0 %v273
      %593 = vmatmul.mubr.f32.gmra.mxu0 %v272
      %v594 = vpop.f32.mrf.mxu0
      %v595 = vadd.f32 %v364, %v594
      %v596 = vpop.f32.mrf.mxu0
      %597 = vmatprep.mubr.f32.mxu0 %v278
      %598 = vmatmul.mubr.f32.gmra.mxu0 %v277
      %v599 = vpop.f32.mrf.mxu0
      %v600 = vadd.f32 %v364, %v599
      %v601 = vpop.f32.mrf.mxu0
      %602 = vmatprep.mubr.f32.mxu0 %v283
      %603 = vmatmul.mubr.f32.gmra.mxu0 %v282
      %v604 = vpop.f32.mrf.mxu0
      %v605 = vadd.f32 %v364, %v604
      %v606 = vpop.f32.mrf.mxu0
      %607 = vdwg.mxu0
      %608 = vmatprep.subr.mxu0 0.0
      %609 = vmatpush1.msra.mxu0 %v334
      %610 = vmatprep.subr.mxu0 0.0
      %611 = vmatpush1.msra.mxu0 %v333
      %612 = vmatprep.subr.mxu0 0.0
      %613 = vmatpush1.msra.mxu0 %v332
      %614 = vmatprep.subr.mxu0 0.0
      %615 = vmatpush1.msra.mxu0 %v331
      %616 = vmatprep.subr.mxu0 0.0
      %617 = vmatpush1.msra.mxu0 %v330
      %618 = vmatprep.subr.mxu0 0.0
      %619 = vmatpush1.msra.mxu0 %v329
      %620 = vmatprep.subr.mxu0 0.0
      %621 = vmatpush1.msra.mxu0 %v328
      %622 = vmatprep.subr.mxu0 0.0
      %623 = vmatpush1.msra.mxu0 %v327
      %624 = vmatprep.subr.mxu0 0.0
      %625 = vmatpush1.msra.mxu0 %v326
      %626 = vmatprep.subr.mxu0 0.0
      %627 = vmatpush1.msra.mxu0 %v325
      %628 = vmatprep.subr.mxu0 0.0
      %629 = vmatpush1.msra.mxu0 %v324
      %630 = vmatprep.subr.mxu0 0.0
      %631 = vmatpush1.msra.mxu0 %v323
      %632 = vmatprep.subr.mxu0 0.0
      %633 = vmatpush1.msra.mxu0 %v322
      %634 = vmatprep.subr.mxu0 0.0
      %635 = vmatpush1.msra.mxu0 %v321
      %636 = vmatprep.subr.mxu0 0.0
      %637 = vmatpush1.msra.mxu0 %v320
      %638 = vmatprep.subr.mxu0 0.0
      %639 = vmatpush1.msra.mxu0 %v319
      %640 = vmatprep.subr.mxu0 0.0
      %641 = vmatpush2.msra.mxu0 %v350
      %642 = vmatprep.subr.mxu0 0.0
      %643 = vmatpush2.msra.mxu0 %v349
      %644 = vmatprep.subr.mxu0 0.0
      %645 = vmatpush2.msra.mxu0 %v348
      %646 = vmatprep.subr.mxu0 0.0
      %647 = vmatpush2.msra.mxu0 %v347
      %648 = vmatprep.subr.mxu0 0.0
      %649 = vmatpush2.msra.mxu0 %v346
      %650 = vmatprep.subr.mxu0 0.0
      %651 = vmatpush2.msra.mxu0 %v345
      %652 = vmatprep.subr.mxu0 0.0
      %653 = vmatpush2.msra.mxu0 %v344
      %654 = vmatprep.subr.mxu0 0.0
      %655 = vmatpush2.msra.mxu0 %v343
      %656 = vmatprep.subr.mxu0 0.0
      %657 = vmatpush2.msra.mxu0 %v342
      %658 = vmatprep.subr.mxu0 0.0
      %659 = vmatpush2.msra.mxu0 %v341
      %660 = vmatprep.subr.mxu0 0.0
      %661 = vmatpush2.msra.mxu0 %v340
      %662 = vmatprep.subr.mxu0 0.0
      %663 = vmatpush2.msra.mxu0 %v339
      %664 = vmatprep.subr.mxu0 0.0
      %665 = vmatpush2.msra.mxu0 %v338
      %666 = vmatprep.subr.mxu0 0.0
      %667 = vmatpush2.msra.mxu0 %v337
      %668 = vmatprep.subr.mxu0 0.0
      %669 = vmatpush2.msra.mxu0 %v336
      %670 = vmatprep.subr.mxu0 0.0
      %671 = vmatpush2.msra.mxu0 %v335
      %672 = vmatprep.mubr.f32.mxu0 %v180
      %673 = vmatmul.mubr.f32.gmra.mxu0 %v179
      %v674 = vpop.f32.mrf.mxu0
      %v675 = vadd.f32 %v500, %v674
      %v676 = vpop.f32.mrf.mxu0
      %677 = vmatprep.mubr.f32.mxu0 %v185
      %678 = vmatmul.mubr.f32.gmra.mxu0 %v184
      %v679 = vpop.f32.mrf.mxu0
      %v680 = vadd.f32 %v505, %v679
      %v681 = vpop.f32.mrf.mxu0
      %682 = vmatprep.mubr.f32.mxu0 %v190
      %683 = vmatmul.mubr.f32.gmra.mxu0 %v189
      %v684 = vpop.f32.mrf.mxu0
      %v685 = vadd.f32 %v510, %v684
      %v686 = vpop.f32.mrf.mxu0
      %687 = vmatprep.mubr.f32.mxu0 %v195
      %688 = vmatmul.mubr.f32.gmra.mxu0 %v194
      %v689 = vpop.f32.mrf.mxu0
      %v690 = vadd.f32 %v515, %v689
      %v691 = vpop.f32.mrf.mxu0
      %692 = vmatprep.mubr.f32.mxu0 %v200
      %693 = vmatmul.mubr.f32.gmra.mxu0 %v199
      %v694 = vpop.f32.mrf.mxu0
      %v695 = vadd.f32 %v520, %v694
      %v696 = vpop.f32.mrf.mxu0
      %697 = vmatprep.mubr.f32.mxu0 %v205
      %698 = vmatmul.mubr.f32.gmra.mxu0 %v204
      %v699 = vpop.f32.mrf.mxu0
      %v700 = vadd.f32 %v525, %v699
      %v701 = vpop.f32.mrf.mxu0
      %702 = vmatprep.mubr.f32.mxu0 %v210
      %703 = vmatmul.mubr.f32.gmra.mxu0 %v209
      %v704 = vpop.f32.mrf.mxu0
      %v705 = vadd.f32 %v530, %v704
      %v706 = vpop.f32.mrf.mxu0
      %707 = vmatprep.mubr.f32.mxu0 %v215
      %708 = vmatmul.mubr.f32.gmra.mxu0 %v214
      %v709 = vpop.f32.mrf.mxu0
      %v710 = vadd.f32 %v535, %v709
      %v711 = vpop.f32.mrf.mxu0
      %712 = vmatprep.mubr.f32.mxu0 %v220
      %713 = vmatmul.mubr.f32.gmra.mxu0 %v219
      %v714 = vpop.f32.mrf.mxu0
      %v715 = vadd.f32 %v540, %v714
      %v716 = vpop.f32.mrf.mxu0
      %717 = vmatprep.mubr.f32.mxu0 %v225
      %718 = vmatmul.mubr.f32.gmra.mxu0 %v224
      %v719 = vpop.f32.mrf.mxu0
      %v720 = vadd.f32 %v545, %v719
      %v721 = vpop.f32.mrf.mxu0
      %722 = vmatprep.mubr.f32.mxu0 %v230
      %723 = vmatmul.mubr.f32.gmra.mxu0 %v229
      %v724 = vpop.f32.mrf.mxu0
      %v725 = vadd.f32 %v550, %v724
      %v726 = vpop.f32.mrf.mxu0
      %727 = vmatprep.mubr.f32.mxu0 %v235
      %728 = vmatmul.mubr.f32.gmra.mxu0 %v234
      %v729 = vpop.f32.mrf.mxu0
      %v730 = vadd.f32 %v555, %v729
      %v731 = vpop.f32.mrf.mxu0
      %732 = vmatprep.mubr.f32.mxu0 %v240
      %733 = vmatmul.mubr.f32.gmra.mxu0 %v239
      %v734 = vpop.f32.mrf.mxu0
      %v735 = vadd.f32 %v560, %v734
      %v736 = vpop.f32.mrf.mxu0
      %737 = vmatprep.mubr.f32.mxu0 %v245
      %738 = vmatmul.mubr.f32.gmra.mxu0 %v244
      %v739 = vpop.f32.mrf.mxu0
      %v740 = vadd.f32 %v565, %v739
      %v741 = vpop.f32.mrf.mxu0
      %742 = vmatprep.mubr.f32.mxu0 %v250
      %743 = vmatmul.mubr.f32.gmra.mxu0 %v249
      %v744 = vpop.f32.mrf.mxu0
      %v745 = vadd.f32 %v570, %v744
      %v746 = vpop.f32.mrf.mxu0
      %747 = vmatprep.mubr.f32.mxu0 %v255
      %748 = vmatmul.mubr.f32.gmra.mxu0 %v254
      %v749 = vpop.f32.mrf.mxu0
      %v750 = vadd.f32 %v575, %v749
      %v751 = vpop.f32.mrf.mxu0
      %752 = vmatprep.mubr.f32.mxu0 %v260
      %753 = vmatmul.mubr.f32.gmra.mxu0 %v259
      %v754 = vpop.f32.mrf.mxu0
      %v755 = vadd.f32 %v580, %v754
      %v756 = vpop.f32.mrf.mxu0
      %757 = vmatprep.mubr.f32.mxu0 %v265
      %758 = vmatmul.mubr.f32.gmra.mxu0 %v264
      %v759 = vpop.f32.mrf.mxu0
      %v760 = vadd.f32 %v585, %v759
      %v761 = vpop.f32.mrf.mxu0
      %762 = vmatprep.mubr.f32.mxu0 %v270
      %763 = vmatmul.mubr.f32.gmra.mxu0 %v269
      %v764 = vpop.f32.mrf.mxu0
      %v765 = vadd.f32 %v590, %v764
      %v766 = vpop.f32.mrf.mxu0
      %767 = vmatprep.mubr.f32.mxu0 %v275
      %768 = vmatmul.mubr.f32.gmra.mxu0 %v274
      %v769 = vpop.f32.mrf.mxu0
      %v770 = vadd.f32 %v595, %v769
      %v771 = vpop.f32.mrf.mxu0
      %772 = vmatprep.mubr.f32.mxu0 %v280
      %773 = vmatmul.mubr.f32.gmra.mxu0 %v279
      %v774 = vpop.f32.mrf.mxu0
      %v775 = vadd.f32 %v600, %v774
      %v776 = vpop.f32.mrf.mxu0
      %777 = vmatprep.mubr.f32.mxu0 %v285
      %778 = vmatmul.mubr.f32.gmra.mxu0 %v284
      %v779 = vpop.f32.mrf.mxu0
      %v780 = vadd.f32 %v605, %v779
      %v781 = vpop.f32.mrf.mxu0
      %782 = vdwg.mxu0
      %783 = vmatprep.subr.mxu0 0.0
      %784 = vmatpush1.msra.mxu0 0.0
      %785 = vmatprep.subr.mxu0 0.0
      %786 = vmatpush1.msra.mxu0 0.0
      %787 = vmatprep.subr.mxu0 0.0
      %788 = vmatpush1.msra.mxu0 0.0
      %789 = vmatprep.subr.mxu0 0.0
      %790 = vmatpush1.msra.mxu0 0.0
      %791 = vmatprep.subr.mxu0 0.0
      %792 = vmatpush1.msra.mxu0 0.0
      %793 = vmatprep.subr.mxu0 0.0
      %794 = vmatpush1.msra.mxu0 0.0
      %795 = vmatprep.subr.mxu0 0.0
      %796 = vmatpush1.msra.mxu0 0.0
      %797 = vmatprep.subr.mxu0 0.0
      %798 = vmatpush1.msra.mxu0 0.0
      %799 = vmatprep.subr.mxu0 0.0
      %800 = vmatpush1.msra.mxu0 %v358
      %801 = vmatprep.subr.mxu0 0.0
      %802 = vmatpush1.msra.mxu0 %v357
      %803 = vmatprep.subr.mxu0 0.0
      %804 = vmatpush1.msra.mxu0 %v356
      %805 = vmatprep.subr.mxu0 0.0
      %806 = vmatpush1.msra.mxu0 %v355
      %807 = vmatprep.subr.mxu0 0.0
      %808 = vmatpush1.msra.mxu0 %v354
      %809 = vmatprep.subr.mxu0 0.0
      %810 = vmatpush1.msra.mxu0 %v353
      %811 = vmatprep.subr.mxu0 0.0
      %812 = vmatpush1.msra.mxu0 %v352
      %813 = vmatprep.subr.mxu0 0.0
      %814 = vmatpush1.msra.mxu0 %v351
      %815 = vmatprep.subr.mxu0 0.0
      %816 = vmatpush2.msra.mxu0 0.0
      %817 = vmatprep.subr.mxu0 0.0
      %818 = vmatpush2.msra.mxu0 0.0
      %819 = vmatprep.subr.mxu0 0.0
      %820 = vmatpush2.msra.mxu0 0.0
      %821 = vmatprep.subr.mxu0 0.0
      %822 = vmatpush2.msra.mxu0 0.0
      %823 = vmatprep.subr.mxu0 0.0
      %824 = vmatpush2.msra.mxu0 0.0
      %825 = vmatprep.subr.mxu0 0.0
      %826 = vmatpush2.msra.mxu0 0.0
      %827 = vmatprep.subr.mxu0 0.0
      %828 = vmatpush2.msra.mxu0 0.0
      %829 = vmatprep.subr.mxu0 0.0
      %830 = vmatpush2.msra.mxu0 0.0
      %831 = vmatprep.subr.mxu0 0.0
      %832 = vmatpush2.msra.mxu0 0.0
      %833 = vmatprep.subr.mxu0 0.0
      %834 = vmatpush2.msra.mxu0 0.0
      %835 = vmatprep.subr.mxu0 0.0
      %836 = vmatpush2.msra.mxu0 0.0
      %837 = vmatprep.subr.mxu0 0.0
      %838 = vmatpush2.msra.mxu0 0.0
      %839 = vmatprep.subr.mxu0 0.0
      %840 = vmatpush2.msra.mxu0 0.0
      %841 = vmatprep.subr.mxu0 0.0
      %842 = vmatpush2.msra.mxu0 0.0
      %843 = vmatprep.subr.mxu0 0.0
      %844 = vmatpush2.msra.mxu0 0.0
      %845 = vmatprep.subr.mxu0 0.0
      %846 = vmatpush2.msra.mxu0 0.0
      %847 = vmatprep.mubr.f32.mxu0 0.0
      %848 = vmatmul.mubr.f32.gmra.mxu0 %v368
      %v849 = vpop.f32.mrf.mxu0
      %v850 = vadd.f32 %v675, %v849
      %v851 = vpop.f32.mrf.mxu0
      %852 = vmatprep.mubr.f32.mxu0 0.0
      %853 = vmatmul.mubr.f32.gmra.mxu0 %v371
      %v854 = vpop.f32.mrf.mxu0
      %v855 = vadd.f32 %v680, %v854
      %v856 = vpop.f32.mrf.mxu0
      %857 = vmatprep.mubr.f32.mxu0 0.0
      %858 = vmatmul.mubr.f32.gmra.mxu0 %v374
      %v859 = vpop.f32.mrf.mxu0
      %v860 = vadd.f32 %v685, %v859
      %v861 = vpop.f32.mrf.mxu0
      %862 = vmatprep.mubr.f32.mxu0 0.0
      %863 = vmatmul.mubr.f32.gmra.mxu0 %v377
      %v864 = vpop.f32.mrf.mxu0
      %v865 = vadd.f32 %v690, %v864
      %v866 = vpop.f32.mrf.mxu0
      %867 = vmatprep.mubr.f32.mxu0 0.0
      %868 = vmatmul.mubr.f32.gmra.mxu0 %v380
      %v869 = vpop.f32.mrf.mxu0
      %v870 = vadd.f32 %v695, %v869
      %v871 = vpop.f32.mrf.mxu0
      %872 = vmatprep.mubr.f32.mxu0 0.0
      %873 = vmatmul.mubr.f32.gmra.mxu0 %v383
      %v874 = vpop.f32.mrf.mxu0
      %v875 = vadd.f32 %v700, %v874
      %v876 = vpop.f32.mrf.mxu0
      %877 = vmatprep.mubr.f32.mxu0 0.0
      %878 = vmatmul.mubr.f32.gmra.mxu0 %v386
      %v879 = vpop.f32.mrf.mxu0
      %v880 = vadd.f32 %v705, %v879
      %v881 = vpop.f32.mrf.mxu0
      %882 = vmatprep.mubr.f32.mxu0 0.0
      %883 = vmatmul.mubr.f32.gmra.mxu0 %v389
      %v884 = vpop.f32.mrf.mxu0
      %v885 = vadd.f32 %v710, %v884
      %v886 = vpop.f32.mrf.mxu0
      %887 = vmatprep.mubr.f32.mxu0 0.0
      %888 = vmatmul.mubr.f32.gmra.mxu0 %v392
      %v889 = vpop.f32.mrf.mxu0
      %v890 = vadd.f32 %v715, %v889
      %v891 = vpop.f32.mrf.mxu0
      %892 = vmatprep.mubr.f32.mxu0 0.0
      %893 = vmatmul.mubr.f32.gmra.mxu0 %v395
      %v894 = vpop.f32.mrf.mxu0
      %v895 = vadd.f32 %v720, %v894
      %v896 = vpop.f32.mrf.mxu0
      %897 = vmatprep.mubr.f32.mxu0 0.0
      %898 = vmatmul.mubr.f32.gmra.mxu0 %v398
      %v899 = vpop.f32.mrf.mxu0
      %v900 = vadd.f32 %v725, %v899
      %v901 = vpop.f32.mrf.mxu0
      %902 = vmatprep.mubr.f32.mxu0 0.0
      %903 = vmatmul.mubr.f32.gmra.mxu0 %v401
      %v904 = vpop.f32.mrf.mxu0
      %v905 = vadd.f32 %v730, %v904
      %v906 = vpop.f32.mrf.mxu0
      %907 = vmatprep.mubr.f32.mxu0 0.0
      %908 = vmatmul.mubr.f32.gmra.mxu0 %v404
      %v909 = vpop.f32.mrf.mxu0
      %v910 = vadd.f32 %v735, %v909
      %v911 = vpop.f32.mrf.mxu0
      %912 = vmatprep.mubr.f32.mxu0 0.0
      %913 = vmatmul.mubr.f32.gmra.mxu0 %v407
      %v914 = vpop.f32.mrf.mxu0
      %v915 = vadd.f32 %v740, %v914
      %v916 = vpop.f32.mrf.mxu0
      %917 = vmatprep.mubr.f32.mxu0 0.0
      %918 = vmatmul.mubr.f32.gmra.mxu0 %v410
      %v919 = vpop.f32.mrf.mxu0
      %v920 = vadd.f32 %v745, %v919
      %v921 = vpop.f32.mrf.mxu0
      %922 = vmatprep.mubr.f32.mxu0 0.0
      %923 = vmatmul.mubr.f32.gmra.mxu0 %v413
      %v924 = vpop.f32.mrf.mxu0
      %v925 = vadd.f32 %v750, %v924
      %v926 = vpop.f32.mrf.mxu0
      %927 = vmatprep.mubr.f32.mxu0 0.0
      %928 = vmatmul.mubr.f32.gmra.mxu0 %v416
      %v929 = vpop.f32.mrf.mxu0
      %v930 = vadd.f32 %v755, %v929
      %v931 = vpop.f32.mrf.mxu0
      %932 = vmatprep.mubr.f32.mxu0 0.0
      %933 = vmatmul.mubr.f32.gmra.mxu0 %v419
      %v934 = vpop.f32.mrf.mxu0
      %v935 = vadd.f32 %v760, %v934
      %v936 = vpop.f32.mrf.mxu0
      %937 = vmatprep.mubr.f32.mxu0 0.0
      %938 = vmatmul.mubr.f32.gmra.mxu0 %v422
      %v939 = vpop.f32.mrf.mxu0
      %v940 = vadd.f32 %v765, %v939
      %v941 = vpop.f32.mrf.mxu0
      %942 = vmatprep.mubr.f32.mxu0 0.0
      %943 = vmatmul.mubr.f32.gmra.mxu0 %v425
      %v944 = vpop.f32.mrf.mxu0
      %v945 = vadd.f32 %v770, %v944
      %v946 = vpop.f32.mrf.mxu0
      %947 = vmatprep.mubr.f32.mxu0 0.0
      %948 = vmatmul.mubr.f32.gmra.mxu0 %v428
      %v949 = vpop.f32.mrf.mxu0
      %v950 = vadd.f32 %v775, %v949
      %v951 = vpop.f32.mrf.mxu0
      %952 = vmatprep.mubr.f32.mxu0 0.0
      %953 = vmatmul.mubr.f32.gmra.mxu0 %v431
      %v954 = vpop.f32.mrf.mxu0
      %v955 = vadd.f32 %v780, %v954
      %v956 = vpop.f32.mrf.mxu0
      %957 = vdwg.mxu0
      %v958 = vmul.f32 %v850, 0.5
      %v959 = vmul.f32 %v855, 0.5
      %v960 = vmul.f32 %v860, 0.5
      %v961 = vmul.f32 %v865, 0.5
      %v962 = vmul.f32 %v870, 0.5
      %v963 = vmul.f32 %v875, 0.5
      %v964 = vmul.f32 %v880, 0.5
      %v965 = vmul.f32 %v885, 0.5
      %v966 = vmul.f32 %v890, 0.5
      %v967 = vmul.f32 %v895, 0.5
      %v968 = vmul.f32 %v900, 0.5
      %v969 = vmul.f32 %v905, 0.5
      %v970 = vmul.f32 %v910, 0.5
      %v971 = vmul.f32 %v915, 0.5
      %v972 = vmul.f32 %v920, 0.5
      %v973 = vmul.f32 %v925, 0.5
      %v974 = vmul.f32 %v930, 0.5
      %v975 = vmul.f32 %v935, 0.5
      %v976 = vmul.f32 %v940, 0.5
      %v977 = vmul.f32 %v945, 0.5
      %v978 = vmul.f32 %v950, 0.5
      %v979 = vmul.f32 %v955, 0.5
      %v980 = vmul.f32 %v850, 0.70710677
      %v981 = vmul.f32 %v855, 0.70710677
      %v982 = vmul.f32 %v860, 0.70710677
      %v983 = vmul.f32 %v865, 0.70710677
      %v984 = vmul.f32 %v870, 0.70710677
      %v985 = vmul.f32 %v875, 0.70710677
      %v986 = vmul.f32 %v880, 0.70710677
      %v987 = vmul.f32 %v885, 0.70710677
      %v988 = vmul.f32 %v890, 0.70710677
      %v989 = vmul.f32 %v895, 0.70710677
      %v990 = vmul.f32 %v900, 0.70710677
      %v991 = vmul.f32 %v905, 0.70710677
      %v992 = vmul.f32 %v910, 0.70710677
      %v993 = vmul.f32 %v915, 0.70710677
      %v994 = vmul.f32 %v920, 0.70710677
      %v995 = vmul.f32 %v925, 0.70710677
      %v996 = vmul.f32 %v930, 0.70710677
      %v997 = vmul.f32 %v935, 0.70710677
      %v998 = vmul.f32 %v940, 0.70710677
      %v999 = vmul.f32 %v945, 0.70710677
      %v1000 = vmul.f32 %v950, 0.70710677
      %v1001 = vmul.f32 %v955, 0.70710677
      %v1002 = verf.f32.pop %v980
      %v1003 = verf.f32.pop %v981
      %v1004 = verf.f32.pop %v982
      %v1005 = verf.f32.pop %v983
      %v1006 = verf.f32.pop %v984
      %v1007 = verf.f32.pop %v985
      %v1008 = verf.f32.pop %v986
      %v1009 = verf.f32.pop %v987
      %v1010 = verf.f32.pop %v988
      %v1011 = verf.f32.pop %v989
      %v1012 = verf.f32.pop %v990
      %v1013 = verf.f32.pop %v991
      %v1014 = verf.f32.pop %v992
      %v1015 = verf.f32.pop %v993
      %v1016 = verf.f32.pop %v994
      %v1017 = verf.f32.pop %v995
      %v1018 = verf.f32.pop %v996
      %v1019 = verf.f32.pop %v997
      %v1020 = verf.f32.pop %v998
      %v1021 = verf.f32.pop %v999
      %v1022 = verf.f32.pop %v1000
      %v1023 = verf.f32.pop %v1001
      %v1024 = vadd.f32 %v1002, 1.0
      %v1025 = vadd.f32 %v1003, 1.0
      %v1026 = vadd.f32 %v1004, 1.0
      %v1027 = vadd.f32 %v1005, 1.0
      %v1028 = vadd.f32 %v1006, 1.0
      %v1029 = vadd.f32 %v1007, 1.0
      %v1030 = vadd.f32 %v1008, 1.0
      %v1031 = vadd.f32 %v1009, 1.0
      %v1032 = vadd.f32 %v1010, 1.0
      %v1033 = vadd.f32 %v1011, 1.0
      %v1034 = vadd.f32 %v1012, 1.0
      %v1035 = vadd.f32 %v1013, 1.0
      %v1036 = vadd.f32 %v1014, 1.0
      %v1037 = vadd.f32 %v1015, 1.0
      %v1038 = vadd.f32 %v1016, 1.0
      %v1039 = vadd.f32 %v1017, 1.0
      %v1040 = vadd.f32 %v1018, 1.0
      %v1041 = vadd.f32 %v1019, 1.0
      %v1042 = vadd.f32 %v1020, 1.0
      %v1043 = vadd.f32 %v1021, 1.0
      %v1044 = vadd.f32 %v1022, 1.0
      %v1045 = vadd.f32 %v1023, 1.0
      %v1046 = vmul.f32 %v958, %v1024
      %v1047 = vmul.f32 %v959, %v1025
      %v1048 = vmul.f32 %v960, %v1026
      %v1049 = vmul.f32 %v961, %v1027
      %v1050 = vmul.f32 %v962, %v1028
      %v1051 = vmul.f32 %v963, %v1029
      %v1052 = vmul.f32 %v964, %v1030
      %v1053 = vmul.f32 %v965, %v1031
      %v1054 = vmul.f32 %v966, %v1032
      %v1055 = vmul.f32 %v967, %v1033
      %v1056 = vmul.f32 %v968, %v1034
      %v1057 = vmul.f32 %v969, %v1035
      %v1058 = vmul.f32 %v970, %v1036
      %v1059 = vmul.f32 %v971, %v1037
      %v1060 = vmul.f32 %v972, %v1038
      %v1061 = vmul.f32 %v973, %v1039
      %v1062 = vmul.f32 %v974, %v1040
      %v1063 = vmul.f32 %v975, %v1041
      %v1064 = vmul.f32 %v976, %v1042
      %v1065 = vmul.f32 %v977, %v1043
      %v1066 = vmul.f32 %v978, %v1044
      %v1067 = vmul.f32 %v979, %v1045
      %1068 = vst.msk [vmem:[%s175] sm:$0xff] %vm366, %v1046
      %1069 = vst.msk [vmem:[%s175 + $0x8] sm:$0xff] %vm366, %v1047
      %1070 = vst.msk [vmem:[%s175 + $0x10] sm:$0xff] %vm366, %v1048
      %1071 = vst.msk [vmem:[%s175 + $0x18] sm:$0xff] %vm366, %v1049
      %1072 = vst.msk [vmem:[%s175 + $0x20] sm:$0xff] %vm366, %v1050
      %1073 = vst.msk [vmem:[%s175 + $0x28] sm:$0xff] %vm366, %v1051
      %1074 = vst.msk [vmem:[%s175 + $0x30] sm:$0xff] %vm366, %v1052
      %1075 = vst.msk [vmem:[%s175 + $0x38] sm:$0xff] %vm366, %v1053
      %1076 = vst.msk [vmem:[%s175 + $0x40] sm:$0xff] %vm366, %v1054
      %1077 = vst.msk [vmem:[%s175 + $0x48] sm:$0xff] %vm366, %v1055
      %1078 = vst.msk [vmem:[%s175 + $0x50] sm:$0xff] %vm366, %v1056
      %1079 = vst.msk [vmem:[%s175 + $0x58] sm:$0xff] %vm366, %v1057
      %1080 = vst.msk [vmem:[%s175 + $0x60] sm:$0xff] %vm366, %v1058
      %1081 = vst.msk [vmem:[%s175 + $0x68] sm:$0xff] %vm366, %v1059
      %1082 = vst.msk [vmem:[%s175 + $0x70] sm:$0xff] %vm366, %v1060
      %1083 = vst.msk [vmem:[%s175 + $0x78] sm:$0xff] %vm366, %v1061
      %1084 = vst.msk [vmem:[%s175 + $0x80] sm:$0xff] %vm366, %v1062
      %1085 = vst.msk [vmem:[%s175 + $0x88] sm:$0xff] %vm366, %v1063
      %1086 = vst.msk [vmem:[%s175 + $0x90] sm:$0xff] %vm366, %v1064
      %1087 = vst.msk [vmem:[%s175 + $0x98] sm:$0xff] %vm366, %v1065
      %1088 = vst.msk [vmem:[%s175 + $0xa0] sm:$0xff] %vm366, %v1066
      %1089 = vst.msk [vmem:[%s175 + $0xa8] sm:$0xff] %vm366, %v1067
      %s1090 = smul.u32 22, %s14
      %p1091 = scmp.lt.s32.totalorder %s1090, 43
      %s1092 = scalar_select %p1091, %s1090, 43
      %s1093 = smul.addr %s1092, 8
      %s1094 = scalar_lea.vmem %s3, %s1093
      // Predicated region
      $region33: #{cnn_block_encoder.6} parent=31 // pred_check
        %p1095 = pneg %p100
      $region34: #{cnn_block_encoder.6} parent=31 // pred_check_branch
        %1097 = sbr.rel (%p1095) target = $region36
      $region35: #{cnn_block_encoder.6} parent=31 // pred_region
        %s1098 = smul.u32 22, %s14
      $region36: #{cnn_block_encoder.6} parent=31 // pred_fallthru
        _
    $region32: #{cnn_block_encoder.6} parent=5 // pred_fallthru
      _
    %p1099 = scmp.le.s32.totalorder 2, %s9
    // Predicated region
    $region37: #{cnn_block_encoder.6} parent=5 // pred_check
      %p1100 = pneg %p1099
    $region38: #{cnn_block_encoder.6} parent=5 // pred_check_branch
      %1102 = sbr.rel (%p1100) target = $region40
    $region39: #{cnn_block_encoder.6} parent=5 // pred_region
      %s1103 = ssub.s32 %s9, 2
      // Predicated region
      $region41: #{cnn_block_encoder.6} parent=39 // pred_check
        %p1104 = pneg %p106
      $region42: #{cnn_block_encoder.6} parent=39 // pred_check_branch
        %1106 = sbr.rel (%p1104) target = $region44
      $region43: #{cnn_block_encoder.6} parent=39 // pred_region
        %s1107 = smul.u32 22, %s15
        %p1108 = scmp.lt.s32.totalorder %s1107, 43
        %s1109 = scalar_select %p1108, %s1107, 43
        %s1110 = smul.addr %s1109, 8
        %s1111 = scalar_lea.vmem %s3, %s1110
      $region44: #{cnn_block_encoder.6} parent=39 // pred_fallthru
        _
    $region40: #{cnn_block_encoder.6} parent=5 // pred_fallthru
      _
  $region6: #{cnn_block_encoder.6} parent=0 // loop_footer
    %s13 = sadd.s32 1, %s9
  $region7: #{cnn_block_encoder.6} parent=0 // loop_footer_branch
    %8 = sbr.rel target = $region3
  $region8: #{cnn_block_encoder.6} parent=0 // loop_exit
    _

// kernel: cnn_block_encoder.7
$region0: #{cnn_block_encoder.7}
  #allocation0 [shape = 'u32[]', space=smem, size = 0x4, offset = 0x4, fixed_abs, tag = 'smem constant byte address 0x4 - core index']
  #allocation1 [shape = 'u32[144,128]{1,0:T(1,128)}', space=vmem, size = 0x12000, scoped, tag = 'internal scratch']
  #allocation2 [shape = 'f32[8,128]{1,0:T(8,128)}', space=vmem, size = 0x1000, scoped, tag = 'scratch operand']
  %s0 = inlined_call_operand.vmem [shape: f32[8,11264], index: 0, kind: input, shape index: {}]
  %s1 = inlined_call_operand.vmem [shape: f32[11264,128], index: 1, kind: input, shape index: {}]
  %s2 = inlined_call_operand.vmem [shape: f32[16,128], index: 2, kind: output, shape index: {}]
  %s3 = sld [smem:[#allocation0]]
  $region49: #{cnn_block_encoder.7} parent=0
    _
  %s5 = ssub.s32 1, %s3
  %s6 = scalar_select 0, %s5, %s3
  loop: start=0, step=1, limit=10
  $region2: #{cnn_block_encoder.7} parent=0 // loop_pre_header
    _
  $region3: #{cnn_block_encoder.7} parent=0 // loop_header
    %s8 = sphi 0, %s12
    %p9 = scmp.ge.s32.totalorder %s8, 10
    %s15 = sphi 0, %s27
    %s16 = sphi 0, %s23
    %s17 = sphi 0, %s15
    %s18 = sphi 0, %s16
    %s19 = sphi 0, %s17
    %s20 = sphi 0, %s18
    %s34 = sphi 0, %s36
    %s37 = sphi 0, %s34
    %s38 = sphi 0, %s37
    %s54 = sphi 0, %s38
    %s64 = sphi 0, %s66
    %s67 = sphi 0, %s64
    %s68 = sphi 0, %s67
    %s84 = sphi 0, %s68
    %s90 = sphi 0, %s92
    %s93 = sphi 0, %s90
    %s94 = sphi 0, %s93
    %s110 = sphi 0, %s94
  $region4: #{cnn_block_encoder.7} parent=0 // loop_header_branch
    %11 = sbr.rel (%p9) target = $region8
  $region5: #{cnn_block_encoder.7} parent=0 // loop_body
    %s13 = ssub.s32 %s8, 1
    %s14 = ssub.s32 %s8, 2
    %s21 = sadd.s32 1, %s16
    %p22 = scmp.ge.s32.totalorder %s21, 4
    %s23 = scalar_select %p22, 0, %s21
    %s24 = sadd.s32 1, %s15
    %s25 = scalar_select %p22, %s24, %s15
    %p26 = scmp.ge.s32.totalorder %s25, 2
    %s27 = scalar_select %p26, 0, %s25
    %s28 = smul.u32 %s15, 4
    %s29 = sadd.s32 %s28, %s16
    %s30 = smul.u32 %s27, 4
    %s31 = sadd.s32 %s30, %s23
    %s32 = ssub.s32 %s29, %s31
    %p33 = scmp.eq.s32.totalorder %s32, 0
    %s35 = sadd.s32 %s34, 1
    %s36 = scalar_select %p33, %s34, %s35
    %p39 = pneg %p33
    %p40 = scmp.eq.s32.totalorder %s8, 7
    %p41 = por %p39, %p40
    %p42 = scmp.ne.s32.totalorder %s34, %s37
    %p43 = scmp.eq.s32.totalorder %s8, 0
    %p44 = por %p42, %p43
    %p45 = scmp.ne.s32.totalorder %s34, %s37
    %p46 = scmp.eq.s32.totalorder %s13, 7
    %p47 = por %p45, %p46
    %p48 = scmp.ne.s32.totalorder %s37, %s38
    %p49 = scmp.eq.s32.totalorder %s13, 0
    %p50 = por %p48, %p49
    %p51 = scmp.ne.s32.totalorder %s37, %s38
    %p52 = scmp.eq.s32.totalorder %s14, 7
    %p53 = por %p51, %p52
    %p55 = scmp.ne.s32.totalorder %s38, %s54
    %p56 = scmp.eq.s32.totalorder %s14, 0
    %p57 = por %p55, %p56
    %s58 = smul.u32 %s15, 4
    %s59 = sadd.s32 %s58, %s16
    %s60 = smul.u32 %s27, 4
    %s61 = sadd.s32 %s60, %s23
    %s62 = ssub.s32 %s59, %s61
    %p63 = scmp.eq.s32.totalorder %s62, 0
    %s65 = sadd.s32 %s64, 1
    %s66 = scalar_select %p63, %s64, %s65
    %p69 = pneg %p63
    %p70 = scmp.eq.s32.totalorder %s8, 7
    %p71 = por %p69, %p70
    %p72 = scmp.ne.s32.totalorder %s64, %s67
    %p73 = scmp.eq.s32.totalorder %s8, 0
    %p74 = por %p72, %p73
    %p75 = scmp.ne.s32.totalorder %s64, %s67
    %p76 = scmp.eq.s32.totalorder %s13, 7
    %p77 = por %p75, %p76
    %p78 = scmp.ne.s32.totalorder %s67, %s68
    %p79 = scmp.eq.s32.totalorder %s13, 0
    %p80 = por %p78, %p79
    %p81 = scmp.ne.s32.totalorder %s67, %s68
    %p82 = scmp.eq.s32.totalorder %s14, 7
    %p83 = por %p81, %p82
    %p85 = scmp.ne.s32.totalorder %s68, %s84
    %p86 = scmp.eq.s32.totalorder %s14, 0
    %p87 = por %p85, %p86
    %s88 = ssub.s32 %s15, %s27
    %p89 = scmp.eq.s32.totalorder %s88, 0
    %s91 = sadd.s32 %s90, 1
    %s92 = scalar_select %p89, %s90, %s91
    %p95 = pneg %p89
    %p96 = scmp.eq.s32.totalorder %s8, 7
    %p97 = por %p95, %p96
    %p98 = scmp.ne.s32.totalorder %s90, %s93
    %p99 = scmp.eq.s32.totalorder %s8, 0
    %p100 = por %p98, %p99
    %p101 = scmp.ne.s32.totalorder %s90, %s93
    %p102 = scmp.eq.s32.totalorder %s13, 7
    %p103 = por %p101, %p102
    %p104 = scmp.ne.s32.totalorder %s93, %s94
    %p105 = scmp.eq.s32.totalorder %s13, 0
    %p106 = por %p104, %p105
    %p107 = scmp.ne.s32.totalorder %s93, %s94
    %p108 = scmp.eq.s32.totalorder %s14, 7
    %p109 = por %p107, %p108
    %p111 = scmp.ne.s32.totalorder %s94, %s110
    %p112 = scmp.eq.s32.totalorder %s14, 0
    %p113 = por %p111, %p112
    %p114 = scmp.le.s32.totalorder 1, %s8
    %p115 = scmp.lt.s32.totalorder %s8, 9
    %p116 = pnand %p114, %p115
    %p117 = pneg %p116
    // Predicated region
    $region9: #{cnn_block_encoder.7} parent=5 // pred_check
      _
    $region10: #{cnn_block_encoder.7} parent=5 // pred_check_branch
      %119 = sbr.rel (%p116) target = $region12
    $region11: #{cnn_block_encoder.7} parent=5 // pred_region
      %s120 = ssub.s32 %s8, 1
    $region12: #{cnn_block_encoder.7} parent=5 // pred_fallthru
      _
    %p121 = scmp.lt.s32.totalorder %s8, 8
    // Predicated region
    $region13: #{cnn_block_encoder.7} parent=5 // pred_check
      %p122 = pneg %p121
    $region14: #{cnn_block_encoder.7} parent=5 // pred_check_branch
      %124 = sbr.rel (%p122) target = $region16
    $region15: #{cnn_block_encoder.7} parent=5 // pred_region
      // Predicated region
      $region17: #{cnn_block_encoder.7} parent=15 // pred_check
        %p125 = pneg %p44
      $region18: #{cnn_block_encoder.7} parent=15 // pred_check_branch
        %127 = sbr.rel (%p125) target = $region20
      $region19: #{cnn_block_encoder.7} parent=15 // pred_region
        %s128 = smul.u32 %s15, 4
        %s129 = sadd.s32 %s128, %s16
        %s130 = smul.u32 11, %s129
        %p131 = scmp.lt.s32.totalorder %s130, 87
        %s132 = scalar_select %p131, %s130, 87
        %s133 = smul.addr %s132, 8
        %s134 = scalar_lea.vmem %s0, %s133
        %s135 = smul.u32 %s15, 4
        %s136 = sadd.s32 %s135, %s16
        %s137 = smul.u32 11, %s136
      $region20: #{cnn_block_encoder.7} parent=15 // pred_fallthru
        _
      // Predicated region
      $region21: #{cnn_block_encoder.7} parent=15 // pred_check
        %p138 = pneg %p74
      $region22: #{cnn_block_encoder.7} parent=15 // pred_check_branch
        %140 = sbr.rel (%p138) target = $region24
      $region23: #{cnn_block_encoder.7} parent=15 // pred_region
        %s141 = smul.u32 %s15, 4
        %s142 = sadd.s32 %s141, %s16
        %s143 = smul.u32 176, %s142
        %p144 = scmp.lt.s32.totalorder %s143, 1407
        %s145 = scalar_select %p144, %s143, 1407
        %s146 = smul.addr %s145, 8
        %s147 = scalar_lea.vmem %s1, %s146
        %s148 = smul.u32 %s15, 4
        %s149 = sadd.s32 %s148, %s16
        %s150 = smul.u32 176, %s149
      $region24: #{cnn_block_encoder.7} parent=15 // pred_fallthru
        _
    $region16: #{cnn_block_encoder.7} parent=5 // pred_fallthru
      _
    %p151 = scmp.le.s32.totalorder 1, %s8
    %p152 = scmp.lt.s32.totalorder %s8, 9
    %p153 = pnand %p151, %p152
    %p154 = pneg %p153
    // Predicated region
    $region25: #{cnn_block_encoder.7} parent=5 // pred_check
      _
    $region26: #{cnn_block_encoder.7} parent=5 // pred_check_branch
      %156 = sbr.rel (%p153) target = $region28
    $region27: #{cnn_block_encoder.7} parent=5 // pred_region
      %s157 = ssub.s32 %s8, 1
      %s158 = smul.u32 %s17, 4
      %s159 = sadd.s32 %s158, %s18
      %s160 = smul.u32 11, %s159
      %p161 = scmp.lt.s32.totalorder %s160, 87
      %s162 = scalar_select %p161, %s160, 87
      %s163 = smul.addr %s162, 8
      %s164 = scalar_lea.vmem %s0, %s163
      %p165 = pneg %p50
      %p166 = pneg %p47
      %s167 = smul.u32 %s17, 4
      %s168 = sadd.s32 %s167, %s18
      %s169 = smul.u32 176, %s168
      %p170 = scmp.lt.s32.totalorder %s169, 1407
      %s171 = scalar_select %p170, %s169, 1407
      %s172 = smul.addr %s171, 8
      %s173 = scalar_lea.vmem %s1, %s172
      %p174 = pneg %p80
      %p175 = pneg %p77
      %p176 = pneg %p106
      %p177 = pneg %p103
      %p178 = scmp.lt.s32.totalorder %s17, 1
      %s179 = scalar_select %p178, %s17, 1
      %s180 = smul.addr %s179, 8
      %s181 = scalar_lea.vmem %s2, %s180
      %s182 = smul.u32 %s17, 4
      %s183 = sadd.s32 %s182, %s18
      %s184 = smul.u32 11, %s183
      %p185 = scmp.lt.s32.totalorder %s184, 87
      %s186 = scalar_select %p185, %s184, 87
      %s187 = smul.addr %s186, 8
      %s188 = scalar_lea.vmem %s0, %s187
      %s189 = smul.u32 %s17, 4
      %s190 = sadd.s32 %s189, %s18
      %s191 = smul.u32 11, %s190
      %s192 = smul.u32 %s17, 4
      %s193 = sadd.s32 %s192, %s18
      %s194 = smul.u32 176, %s193
      %p195 = scmp.lt.s32.totalorder %s194, 1407
      %s196 = scalar_select %p195, %s194, 1407
      %s197 = smul.addr %s196, 8
      %s198 = scalar_lea.vmem %s1, %s197
      %s199 = smul.u32 %s17, 4
      %s200 = sadd.s32 %s199, %s18
      %s201 = smul.u32 176, %s200
      %p202 = scmp.lt.s32.totalorder %s17, 1
      %s203 = scalar_select %p202, %s17, 1
      %s204 = smul.addr %s203, 8
      %s205 = scalar_lea.vmem %s2, %s204
      %p206 = scmp.eq.s32.totalorder %s18, 0
      // Predicated region
      $region29: #{cnn_block_encoder.7} parent=27 // pred_check
        %p207 = pneg %p206
      $region30: #{cnn_block_encoder.7} parent=27 // pred_check_branch
        %209 = sbr.rel (%p207) target = $region32
      $region31: #{cnn_block_encoder.7} parent=27 // pred_region
        %210 = vst [vmem:[#allocation2] sm:$0xff] 0.0
      $region32: #{cnn_block_encoder.7} parent=27 // pred_fallthru
        _
      %v211 = vld [vmem:[#allocation2] sm:$0xff]
      %v212 = vld [vmem:[%s188] sm:$0xff]
      %v213 = vld [vmem:[%s188 + $0x8] sm:$0xff]
      %v214 = vld [vmem:[%s188 + $0x10] sm:$0xff]
      %v215 = vld [vmem:[%s188 + $0x18] sm:$0xff]
      %v216 = vld [vmem:[%s188 + $0x20] sm:$0xff]
      %v217 = vld [vmem:[%s188 + $0x28] sm:$0xff]
      %v218 = vld [vmem:[%s188 + $0x30] sm:$0xff]
      %v219 = vld [vmem:[%s188 + $0x38] sm:$0xff]
      %v220 = vld [vmem:[%s188 + $0x40] sm:$0xff]
      %v221 = vld [vmem:[%s188 + $0x48] sm:$0xff]
      %v222 = vld [vmem:[%s188 + $0x50] sm:$0xff]
      %v223 = vld [vmem:[%s198] sm:$0xff]
      %v224 = vld [vmem:[%s198 + $0x8] sm:$0xff]
      %v225 = vld [vmem:[%s198 + $0x10] sm:$0xff]
      %v226 = vld [vmem:[%s198 + $0x18] sm:$0xff]
      %v227 = vld [vmem:[%s198 + $0x20] sm:$0xff]
      %v228 = vld [vmem:[%s198 + $0x28] sm:$0xff]
      %v229 = vld [vmem:[%s198 + $0x30] sm:$0xff]
      %v230 = vld [vmem:[%s198 + $0x38] sm:$0xff]
      %v231 = vld [vmem:[%s198 + $0x40] sm:$0xff]
      %v232 = vld [vmem:[%s198 + $0x48] sm:$0xff]
      %v233 = vld [vmem:[%s198 + $0x50] sm:$0xff]
      %v234 = vld [vmem:[%s198 + $0x58] sm:$0xff]
      %v235 = vld [vmem:[%s198 + $0x60] sm:$0xff]
      %v236 = vld [vmem:[%s198 + $0x68] sm:$0xff]
      %v237 = vld [vmem:[%s198 + $0x70] sm:$0xff]
      %v238 = vld [vmem:[%s198 + $0x78] sm:$0xff]
      %v239 = vld [vmem:[%s198 + $0x80] sm:$0xff]
      %v240 = vld [vmem:[%s198 + $0x88] sm:$0xff]
      %v241 = vld [vmem:[%s198 + $0x90] sm:$0xff]
      %v242 = vld [vmem:[%s198 + $0x98] sm:$0xff]
      %v243 = vld [vmem:[%s198 + $0xa0] sm:$0xff]
      %v244 = vld [vmem:[%s198 + $0xa8] sm:$0xff]
      %v245 = vld [vmem:[%s198 + $0xb0] sm:$0xff]
      %v246 = vld [vmem:[%s198 + $0xb8] sm:$0xff]
      %v247 = vld [vmem:[%s198 + $0xc0] sm:$0xff]
      %v248 = vld [vmem:[%s198 + $0xc8] sm:$0xff]
      %v249 = vld [vmem:[%s198 + $0xd0] sm:$0xff]
      %v250 = vld [vmem:[%s198 + $0xd8] sm:$0xff]
      %v251 = vld [vmem:[%s198 + $0xe0] sm:$0xff]
      %v252 = vld [vmem:[%s198 + $0xe8] sm:$0xff]
      %v253 = vld [vmem:[%s198 + $0xf0] sm:$0xff]
      %v254 = vld [vmem:[%s198 + $0xf8] sm:$0xff]
      %v255 = vld [vmem:[%s198 + $0x100] sm:$0xff]
      %v256 = vld [vmem:[%s198 + $0x108] sm:$0xff]
      %v257 = vld [vmem:[%s198 + $0x110] sm:$0xff]
      %v258 = vld [vmem:[%s198 + $0x118] sm:$0xff]
      %v259 = vld [vmem:[%s198 + $0x120] sm:$0xff]
      %v260 = vld [vmem:[%s198 + $0x128] sm:$0xff]
      %v261 = vld [vmem:[%s198 + $0x130] sm:$0xff]
      %v262 = vld [vmem:[%s198 + $0x138] sm:$0xff]
      %v263 = vld [vmem:[%s198 + $0x140] sm:$0xff]
      %v264 = vld [vmem:[%s198 + $0x148] sm:$0xff]
      %v265 = vld [vmem:[%s198 + $0x150] sm:$0xff]
      %v266 = vld [vmem:[%s198 + $0x158] sm:$0xff]
      %v267 = vld [vmem:[%s198 + $0x160] sm:$0xff]
      %v268 = vld [vmem:[%s198 + $0x168] sm:$0xff]
      %v269 = vld [vmem:[%s198 + $0x170] sm:$0xff]
      %v270 = vld [vmem:[%s198 + $0x178] sm:$0xff]
      %v271 = vld [vmem:[%s198 + $0x180] sm:$0xff]
      %v272 = vld [vmem:[%s198 + $0x188] sm:$0xff]
      %v273 = vld [vmem:[%s198 + $0x190] sm:$0xff]
      %v274 = vld [vmem:[%s198 + $0x198] sm:$0xff]
      %v275 = vld [vmem:[%s198 + $0x1a0] sm:$0xff]
      %v276 = vld [vmem:[%s198 + $0x1a8] sm:$0xff]
      %v277 = vld [vmem:[%s198 + $0x1b0] sm:$0xff]
      %v278 = vld [vmem:[%s198 + $0x1b8] sm:$0xff]
      %v279 = vld [vmem:[%s198 + $0x1c0] sm:$0xff]
      %v280 = vld [vmem:[%s198 + $0x1c8] sm:$0xff]
      %v281 = vld [vmem:[%s198 + $0x1d0] sm:$0xff]
      %v282 = vld [vmem:[%s198 + $0x1d8] sm:$0xff]
      %v283 = vld [vmem:[%s198 + $0x1e0] sm:$0xff]
      %v284 = vld [vmem:[%s198 + $0x1e8] sm:$0xff]
      %v285 = vld [vmem:[%s198 + $0x1f0] sm:$0xff]
      %v286 = vld [vmem:[%s198 + $0x1f8] sm:$0xff]
      %v287 = vld [vmem:[%s198 + $0x200] sm:$0xff]
      %v288 = vld [vmem:[%s198 + $0x208] sm:$0xff]
      %v289 = vld [vmem:[%s198 + $0x210] sm:$0xff]
      %v290 = vld [vmem:[%s198 + $0x218] sm:$0xff]
      %v291 = vld [vmem:[%s198 + $0x220] sm:$0xff]
      %v292 = vld [vmem:[%s198 + $0x228] sm:$0xff]
      %v293 = vld [vmem:[%s198 + $0x230] sm:$0xff]
      %v294 = vld [vmem:[%s198 + $0x238] sm:$0xff]
      %v295 = vld [vmem:[%s198 + $0x240] sm:$0xff]
      %v296 = vld [vmem:[%s198 + $0x248] sm:$0xff]
      %v297 = vld [vmem:[%s198 + $0x250] sm:$0xff]
      %v298 = vld [vmem:[%s198 + $0x258] sm:$0xff]
      %v299 = vld [vmem:[%s198 + $0x260] sm:$0xff]
      %v300 = vld [vmem:[%s198 + $0x268] sm:$0xff]
      %v301 = vld [vmem:[%s198 + $0x270] sm:$0xff]
      %v302 = vld [vmem:[%s198 + $0x278] sm:$0xff]
      %v303 = vld [vmem:[%s198 + $0x280] sm:$0xff]
      %v304 = vld [vmem:[%s198 + $0x288] sm:$0xff]
      %v305 = vld [vmem:[%s198 + $0x290] sm:$0xff]
      %v306 = vld [vmem:[%s198 + $0x298] sm:$0xff]
      %v307 = vld [vmem:[%s198 + $0x2a0] sm:$0xff]
      %v308 = vld [vmem:[%s198 + $0x2a8] sm:$0xff]
      %v309 = vld [vmem:[%s198 + $0x2b0] sm:$0xff]
      %v310 = vld [vmem:[%s198 + $0x2b8] sm:$0xff]
      %v311 = vld [vmem:[%s198 + $0x2c0] sm:$0xff]
      %v312 = vld [vmem:[%s198 + $0x2c8] sm:$0xff]
      %v313 = vld [vmem:[%s198 + $0x2d0] sm:$0xff]
      %v314 = vld [vmem:[%s198 + $0x2d8] sm:$0xff]
      %v315 = vld [vmem:[%s198 + $0x2e0] sm:$0xff]
      %v316 = vld [vmem:[%s198 + $0x2e8] sm:$0xff]
      %v317 = vld [vmem:[%s198 + $0x2f0] sm:$0xff]
      %v318 = vld [vmem:[%s198 + $0x2f8] sm:$0xff]
      %v319 = vld [vmem:[%s198 + $0x300] sm:$0xff]
      %v320 = vld [vmem:[%s198 + $0x308] sm:$0xff]
      %v321 = vld [vmem:[%s198 + $0x310] sm:$0xff]
      %v322 = vld [vmem:[%s198 + $0x318] sm:$0xff]
      %v323 = vld [vmem:[%s198 + $0x320] sm:$0xff]
      %v324 = vld [vmem:[%s198 + $0x328] sm:$0xff]
      %v325 = vld [vmem:[%s198 + $0x330] sm:$0xff]
      %v326 = vld [vmem:[%s198 + $0x338] sm:$0xff]
      %v327 = vld [vmem:[%s198 + $0x340] sm:$0xff]
      %v328 = vld [vmem:[%s198 + $0x348] sm:$0xff]
      %v329 = vld [vmem:[%s198 + $0x350] sm:$0xff]
      %v330 = vld [vmem:[%s198 + $0x358] sm:$0xff]
      %v331 = vld [vmem:[%s198 + $0x360] sm:$0xff]
      %v332 = vld [vmem:[%s198 + $0x368] sm:$0xff]
      %v333 = vld [vmem:[%s198 + $0x370] sm:$0xff]
      %v334 = vld [vmem:[%s198 + $0x378] sm:$0xff]
      %v335 = vld [vmem:[%s198 + $0x380] sm:$0xff]
      %v336 = vld [vmem:[%s198 + $0x388] sm:$0xff]
      %v337 = vld [vmem:[%s198 + $0x390] sm:$0xff]
      %v338 = vld [vmem:[%s198 + $0x398] sm:$0xff]
      %v339 = vld [vmem:[%s198 + $0x3a0] sm:$0xff]
      %v340 = vld [vmem:[%s198 + $0x3a8] sm:$0xff]
      %v341 = vld [vmem:[%s198 + $0x3b0] sm:$0xff]
      %v342 = vld [vmem:[%s198 + $0x3b8] sm:$0xff]
      %v343 = vld [vmem:[%s198 + $0x3c0] sm:$0xff]
      %v344 = vld [vmem:[%s198 + $0x3c8] sm:$0xff]
      %v345 = vld [vmem:[%s198 + $0x3d0] sm:$0xff]
      %v346 = vld [vmem:[%s198 + $0x3d8] sm:$0xff]
      %v347 = vld [vmem:[%s198 + $0x3e0] sm:$0xff]
      %v348 = vld [vmem:[%s198 + $0x3e8] sm:$0xff]
      %v349 = vld [vmem:[%s198 + $0x3f0] sm:$0xff]
      %v350 = vld [vmem:[%s198 + $0x3f8] sm:$0xff]
      %v351 = vld [vmem:[%s198 + $0x400] sm:$0xff]
      %v352 = vld [vmem:[%s198 + $0x408] sm:$0xff]
      %v353 = vld [vmem:[%s198 + $0x410] sm:$0xff]
      %v354 = vld [vmem:[%s198 + $0x418] sm:$0xff]
      %v355 = vld [vmem:[%s198 + $0x420] sm:$0xff]
      %v356 = vld [vmem:[%s198 + $0x428] sm:$0xff]
      %v357 = vld [vmem:[%s198 + $0x430] sm:$0xff]
      %v358 = vld [vmem:[%s198 + $0x438] sm:$0xff]
      %v359 = vld [vmem:[%s198 + $0x440] sm:$0xff]
      %v360 = vld [vmem:[%s198 + $0x448] sm:$0xff]
      %v361 = vld [vmem:[%s198 + $0x450] sm:$0xff]
      %v362 = vld [vmem:[%s198 + $0x458] sm:$0xff]
      %v363 = vld [vmem:[%s198 + $0x460] sm:$0xff]
      %v364 = vld [vmem:[%s198 + $0x468] sm:$0xff]
      %v365 = vld [vmem:[%s198 + $0x470] sm:$0xff]
      %v366 = vld [vmem:[%s198 + $0x478] sm:$0xff]
      %v367 = vld [vmem:[%s198 + $0x480] sm:$0xff]
      %v368 = vld [vmem:[%s198 + $0x488] sm:$0xff]
      %v369 = vld [vmem:[%s198 + $0x490] sm:$0xff]
      %v370 = vld [vmem:[%s198 + $0x498] sm:$0xff]
      %v371 = vld [vmem:[%s198 + $0x4a0] sm:$0xff]
      %v372 = vld [vmem:[%s198 + $0x4a8] sm:$0xff]
      %v373 = vld [vmem:[%s198 + $0x4b0] sm:$0xff]
      %v374 = vld [vmem:[%s198 + $0x4b8] sm:$0xff]
      %v375 = vld [vmem:[%s198 + $0x4c0] sm:$0xff]
      %v376 = vld [vmem:[%s198 + $0x4c8] sm:$0xff]
      %v377 = vld [vmem:[%s198 + $0x4d0] sm:$0xff]
      %v378 = vld [vmem:[%s198 + $0x4d8] sm:$0xff]
      %v379 = vld [vmem:[%s198 + $0x4e0] sm:$0xff]
      %v380 = vld [vmem:[%s198 + $0x4e8] sm:$0xff]
      %v381 = vld [vmem:[%s198 + $0x4f0] sm:$0xff]
      %v382 = vld [vmem:[%s198 + $0x4f8] sm:$0xff]
      %v383 = vld [vmem:[%s198 + $0x500] sm:$0xff]
      %v384 = vld [vmem:[%s198 + $0x508] sm:$0xff]
      %v385 = vld [vmem:[%s198 + $0x510] sm:$0xff]
      %v386 = vld [vmem:[%s198 + $0x518] sm:$0xff]
      %v387 = vld [vmem:[%s198 + $0x520] sm:$0xff]
      %v388 = vld [vmem:[%s198 + $0x528] sm:$0xff]
      %v389 = vld [vmem:[%s198 + $0x530] sm:$0xff]
      %v390 = vld [vmem:[%s198 + $0x538] sm:$0xff]
      %v391 = vld [vmem:[%s198 + $0x540] sm:$0xff]
      %v392 = vld [vmem:[%s198 + $0x548] sm:$0xff]
      %v393 = vld [vmem:[%s198 + $0x550] sm:$0xff]
      %v394 = vld [vmem:[%s198 + $0x558] sm:$0xff]
      %v395 = vld [vmem:[%s198 + $0x560] sm:$0xff]
      %v396 = vld [vmem:[%s198 + $0x568] sm:$0xff]
      %v397 = vld [vmem:[%s198 + $0x570] sm:$0xff]
      %v398 = vld [vmem:[%s198 + $0x578] sm:$0xff]
      %399 = vmatprep.subr.mxu0 0.0
      %400 = vmatpush1.msra.mxu0 %v238
      %401 = vmatprep.subr.mxu0 0.0
      %402 = vmatpush1.msra.mxu0 %v237
      %403 = vmatprep.subr.mxu0 0.0
      %404 = vmatpush1.msra.mxu0 %v236
      %405 = vmatprep.subr.mxu0 0.0
      %406 = vmatpush1.msra.mxu0 %v235
      %407 = vmatprep.subr.mxu0 0.0
      %408 = vmatpush1.msra.mxu0 %v234
      %409 = vmatprep.subr.mxu0 0.0
      %410 = vmatpush1.msra.mxu0 %v233
      %411 = vmatprep.subr.mxu0 0.0
      %412 = vmatpush1.msra.mxu0 %v232
      %413 = vmatprep.subr.mxu0 0.0
      %414 = vmatpush1.msra.mxu0 %v231
      %415 = vmatprep.subr.mxu0 0.0
      %416 = vmatpush1.msra.mxu0 %v230
      %417 = vmatprep.subr.mxu0 0.0
      %418 = vmatpush1.msra.mxu0 %v229
      %419 = vmatprep.subr.mxu0 0.0
      %420 = vmatpush1.msra.mxu0 %v228
      %421 = vmatprep.subr.mxu0 0.0
      %422 = vmatpush1.msra.mxu0 %v227
      %423 = vmatprep.subr.mxu0 0.0
      %424 = vmatpush1.msra.mxu0 %v226
      %425 = vmatprep.subr.mxu0 0.0
      %426 = vmatpush1.msra.mxu0 %v225
      %427 = vmatprep.subr.mxu0 0.0
      %428 = vmatpush1.msra.mxu0 %v224
      %429 = vmatprep.subr.mxu0 0.0
      %430 = vmatpush1.msra.mxu0 %v223
      %431 = vmatprep.subr.mxu0 0.0
      %432 = vmatpush2.msra.mxu0 %v254
      %433 = vmatprep.subr.mxu0 0.0
      %434 = vmatpush2.msra.mxu0 %v253
      %435 = vmatprep.subr.mxu0 0.0
      %436 = vmatpush2.msra.mxu0 %v252
      %437 = vmatprep.subr.mxu0 0.0
      %438 = vmatpush2.msra.mxu0 %v251
      %439 = vmatprep.subr.mxu0 0.0
      %440 = vmatpush2.msra.mxu0 %v250
      %441 = vmatprep.subr.mxu0 0.0
      %442 = vmatpush2.msra.mxu0 %v249
      %443 = vmatprep.subr.mxu0 0.0
      %444 = vmatpush2.msra.mxu0 %v248
      %445 = vmatprep.subr.mxu0 0.0
      %446 = vmatpush2.msra.mxu0 %v247
      %447 = vmatprep.subr.mxu0 0.0
      %448 = vmatpush2.msra.mxu0 %v246
      %449 = vmatprep.subr.mxu0 0.0
      %450 = vmatpush2.msra.mxu0 %v245
      %451 = vmatprep.subr.mxu0 0.0
      %452 = vmatpush2.msra.mxu0 %v244
      %453 = vmatprep.subr.mxu0 0.0
      %454 = vmatpush2.msra.mxu0 %v243
      %455 = vmatprep.subr.mxu0 0.0
      %456 = vmatpush2.msra.mxu0 %v242
      %457 = vmatprep.subr.mxu0 0.0
      %458 = vmatpush2.msra.mxu0 %v241
      %459 = vmatprep.subr.mxu0 0.0
      %460 = vmatpush2.msra.mxu0 %v240
      %461 = vmatprep.subr.mxu0 0.0
      %462 = vmatpush2.msra.mxu0 %v239
      %463 = vmatprep.mubr.f32.mxu0 %v213
      %464 = vmatmul.mubr.f32.gmra.mxu0 %v212
      %v465 = vpop.f32.mrf.mxu0
      %v466 = vadd.f32 0.0, %v465
      %v467 = vpop.f32.mrf.mxu0
      %468 = vdwg.mxu0
      %469 = vmatprep.subr.mxu0 0.0
      %470 = vmatpush1.msra.mxu0 %v270
      %471 = vmatprep.subr.mxu0 0.0
      %472 = vmatpush1.msra.mxu0 %v269
      %473 = vmatprep.subr.mxu0 0.0
      %474 = vmatpush1.msra.mxu0 %v268
      %475 = vmatprep.subr.mxu0 0.0
      %476 = vmatpush1.msra.mxu0 %v267
      %477 = vmatprep.subr.mxu0 0.0
      %478 = vmatpush1.msra.mxu0 %v266
      %479 = vmatprep.subr.mxu0 0.0
      %480 = vmatpush1.msra.mxu0 %v265
      %481 = vmatprep.subr.mxu0 0.0
      %482 = vmatpush1.msra.mxu0 %v264
      %483 = vmatprep.subr.mxu0 0.0
      %484 = vmatpush1.msra.mxu0 %v263
      %485 = vmatprep.subr.mxu0 0.0
      %486 = vmatpush1.msra.mxu0 %v262
      %487 = vmatprep.subr.mxu0 0.0
      %488 = vmatpush1.msra.mxu0 %v261
      %489 = vmatprep.subr.mxu0 0.0
      %490 = vmatpush1.msra.mxu0 %v260
      %491 = vmatprep.subr.mxu0 0.0
      %492 = vmatpush1.msra.mxu0 %v259
      %493 = vmatprep.subr.mxu0 0.0
      %494 = vmatpush1.msra.mxu0 %v258
      %495 = vmatprep.subr.mxu0 0.0
      %496 = vmatpush1.msra.mxu0 %v257
      %497 = vmatprep.subr.mxu0 0.0
      %498 = vmatpush1.msra.mxu0 %v256
      %499 = vmatprep.subr.mxu0 0.0
      %500 = vmatpush1.msra.mxu0 %v255
      %501 = vmatprep.subr.mxu0 0.0
      %502 = vmatpush2.msra.mxu0 %v286
      %503 = vmatprep.subr.mxu0 0.0
      %504 = vmatpush2.msra.mxu0 %v285
      %505 = vmatprep.subr.mxu0 0.0
      %506 = vmatpush2.msra.mxu0 %v284
      %507 = vmatprep.subr.mxu0 0.0
      %508 = vmatpush2.msra.mxu0 %v283
      %509 = vmatprep.subr.mxu0 0.0
      %510 = vmatpush2.msra.mxu0 %v282
      %511 = vmatprep.subr.mxu0 0.0
      %512 = vmatpush2.msra.mxu0 %v281
      %513 = vmatprep.subr.mxu0 0.0
      %514 = vmatpush2.msra.mxu0 %v280
      %515 = vmatprep.subr.mxu0 0.0
      %516 = vmatpush2.msra.mxu0 %v279
      %517 = vmatprep.subr.mxu0 0.0
      %518 = vmatpush2.msra.mxu0 %v278
      %519 = vmatprep.subr.mxu0 0.0
      %520 = vmatpush2.msra.mxu0 %v277
      %521 = vmatprep.subr.mxu0 0.0
      %522 = vmatpush2.msra.mxu0 %v276
      %523 = vmatprep.subr.mxu0 0.0
      %524 = vmatpush2.msra.mxu0 %v275
      %525 = vmatprep.subr.mxu0 0.0
      %526 = vmatpush2.msra.mxu0 %v274
      %527 = vmatprep.subr.mxu0 0.0
      %528 = vmatpush2.msra.mxu0 %v273
      %529 = vmatprep.subr.mxu0 0.0
      %530 = vmatpush2.msra.mxu0 %v272
      %531 = vmatprep.subr.mxu0 0.0
      %532 = vmatpush2.msra.mxu0 %v271
      %533 = vmatprep.mubr.f32.mxu0 %v215
      %534 = vmatmul.mubr.f32.gmra.mxu0 %v214
      %v535 = vpop.f32.mrf.mxu0
      %v536 = vadd.f32 %v466, %v535
      %v537 = vpop.f32.mrf.mxu0
      %538 = vdwg.mxu0
      %539 = vmatprep.subr.mxu0 0.0
      %540 = vmatpush1.msra.mxu0 %v302
      %541 = vmatprep.subr.mxu0 0.0
      %542 = vmatpush1.msra.mxu0 %v301
      %543 = vmatprep.subr.mxu0 0.0
      %544 = vmatpush1.msra.mxu0 %v300
      %545 = vmatprep.subr.mxu0 0.0
      %546 = vmatpush1.msra.mxu0 %v299
      %547 = vmatprep.subr.mxu0 0.0
      %548 = vmatpush1.msra.mxu0 %v298
      %549 = vmatprep.subr.mxu0 0.0
      %550 = vmatpush1.msra.mxu0 %v297
      %551 = vmatprep.subr.mxu0 0.0
      %552 = vmatpush1.msra.mxu0 %v296
      %553 = vmatprep.subr.mxu0 0.0
      %554 = vmatpush1.msra.mxu0 %v295
      %555 = vmatprep.subr.mxu0 0.0
      %556 = vmatpush1.msra.mxu0 %v294
      %557 = vmatprep.subr.mxu0 0.0
      %558 = vmatpush1.msra.mxu0 %v293
      %559 = vmatprep.subr.mxu0 0.0
      %560 = vmatpush1.msra.mxu0 %v292
      %561 = vmatprep.subr.mxu0 0.0
      %562 = vmatpush1.msra.mxu0 %v291
      %563 = vmatprep.subr.mxu0 0.0
      %564 = vmatpush1.msra.mxu0 %v290
      %565 = vmatprep.subr.mxu0 0.0
      %566 = vmatpush1.msra.mxu0 %v289
      %567 = vmatprep.subr.mxu0 0.0
      %568 = vmatpush1.msra.mxu0 %v288
      %569 = vmatprep.subr.mxu0 0.0
      %570 = vmatpush1.msra.mxu0 %v287
      %571 = vmatprep.subr.mxu0 0.0
      %572 = vmatpush2.msra.mxu0 %v318
      %573 = vmatprep.subr.mxu0 0.0
      %574 = vmatpush2.msra.mxu0 %v317
      %575 = vmatprep.subr.mxu0 0.0
      %576 = vmatpush2.msra.mxu0 %v316
      %577 = vmatprep.subr.mxu0 0.0
      %578 = vmatpush2.msra.mxu0 %v315
      %579 = vmatprep.subr.mxu0 0.0
      %580 = vmatpush2.msra.mxu0 %v314
      %581 = vmatprep.subr.mxu0 0.0
      %582 = vmatpush2.msra.mxu0 %v313
      %583 = vmatprep.subr.mxu0 0.0
      %584 = vmatpush2.msra.mxu0 %v312
      %585 = vmatprep.subr.mxu0 0.0
      %586 = vmatpush2.msra.mxu0 %v311
      %587 = vmatprep.subr.mxu0 0.0
      %588 = vmatpush2.msra.mxu0 %v310
      %589 = vmatprep.subr.mxu0 0.0
      %590 = vmatpush2.msra.mxu0 %v309
      %591 = vmatprep.subr.mxu0 0.0
      %592 = vmatpush2.msra.mxu0 %v308
      %593 = vmatprep.subr.mxu0 0.0
      %594 = vmatpush2.msra.mxu0 %v307
      %595 = vmatprep.subr.mxu0 0.0
      %596 = vmatpush2.msra.mxu0 %v306
      %597 = vmatprep.subr.mxu0 0.0
      %598 = vmatpush2.msra.mxu0 %v305
      %599 = vmatprep.subr.mxu0 0.0
      %600 = vmatpush2.msra.mxu0 %v304
      %601 = vmatprep.subr.mxu0 0.0
      %602 = vmatpush2.msra.mxu0 %v303
      %603 = vmatprep.mubr.f32.mxu0 %v217
      %604 = vmatmul.mubr.f32.gmra.mxu0 %v216
      %v605 = vpop.f32.mrf.mxu0
      %v606 = vadd.f32 %v536, %v605
      %v607 = vpop.f32.mrf.mxu0
      %608 = vdwg.mxu0
      %609 = vmatprep.subr.mxu0 0.0
      %610 = vmatpush1.msra.mxu0 %v334
      %611 = vmatprep.subr.mxu0 0.0
      %612 = vmatpush1.msra.mxu0 %v333
      %613 = vmatprep.subr.mxu0 0.0
      %614 = vmatpush1.msra.mxu0 %v332
      %615 = vmatprep.subr.mxu0 0.0
      %616 = vmatpush1.msra.mxu0 %v331
      %617 = vmatprep.subr.mxu0 0.0
      %618 = vmatpush1.msra.mxu0 %v330
      %619 = vmatprep.subr.mxu0 0.0
      %620 = vmatpush1.msra.mxu0 %v329
      %621 = vmatprep.subr.mxu0 0.0
      %622 = vmatpush1.msra.mxu0 %v328
      %623 = vmatprep.subr.mxu0 0.0
      %624 = vmatpush1.msra.mxu0 %v327
      %625 = vmatprep.subr.mxu0 0.0
      %626 = vmatpush1.msra.mxu0 %v326
      %627 = vmatprep.subr.mxu0 0.0
      %628 = vmatpush1.msra.mxu0 %v325
      %629 = vmatprep.subr.mxu0 0.0
      %630 = vmatpush1.msra.mxu0 %v324
      %631 = vmatprep.subr.mxu0 0.0
      %632 = vmatpush1.msra.mxu0 %v323
      %633 = vmatprep.subr.mxu0 0.0
      %634 = vmatpush1.msra.mxu0 %v322
      %635 = vmatprep.subr.mxu0 0.0
      %636 = vmatpush1.msra.mxu0 %v321
      %637 = vmatprep.subr.mxu0 0.0
      %638 = vmatpush1.msra.mxu0 %v320
      %639 = vmatprep.subr.mxu0 0.0
      %640 = vmatpush1.msra.mxu0 %v319
      %641 = vmatprep.subr.mxu0 0.0
      %642 = vmatpush2.msra.mxu0 %v350
      %643 = vmatprep.subr.mxu0 0.0
      %644 = vmatpush2.msra.mxu0 %v349
      %645 = vmatprep.subr.mxu0 0.0
      %646 = vmatpush2.msra.mxu0 %v348
      %647 = vmatprep.subr.mxu0 0.0
      %648 = vmatpush2.msra.mxu0 %v347
      %649 = vmatprep.subr.mxu0 0.0
      %650 = vmatpush2.msra.mxu0 %v346
      %651 = vmatprep.subr.mxu0 0.0
      %652 = vmatpush2.msra.mxu0 %v345
      %653 = vmatprep.subr.mxu0 0.0
      %654 = vmatpush2.msra.mxu0 %v344
      %655 = vmatprep.subr.mxu0 0.0
      %656 = vmatpush2.msra.mxu0 %v343
      %657 = vmatprep.subr.mxu0 0.0
      %658 = vmatpush2.msra.mxu0 %v342
      %659 = vmatprep.subr.mxu0 0.0
      %660 = vmatpush2.msra.mxu0 %v341
      %661 = vmatprep.subr.mxu0 0.0
      %662 = vmatpush2.msra.mxu0 %v340
      %663 = vmatprep.subr.mxu0 0.0
      %664 = vmatpush2.msra.mxu0 %v339
      %665 = vmatprep.subr.mxu0 0.0
      %666 = vmatpush2.msra.mxu0 %v338
      %667 = vmatprep.subr.mxu0 0.0
      %668 = vmatpush2.msra.mxu0 %v337
      %669 = vmatprep.subr.mxu0 0.0
      %670 = vmatpush2.msra.mxu0 %v336
      %671 = vmatprep.subr.mxu0 0.0
      %672 = vmatpush2.msra.mxu0 %v335
      %673 = vmatprep.mubr.f32.mxu0 %v219
      %674 = vmatmul.mubr.f32.gmra.mxu0 %v218
      %v675 = vpop.f32.mrf.mxu0
      %v676 = vadd.f32 %v606, %v675
      %v677 = vpop.f32.mrf.mxu0
      %678 = vdwg.mxu0
      %679 = vmatprep.subr.mxu0 0.0
      %680 = vmatpush1.msra.mxu0 %v366
      %681 = vmatprep.subr.mxu0 0.0
      %682 = vmatpush1.msra.mxu0 %v365
      %683 = vmatprep.subr.mxu0 0.0
      %684 = vmatpush1.msra.mxu0 %v364
      %685 = vmatprep.subr.mxu0 0.0
      %686 = vmatpush1.msra.mxu0 %v363
      %687 = vmatprep.subr.mxu0 0.0
      %688 = vmatpush1.msra.mxu0 %v362
      %689 = vmatprep.subr.mxu0 0.0
      %690 = vmatpush1.msra.mxu0 %v361
      %691 = vmatprep.subr.mxu0 0.0
      %692 = vmatpush1.msra.mxu0 %v360
      %693 = vmatprep.subr.mxu0 0.0
      %694 = vmatpush1.msra.mxu0 %v359
      %695 = vmatprep.subr.mxu0 0.0
      %696 = vmatpush1.msra.mxu0 %v358
      %697 = vmatprep.subr.mxu0 0.0
      %698 = vmatpush1.msra.mxu0 %v357
      %699 = vmatprep.subr.mxu0 0.0
      %700 = vmatpush1.msra.mxu0 %v356
      %701 = vmatprep.subr.mxu0 0.0
      %702 = vmatpush1.msra.mxu0 %v355
      %703 = vmatprep.subr.mxu0 0.0
      %704 = vmatpush1.msra.mxu0 %v354
      %705 = vmatprep.subr.mxu0 0.0
      %706 = vmatpush1.msra.mxu0 %v353
      %707 = vmatprep.subr.mxu0 0.0
      %708 = vmatpush1.msra.mxu0 %v352
      %709 = vmatprep.subr.mxu0 0.0
      %710 = vmatpush1.msra.mxu0 %v351
      %711 = vmatprep.subr.mxu0 0.0
      %712 = vmatpush2.msra.mxu0 %v382
      %713 = vmatprep.subr.mxu0 0.0
      %714 = vmatpush2.msra.mxu0 %v381
      %715 = vmatprep.subr.mxu0 0.0
      %716 = vmatpush2.msra.mxu0 %v380
      %717 = vmatprep.subr.mxu0 0.0
      %718 = vmatpush2.msra.mxu0 %v379
      %719 = vmatprep.subr.mxu0 0.0
      %720 = vmatpush2.msra.mxu0 %v378
      %721 = vmatprep.subr.mxu0 0.0
      %722 = vmatpush2.msra.mxu0 %v377
      %723 = vmatprep.subr.mxu0 0.0
      %724 = vmatpush2.msra.mxu0 %v376
      %725 = vmatprep.subr.mxu0 0.0
      %726 = vmatpush2.msra.mxu0 %v375
      %727 = vmatprep.subr.mxu0 0.0
      %728 = vmatpush2.msra.mxu0 %v374
      %729 = vmatprep.subr.mxu0 0.0
      %730 = vmatpush2.msra.mxu0 %v373
      %731 = vmatprep.subr.mxu0 0.0
      %732 = vmatpush2.msra.mxu0 %v372
      %733 = vmatprep.subr.mxu0 0.0
      %734 = vmatpush2.msra.mxu0 %v371
      %735 = vmatprep.subr.mxu0 0.0
      %736 = vmatpush2.msra.mxu0 %v370
      %737 = vmatprep.subr.mxu0 0.0
      %738 = vmatpush2.msra.mxu0 %v369
      %739 = vmatprep.subr.mxu0 0.0
      %740 = vmatpush2.msra.mxu0 %v368
      %741 = vmatprep.subr.mxu0 0.0
      %742 = vmatpush2.msra.mxu0 %v367
      %743 = vmatprep.mubr.f32.mxu0 %v221
      %744 = vmatmul.mubr.f32.gmra.mxu0 %v220
      %v745 = vpop.f32.mrf.mxu0
      %v746 = vadd.f32 %v676, %v745
      %v747 = vpop.f32.mrf.mxu0
      %748 = vdwg.mxu0
      %749 = vmatprep.subr.mxu0 0.0
      %750 = vmatpush1.msra.mxu0 %v398
      %751 = vmatprep.subr.mxu0 0.0
      %752 = vmatpush1.msra.mxu0 %v397
      %753 = vmatprep.subr.mxu0 0.0
      %754 = vmatpush1.msra.mxu0 %v396
      %755 = vmatprep.subr.mxu0 0.0
      %756 = vmatpush1.msra.mxu0 %v395
      %757 = vmatprep.subr.mxu0 0.0
      %758 = vmatpush1.msra.mxu0 %v394
      %759 = vmatprep.subr.mxu0 0.0
      %760 = vmatpush1.msra.mxu0 %v393
      %761 = vmatprep.subr.mxu0 0.0
      %762 = vmatpush1.msra.mxu0 %v392
      %763 = vmatprep.subr.mxu0 0.0
      %764 = vmatpush1.msra.mxu0 %v391
      %765 = vmatprep.subr.mxu0 0.0
      %766 = vmatpush1.msra.mxu0 %v390
      %767 = vmatprep.subr.mxu0 0.0
      %768 = vmatpush1.msra.mxu0 %v389
      %769 = vmatprep.subr.mxu0 0.0
      %770 = vmatpush1.msra.mxu0 %v388
      %771 = vmatprep.subr.mxu0 0.0
      %772 = vmatpush1.msra.mxu0 %v387
      %773 = vmatprep.subr.mxu0 0.0
      %774 = vmatpush1.msra.mxu0 %v386
      %775 = vmatprep.subr.mxu0 0.0
      %776 = vmatpush1.msra.mxu0 %v385
      %777 = vmatprep.subr.mxu0 0.0
      %778 = vmatpush1.msra.mxu0 %v384
      %779 = vmatprep.subr.mxu0 0.0
      %780 = vmatpush1.msra.mxu0 %v383
      %781 = vmatprep.subr.mxu0 0.0
      %782 = vmatpush2.msra.mxu0 0.0
      %783 = vmatprep.subr.mxu0 0.0
      %784 = vmatpush2.msra.mxu0 0.0
      %785 = vmatprep.subr.mxu0 0.0
      %786 = vmatpush2.msra.mxu0 0.0
      %787 = vmatprep.subr.mxu0 0.0
      %788 = vmatpush2.msra.mxu0 0.0
      %789 = vmatprep.subr.mxu0 0.0
      %790 = vmatpush2.msra.mxu0 0.0
      %791 = vmatprep.subr.mxu0 0.0
      %792 = vmatpush2.msra.mxu0 0.0
      %793 = vmatprep.subr.mxu0 0.0
      %794 = vmatpush2.msra.mxu0 0.0
      %795 = vmatprep.subr.mxu0 0.0
      %796 = vmatpush2.msra.mxu0 0.0
      %797 = vmatprep.subr.mxu0 0.0
      %798 = vmatpush2.msra.mxu0 0.0
      %799 = vmatprep.subr.mxu0 0.0
      %800 = vmatpush2.msra.mxu0 0.0
      %801 = vmatprep.subr.mxu0 0.0
      %802 = vmatpush2.msra.mxu0 0.0
      %803 = vmatprep.subr.mxu0 0.0
      %804 = vmatpush2.msra.mxu0 0.0
      %805 = vmatprep.subr.mxu0 0.0
      %806 = vmatpush2.msra.mxu0 0.0
      %807 = vmatprep.subr.mxu0 0.0
      %808 = vmatpush2.msra.mxu0 0.0
      %809 = vmatprep.subr.mxu0 0.0
      %810 = vmatpush2.msra.mxu0 0.0
      %811 = vmatprep.subr.mxu0 0.0
      %812 = vmatpush2.msra.mxu0 0.0
      %813 = vmatprep.mubr.f32.mxu0 0.0
      %814 = vmatmul.mubr.f32.gmra.mxu0 %v222
      %v815 = vpop.f32.mrf.mxu0
      %v816 = vadd.f32 %v746, %v815
      %v817 = vpop.f32.mrf.mxu0
      %818 = vdwg.mxu0
      %v819 = vadd.f32 %v211, %v816
      %820 = vst [vmem:[#allocation2] sm:$0xff] %v819
      %p821 = scmp.eq.s32.totalorder %s18, 3
      // Predicated region
      $region33: #{cnn_block_encoder.7} parent=27 // pred_check
        %p822 = pneg %p821
      $region34: #{cnn_block_encoder.7} parent=27 // pred_check_branch
        %824 = sbr.rel (%p822) target = $region36
      $region35: #{cnn_block_encoder.7} parent=27 // pred_region
        %v825 = vld [vmem:[#allocation2] sm:$0xff]
        %826 = vst [vmem:[%s205] sm:$0xff] %v825
      $region36: #{cnn_block_encoder.7} parent=27 // pred_fallthru
        _
      %p827 = scmp.lt.s32.totalorder %s17, 1
      %s828 = scalar_select %p827, %s17, 1
      %s829 = smul.addr %s828, 8
      %s830 = scalar_lea.vmem %s2, %s829
      // Predicated region
      $region37: #{cnn_block_encoder.7} parent=27 // pred_check
        %p831 = pneg %p103
      $region38: #{cnn_block_encoder.7} parent=27 // pred_check_branch
        %833 = sbr.rel (%p831) target = $region40
      $region39: #{cnn_block_encoder.7} parent=27 // pred_region
        _
      $region40: #{cnn_block_encoder.7} parent=27 // pred_fallthru
        _
    $region28: #{cnn_block_encoder.7} parent=5 // pred_fallthru
      _
    %p834 = scmp.le.s32.totalorder 2, %s8
    // Predicated region
    $region41: #{cnn_block_encoder.7} parent=5 // pred_check
      %p835 = pneg %p834
    $region42: #{cnn_block_encoder.7} parent=5 // pred_check_branch
      %837 = sbr.rel (%p835) target = $region44
    $region43: #{cnn_block_encoder.7} parent=5 // pred_region
      %s838 = ssub.s32 %s8, 2
      // Predicated region
      $region45: #{cnn_block_encoder.7} parent=43 // pred_check
        %p839 = pneg %p109
      $region46: #{cnn_block_encoder.7} parent=43 // pred_check_branch
        %841 = sbr.rel (%p839) target = $region48
      $region47: #{cnn_block_encoder.7} parent=43 // pred_region
        %p842 = scmp.lt.s32.totalorder %s19, 1
        %s843 = scalar_select %p842, %s19, 1
        %s844 = smul.addr %s843, 8
        %s845 = scalar_lea.vmem %s2, %s844
      $region48: #{cnn_block_encoder.7} parent=43 // pred_fallthru
        _
    $region44: #{cnn_block_encoder.7} parent=5 // pred_fallthru
      _
  $region6: #{cnn_block_encoder.7} parent=0 // loop_footer
    %s12 = sadd.s32 1, %s8
  $region7: #{cnn_block_encoder.7} parent=0 // loop_footer_branch
    %7 = sbr.rel target = $region3
  $region8: #{cnn_block_encoder.7} parent=0 // loop_exit
    _

</llo_original>
